<compile_context>
chip_gen: v7x
topology: tpu7x:2x2x1
jax: 0.10.0
libtpu: 0.0.40
codegen_flags: <defaults>
</compile_context>

<pallas_src>
import functools

import jax
import jax.numpy as jnp
from jax.experimental import pallas as pl
from jax.experimental.pallas import tpu as pltpu

HIDDEN = 1920                    # GRUCell input_size == hidden_size (hard-coded by the module)
PROJ_TN = 1920                   # column tile for the hoisted x @ Wih projection (5760 = 3 tiles)
VMEM_LIMIT = 48 * 1024 * 1024    # safe on v7x (64 MiB physical) and v5e/v6e (128 MiB)


# ----------------------------------------------------------------------------
# Kernel 1: fused  out = act(A @ B + bias)   (convs, hoisted GRU projection, fc2)
# ----------------------------------------------------------------------------
def _mm_bias_kernel(a_ref, b_ref, bias_ref, o_ref, *, activation):
    acc = jnp.dot(a_ref[...], b_ref[...], preferred_element_type=jnp.float32)
    acc = acc + bias_ref[...]
    if activation == "sigmoid":
        acc = jax.nn.sigmoid(acc)
    o_ref[...] = acc.astype(o_ref.dtype)


def mm_bias(a, b, bias, activation=None, tile_n=None):
    M, K = a.shape
    K2, N = b.shape
    assert K == K2 and bias.shape == (1, N)
    kernel = functools.partial(_mm_bias_kernel, activation=activation)

    if tile_n is None or tile_n >= N:
        # Small GEMM: single block, no grid.
        return pl.pallas_call(
            kernel,
            out_shape=jax.ShapeDtypeStruct((M, N), jnp.float32),
            in_specs=[
                pl.BlockSpec((M, K), lambda: (0, 0)),
                pl.BlockSpec((K, N), lambda: (0, 0)),
                pl.BlockSpec((1, N), lambda: (0, 0)),
            ],
            out_specs=pl.BlockSpec((M, N), lambda: (0, 0)),
        )(a, b, bias)

    # Large-N GEMM: stream B/bias/out column tiles; A stays resident (constant index).
    assert N % tile_n == 0
    return pl.pallas_call(
        kernel,
        out_shape=jax.ShapeDtypeStruct((M, N), jnp.float32),
        grid_spec=pltpu.PrefetchScalarGridSpec(
            num_scalar_prefetch=0,
            grid=(N // tile_n,),
            in_specs=[
                pl.BlockSpec((M, K), lambda j: (0, 0)),
                pl.BlockSpec((K, tile_n), lambda j: (0, j)),
                pl.BlockSpec((1, tile_n), lambda j: (0, j)),
            ],
            out_specs=pl.BlockSpec((M, tile_n), lambda j: (0, j)),
        ),
        compiler_params=pltpu.CompilerParams(
            dimension_semantics=("parallel",),
            vmem_limit_bytes=VMEM_LIMIT,
        ),
    )(a, b, bias)


# ----------------------------------------------------------------------------
# Kernel 2: max-pool 3x3 stride 3 (floor mode), lane-dense layout
#   input  (9, rows) -> reduce over the 9-element sublane axis -> output (1, rows)
# ----------------------------------------------------------------------------
def _maxpool_kernel(x_ref, o_ref):
    o_ref[...] = jnp.max(x_ref[...], axis=0, keepdims=True)


def maxpool_3x3_s3(x):
    # x: (N, C, H, W) float32 -> (N, C, H//3, W//3)
    N, C, H, W = x.shape
    Ho, Wo = H // 3, W // 3
    xc = x[:, :, : Ho * 3, : Wo * 3]
    rows = N * C * Ho * Wo
    xw = (
        xc.reshape(N, C, Ho, 3, Wo, 3)
        .transpose(3, 5, 0, 1, 2, 4)      # window elements first -> sublane axis
        .reshape(9, rows)
    )
    pooled = pl.pallas_call(
        _maxpool_kernel,
        out_shape=jax.ShapeDtypeStruct((1, rows), jnp.float32),
        in_specs=[pl.BlockSpec((9, rows), lambda: (0, 0))],
        out_specs=pl.BlockSpec((1, rows), lambda: (0, 0)),
    )(xw)
    return pooled.reshape(N, C, Ho, Wo)


# ----------------------------------------------------------------------------
# Convolution = im2col (glue) + Pallas GEMM-with-sigmoid kernel
# ----------------------------------------------------------------------------
def _im2col(x, kh, kw, pad, k_pad=None):
    N, Cin, H, W = x.shape
    xp = jnp.pad(x, ((0, 0), (0, 0), (pad, pad), (pad, pad)))
    Ho = H + 2 * pad - kh + 1
    Wo = W + 2 * pad - kw + 1
    patches = jnp.stack(
        [xp[:, :, di : di + Ho, dj : dj + Wo] for di in range(kh) for dj in range(kw)],
        axis=-1,
    )  # (N, Cin, Ho, Wo, kh*kw)
    patches = patches.transpose(0, 2, 3, 1, 4).reshape(N * Ho * Wo, Cin * kh * kw)
    K = Cin * kh * kw
    if k_pad is not None and k_pad > K:
        patches = jnp.pad(patches, ((0, 0), (0, k_pad - K)))
    return patches, Ho, Wo


def conv_sigmoid(x, w, b, pad):
    # w: (Cout, Cin, kh, kw)  (PyTorch layout),  b: (Cout,)
    Cout, Cin, kh, kw = w.shape
    N = x.shape[0]
    K = Cin * kh * kw
    Kp = ((K + 127) // 128) * 128           # tile-align the contraction dim (81 -> 128 for conv1)
    a, Ho, Wo = _im2col(x, kh, kw, pad, k_pad=Kp)
    wm = w.reshape(Cout, K).T               # (K, Cout)
    if Kp > K:
        wm = jnp.pad(wm, ((0, Kp - K), (0, 0)))
    out = mm_bias(a, wm, b.reshape(1, Cout), activation="sigmoid")
    return out.reshape(N, Ho, Wo, Cout).transpose(0, 3, 1, 2)  # back to NCHW


# ----------------------------------------------------------------------------
# Kernel 3: whole GRU recurrence in one pallas_call
#   gi_all[t] = x_t @ Wih + b_ih   (precomputed outside, shape (seq, 3H), f32)
#   per step:  gh = h @ Whh + b_hh                      (bf16 weights, f32 accumulate)
#              r = sigma(gi_r + gh_r); z = sigma(gi_z + gh_z)
#              n = tanh(gi_n + r * gh_n)
#              h' = (1 - z) * n + z * h
#   Whh is resident in VMEM for the entire sequence; h lives in a VMEM scratch.
# ----------------------------------------------------------------------------
def _gru_seq_kernel(gi_ref, h0_ref, whh_ref, bhh_ref, o_ref, h_scratch,
                    *, seq_length, hidden):
    h_scratch[...] = h0_ref[...]

    def step(t, carry):
        h = h_scratch[...]                                           # (1, H) f32
        gh = jnp.dot(h.astype(whh_ref.dtype), whh_ref[...],
                     preferred_element_type=jnp.float32) + bhh_ref[...]  # (1, 3H) f32
        gi = gi_ref[pl.ds(t, 1), :]                                  # (1, 3H) f32
        r = jax.nn.sigmoid(gi[:, 0:hidden] + gh[:, 0:hidden])
        z = jax.nn.sigmoid(gi[:, hidden:2 * hidden] + gh[:, hidden:2 * hidden])
        n = jnp.tanh(gi[:, 2 * hidden:] + r * gh[:, 2 * hidden:])
        h_scratch[...] = (1.0 - z) * n + z * h
        return carry

    jax.lax.fori_loop(0, seq_length, step, 0, unroll=(seq_length <= 8))
    o_ref[...] = h_scratch[...]


def gru_run(gi_all, h0, whh_bf16, bhh):
    seq = gi_all.shape[0]
    return pl.pallas_call(
        functools.partial(_gru_seq_kernel, seq_length=seq, hidden=HIDDEN),
        out_shape=jax.ShapeDtypeStruct((1, HIDDEN), jnp.float32),
        in_specs=[
            pl.BlockSpec((seq, 3 * HIDDEN), lambda: (0, 0)),
            pl.BlockSpec((1, HIDDEN), lambda: (0, 0)),
            pl.BlockSpec((HIDDEN, 3 * HIDDEN), lambda: (0, 0)),   # bf16 Whh, ~22 MB, resident
            pl.BlockSpec((1, 3 * HIDDEN), lambda: (0, 0)),
        ],
        out_specs=pl.BlockSpec((1, HIDDEN), lambda: (0, 0)),
        scratch_shapes=[pltpu.VMEM((1, HIDDEN), jnp.float32)],
        compiler_params=pltpu.CompilerParams(
            vmem_limit_bytes=VMEM_LIMIT,
        ),
    )(gi_all, h0, whh_bf16, bhh)


# ----------------------------------------------------------------------------
# Full forward pass (mirrors CNN_RNN.forward)
# ----------------------------------------------------------------------------
def cnn_rnn_forward(x, params, seq_length, hx):
    x = conv_sigmoid(x, params["conv1_w"], params["conv1_b"], pad=2)
    x = maxpool_3x3_s3(x)
    x = conv_sigmoid(x, params["conv2_w"], params["conv2_b"], pad=2)
    x = maxpool_3x3_s3(x)

    N = x.shape[0]
    feats = x.reshape(N, -1)          # row i == torch's x.view(-1, 1, F)[i]
    assert feats.shape[-1] == HIDDEN, feats.shape
    assert seq_length <= N            # torch indexes x[i] over the flattened batch

    # Hoisted input projection: one GEMM over the whole sequence (bf16 weights).
    x_seq = feats[:seq_length].astype(jnp.bfloat16)                    # (seq, H)
    gi_all = mm_bias(x_seq, params["gru_wih"], params["gru_bih"],
                     activation=None, tile_n=PROJ_TN)                  # (seq, 3H) f32

    # Recurrence: single kernel, Whh resident in VMEM, h in VMEM scratch.
    h = gru_run(gi_all, hx, params["gru_whh"], params["gru_bhh"])

    logits = mm_bias(h, params["fc2_w"], params["fc2_b"], activation=None)
    return logits


def init_params(key, num_classes):
    ks = jax.random.split(key, 10)
    scale = 0.05
    # PyTorch parameter shapes
    conv1_w = scale * jax.random.normal(ks[0], (64, 1, 9, 9), jnp.float32)
    conv1_b = scale * jax.random.normal(ks[1], (64,), jnp.float32)
    conv2_w = scale * jax.random.normal(ks[2], (128, 64, 4, 4), jnp.float32)
    conv2_b = scale * jax.random.normal(ks[3], (128,), jnp.float32)
    w_ih = scale * jax.random.normal(ks[4], (3 * HIDDEN, HIDDEN), jnp.float32)
    w_hh = scale * jax.random.normal(ks[5], (3 * HIDDEN, HIDDEN), jnp.float32)
    b_ih = scale * jax.random.normal(ks[6], (3 * HIDDEN,), jnp.float32)
    b_hh = scale * jax.random.normal(ks[7], (3 * HIDDEN,), jnp.float32)
    fc2_w = scale * jax.random.normal(ks[8], (num_classes, HIDDEN), jnp.float32)
    fc2_b = scale * jax.random.normal(ks[9], (num_classes,), jnp.float32)

    return {
        "conv1_w": conv1_w,
        "conv1_b": conv1_b,
        "conv2_w": conv2_w,
        "conv2_b": conv2_b,
        # kernel layout: (in_dim, 3*out_dim) with columns ordered [r | z | n],
        # so that x @ Wih gives the fused gate pre-activations.  bf16 for HBM/VMEM bytes.
        "gru_wih": w_ih.T.astype(jnp.bfloat16),       # (HIDDEN, 3*HIDDEN)
        "gru_whh": w_hh.T.astype(jnp.bfloat16),       # (HIDDEN, 3*HIDDEN)
        "gru_bih": b_ih.reshape(1, 3 * HIDDEN),       # f32
        "gru_bhh": b_hh.reshape(1, 3 * HIDDEN),       # f32
        "fc2_w": fc2_w.T,                             # (HIDDEN, num_classes)
        "fc2_b": fc2_b.reshape(1, num_classes),
    }


if __name__ == "__main__":
    num_classes = 10
    seq_length = 2
    batch = 2          # torch indexes x[i] over the flattened batch, so batch >= seq_length
    # Spatial size chosen so the flattened conv features equal 1920 (GRU input size):
    # 48x30 -> conv1(9,p2) 44x26 -> pool/3 14x8 -> conv2(4,p2) 15x9 -> pool/3 5x3; 128*5*3 = 1920
    H_in, W_in = 48, 30

    key = jax.random.PRNGKey(0)
    k_x, k_h, k_p = jax.random.split(key, 3)
    x = jax.random.normal(k_x, (batch, 1, H_in, W_in), jnp.float32)
    # TODO(synk): the reference draws hx = torch.randn(1, 1920) inside forward(); here it is a
    # deterministic input so runs are reproducible.
    hx = jax.random.normal(k_h, (1, HIDDEN), jnp.float32)
    params = init_params(k_p, num_classes)

    out = cnn_rnn_forward(x, params, seq_length, hx)
    out = jax.block_until_ready(out)
    assert out.shape == (1, num_classes), out.shape
    assert bool(jnp.all(jnp.isfinite(out)))
    print("KERNEL_OK")
</pallas_src>

<mosaic_0001>
module attributes {stable_mosaic.version = 11 : i64} {
  func.func @_mm_bias_kernel(%arg0: memref<2288x128xf32, #tpu.memory_space<vmem>>, %arg1: memref<128x64xf32, #tpu.memory_space<vmem>>, %arg2: memref<1x64xf32, #tpu.memory_space<vmem>>, %arg3: memref<2288x64xf32, #tpu.memory_space<vmem>>) attributes {dimension_semantics = [], scalar_prefetch = 0 : i64, scratch_operands = 0 : i64, tpu.core_type = #tpu.core_type<tc>} {
    %c0 = arith.constant 0 : index
    %c0_0 = arith.constant 0 : index
    %0 = vector.load %arg0[%c0, %c0_0] : memref<2288x128xf32, #tpu.memory_space<vmem>>, vector<2288x128xf32>
    %c0_1 = arith.constant 0 : index
    %c0_2 = arith.constant 0 : index
    %1 = vector.load %arg1[%c0_1, %c0_2] : memref<128x64xf32, #tpu.memory_space<vmem>>, vector<128x64xf32>
    %cst = arith.constant dense<0.000000e+00> : vector<2288x64xf32>
    %2 = tpu.matmul %0, %1, %cst {dimension_numbers = #tpu.dot_dimension_numbers<[1], [0], [0], [1], [0, 0, 1, 1], [], []>} : vector<2288x128xf32>, vector<128x64xf32>, vector<2288x64xf32> -> vector<2288x64xf32>
    %c0_3 = arith.constant 0 : index
    %c0_4 = arith.constant 0 : index
    %3 = vector.load %arg2[%c0_3, %c0_4] : memref<1x64xf32, #tpu.memory_space<vmem>>, vector<1x64xf32>
    %4 = vector.broadcast %3 : vector<1x64xf32> to vector<2288x64xf32>
    %5 = arith.addf %2, %4 : vector<2288x64xf32>
    %6 = arith.negf %5 : vector<2288x64xf32>
    %7 = math.exp %6 : vector<2288x64xf32>
    %cst_5 = arith.constant 1.000000e+00 : f32
    %8 = vector.broadcast %cst_5 : f32 to vector<2288x64xf32>
    %9 = arith.addf %8, %7 : vector<2288x64xf32>
    %10 = arith.divf %8, %9 : vector<2288x64xf32>
    %c0_6 = arith.constant 0 : index
    %c0_7 = arith.constant 0 : index
    %11 = vector.load %arg3[%c0_6, %c0_7] : memref<2288x64xf32, #tpu.memory_space<vmem>>, vector<2288x64xf32>
    tpu.vector_store %arg3[%c0_6, %c0_7], %10 {strides = array<i32>} : memref<2288x64xf32, #tpu.memory_space<vmem>>, vector<2288x64xf32>,
    return
  }
}

</mosaic_0001>

<llo_original>
// kernel: tpu_custom_call.1
$region0: #{tpu_custom_call.1}
  #allocation0 [shape = 'u32[]', space=smem, size = 0x4, offset = 0x4, fixed_abs, tag = 'smem constant byte address 0x4 - core index']
  #allocation1 [shape = 'u32[144,128]{1,0:T(1,128)}', space=vmem, size = 0x12000, scoped, tag = 'internal scratch']
  %s0 = inlined_call_operand.hbm [shape: f32[2288,128], index: 0, kind: input, shape index: {}]
  %s1 = inlined_call_operand.vmem [shape: f32[128,64], index: 1, kind: input, shape index: {}]
  %s2 = inlined_call_operand.hbm [shape: f32[1,64], index: 2, kind: input, shape index: {}]
  %s3 = inlined_call_operand.vmem [shape: f32[2288,64], index: 3, kind: output, shape index: {}]
  %s4 = sld [smem:[#allocation0]]
  $region30: #{tpu_custom_call.1} parent=0
    _
  %s6 = ssub.s32 1, %s4
  %s7 = scalar_select 0, %s6, %s4
  $region1: #{tpu_custom_call.1} parent=0
    #allocation2 [shape = 'u8[1171456]{0}', space=vmem, size = 0x11e000, scoped, tag = 'input window, operand 0, single buffered']
    #allocation3 [shape = 's32[1]{0}', space=sflag, size = 0x4, scoped, tag = 'scoped memory for tpu_custom_call.1']
    #allocation4 [shape = 'u8[512]{0}', space=vmem, size = 0x400, scoped, tag = 'input window, operand 2, single buffered']
    #allocation5 [shape = 's32[1]{0}', space=sflag, size = 0x4, scoped, tag = 'scoped memory for tpu_custom_call.1']
    %8 = vsyncpa [#allocation3], 0
    %9 = vsyncpa [#allocation5], 0
    // Predicated region
    $region2: #{tpu_custom_call.1} parent=1 // pred_check
      _
    $region3: #{tpu_custom_call.1} parent=1 // pred_check_branch
      %11 = sbr.rel (0) target = $region5
    $region4: #{tpu_custom_call.1} parent=1 // pred_region
      %s13 = ssub.s32 36608, 36608
      %14 = vsyncadd [#allocation3], %s13
      %s15 = sshll.u32 [#allocation2], 4
      %s16 = int_to_ptr.vmem [resolvable:$true] %s15
      %21 = dma.hbm_to_vmem [thread:$0]  %s0, 36608, %s16, [#allocation3], 128, 128, 8
    $region5: #{tpu_custom_call.1} parent=1 // pred_fallthru
      _
    // Predicated region
    $region6: #{tpu_custom_call.1} parent=1 // pred_check
      _
    $region7: #{tpu_custom_call.1} parent=1 // pred_check_branch
      %23 = sbr.rel (0) target = $region9
    $region8: #{tpu_custom_call.1} parent=1 // pred_region
      _
    $region9: #{tpu_custom_call.1} parent=1 // pred_fallthru
      _
    // Predicated region
    $region10: #{tpu_custom_call.1} parent=1 // pred_check
      _
    $region11: #{tpu_custom_call.1} parent=1 // pred_check_branch
      %25 = sbr.rel (0) target = $region13
    $region12: #{tpu_custom_call.1} parent=1 // pred_region
      %s27 = ssub.s32 16, 16
      %28 = vsyncadd [#allocation5], %s27
      %s30 = sshll.u32 [#allocation4], 4
      %s31 = int_to_ptr.vmem [resolvable:$true] %s30
      %33 = dma.hbm_to_vmem [thread:$0]  %s2, 16, %s31, [#allocation5]
    $region13: #{tpu_custom_call.1} parent=1 // pred_fallthru
      _
    // Predicated region
    $region14: #{tpu_custom_call.1} parent=1 // pred_check
      _
    $region15: #{tpu_custom_call.1} parent=1 // pred_check_branch
      %35 = sbr.rel (0) target = $region17
    $region16: #{tpu_custom_call.1} parent=1 // pred_region
      %36 = dma.done [#allocation3], 36608
    $region17: #{tpu_custom_call.1} parent=1 // pred_fallthru
      _
    // Predicated region
    $region18: #{tpu_custom_call.1} parent=1 // pred_check
      _
    $region19: #{tpu_custom_call.1} parent=1 // pred_check_branch
      %38 = sbr.rel (0) target = $region21
    $region20: #{tpu_custom_call.1} parent=1 // pred_region
      %39 = dma.done [#allocation5], 16
    $region21: #{tpu_custom_call.1} parent=1 // pred_fallthru
      _
    %v40 = vld [vmem:[#allocation2] sm:$0xff]
    %v41 = vld [vmem:[#allocation2 + $0x8] sm:$0xff]
    %v42 = vld [vmem:[#allocation2 + $0x10] sm:$0xff]
    %v43 = vld [vmem:[#allocation2 + $0x18] sm:$0xff]
    %v44 = vld [vmem:[#allocation2 + $0x20] sm:$0xff]
    %v45 = vld [vmem:[#allocation2 + $0x28] sm:$0xff]
    %v46 = vld [vmem:[#allocation2 + $0x30] sm:$0xff]
    %v47 = vld [vmem:[#allocation2 + $0x38] sm:$0xff]
    %v48 = vld [vmem:[#allocation2 + $0x40] sm:$0xff]
    %v49 = vld [vmem:[#allocation2 + $0x48] sm:$0xff]
    %v50 = vld [vmem:[#allocation2 + $0x50] sm:$0xff]
    %v51 = vld [vmem:[#allocation2 + $0x58] sm:$0xff]
    %v52 = vld [vmem:[#allocation2 + $0x60] sm:$0xff]
    %v53 = vld [vmem:[#allocation2 + $0x68] sm:$0xff]
    %v54 = vld [vmem:[#allocation2 + $0x70] sm:$0xff]
    %v55 = vld [vmem:[#allocation2 + $0x78] sm:$0xff]
    %v56 = vld [vmem:[#allocation2 + $0x80] sm:$0xff]
    %v57 = vld [vmem:[#allocation2 + $0x88] sm:$0xff]
    %v58 = vld [vmem:[#allocation2 + $0x90] sm:$0xff]
    %v59 = vld [vmem:[#allocation2 + $0x98] sm:$0xff]
    %v60 = vld [vmem:[#allocation2 + $0xa0] sm:$0xff]
    %v61 = vld [vmem:[#allocation2 + $0xa8] sm:$0xff]
    %v62 = vld [vmem:[#allocation2 + $0xb0] sm:$0xff]
    %v63 = vld [vmem:[#allocation2 + $0xb8] sm:$0xff]
    %v64 = vld [vmem:[#allocation2 + $0xc0] sm:$0xff]
    %v65 = vld [vmem:[#allocation2 + $0xc8] sm:$0xff]
    %v66 = vld [vmem:[#allocation2 + $0xd0] sm:$0xff]
    %v67 = vld [vmem:[#allocation2 + $0xd8] sm:$0xff]
    %v68 = vld [vmem:[#allocation2 + $0xe0] sm:$0xff]
    %v69 = vld [vmem:[#allocation2 + $0xe8] sm:$0xff]
    %v70 = vld [vmem:[#allocation2 + $0xf0] sm:$0xff]
    %v71 = vld [vmem:[#allocation2 + $0xf8] sm:$0xff]
    %v72 = vld [vmem:[#allocation2 + $0x100] sm:$0xff]
    %v73 = vld [vmem:[#allocation2 + $0x108] sm:$0xff]
    %v74 = vld [vmem:[#allocation2 + $0x110] sm:$0xff]
    %v75 = vld [vmem:[#allocation2 + $0x118] sm:$0xff]
    %v76 = vld [vmem:[#allocation2 + $0x120] sm:$0xff]
    %v77 = vld [vmem:[#allocation2 + $0x128] sm:$0xff]
    %v78 = vld [vmem:[#allocation2 + $0x130] sm:$0xff]
    %v79 = vld [vmem:[#allocation2 + $0x138] sm:$0xff]
    %v80 = vld [vmem:[#allocation2 + $0x140] sm:$0xff]
    %v81 = vld [vmem:[#allocation2 + $0x148] sm:$0xff]
    %v82 = vld [vmem:[#allocation2 + $0x150] sm:$0xff]
    %v83 = vld [vmem:[#allocation2 + $0x158] sm:$0xff]
    %v84 = vld [vmem:[#allocation2 + $0x160] sm:$0xff]
    %v85 = vld [vmem:[#allocation2 + $0x168] sm:$0xff]
    %v86 = vld [vmem:[#allocation2 + $0x170] sm:$0xff]
    %v87 = vld [vmem:[#allocation2 + $0x178] sm:$0xff]
    %v88 = vld [vmem:[#allocation2 + $0x180] sm:$0xff]
    %v89 = vld [vmem:[#allocation2 + $0x188] sm:$0xff]
    %v90 = vld [vmem:[#allocation2 + $0x190] sm:$0xff]
    %v91 = vld [vmem:[#allocation2 + $0x198] sm:$0xff]
    %v92 = vld [vmem:[#allocation2 + $0x1a0] sm:$0xff]
    %v93 = vld [vmem:[#allocation2 + $0x1a8] sm:$0xff]
    %v94 = vld [vmem:[#allocation2 + $0x1b0] sm:$0xff]
    %v95 = vld [vmem:[#allocation2 + $0x1b8] sm:$0xff]
    %v96 = vld [vmem:[#allocation2 + $0x1c0] sm:$0xff]
    %v97 = vld [vmem:[#allocation2 + $0x1c8] sm:$0xff]
    %v98 = vld [vmem:[#allocation2 + $0x1d0] sm:$0xff]
    %v99 = vld [vmem:[#allocation2 + $0x1d8] sm:$0xff]
    %v100 = vld [vmem:[#allocation2 + $0x1e0] sm:$0xff]
    %v101 = vld [vmem:[#allocation2 + $0x1e8] sm:$0xff]
    %v102 = vld [vmem:[#allocation2 + $0x1f0] sm:$0xff]
    %v103 = vld [vmem:[#allocation2 + $0x1f8] sm:$0xff]
    %v104 = vld [vmem:[#allocation2 + $0x200] sm:$0xff]
    %v105 = vld [vmem:[#allocation2 + $0x208] sm:$0xff]
    %v106 = vld [vmem:[#allocation2 + $0x210] sm:$0xff]
    %v107 = vld [vmem:[#allocation2 + $0x218] sm:$0xff]
    %v108 = vld [vmem:[#allocation2 + $0x220] sm:$0xff]
    %v109 = vld [vmem:[#allocation2 + $0x228] sm:$0xff]
    %v110 = vld [vmem:[#allocation2 + $0x230] sm:$0xff]
    %v111 = vld [vmem:[#allocation2 + $0x238] sm:$0xff]
    %v112 = vld [vmem:[#allocation2 + $0x240] sm:$0xff]
    %v113 = vld [vmem:[#allocation2 + $0x248] sm:$0xff]
    %v114 = vld [vmem:[#allocation2 + $0x250] sm:$0xff]
    %v115 = vld [vmem:[#allocation2 + $0x258] sm:$0xff]
    %v116 = vld [vmem:[#allocation2 + $0x260] sm:$0xff]
    %v117 = vld [vmem:[#allocation2 + $0x268] sm:$0xff]
    %v118 = vld [vmem:[#allocation2 + $0x270] sm:$0xff]
    %v119 = vld [vmem:[#allocation2 + $0x278] sm:$0xff]
    %v120 = vld [vmem:[#allocation2 + $0x280] sm:$0xff]
    %v121 = vld [vmem:[#allocation2 + $0x288] sm:$0xff]
    %v122 = vld [vmem:[#allocation2 + $0x290] sm:$0xff]
    %v123 = vld [vmem:[#allocation2 + $0x298] sm:$0xff]
    %v124 = vld [vmem:[#allocation2 + $0x2a0] sm:$0xff]
    %v125 = vld [vmem:[#allocation2 + $0x2a8] sm:$0xff]
    %v126 = vld [vmem:[#allocation2 + $0x2b0] sm:$0xff]
    %v127 = vld [vmem:[#allocation2 + $0x2b8] sm:$0xff]
    %v128 = vld [vmem:[#allocation2 + $0x2c0] sm:$0xff]
    %v129 = vld [vmem:[#allocation2 + $0x2c8] sm:$0xff]
    %v130 = vld [vmem:[#allocation2 + $0x2d0] sm:$0xff]
    %v131 = vld [vmem:[#allocation2 + $0x2d8] sm:$0xff]
    %v132 = vld [vmem:[#allocation2 + $0x2e0] sm:$0xff]
    %v133 = vld [vmem:[#allocation2 + $0x2e8] sm:$0xff]
    %v134 = vld [vmem:[#allocation2 + $0x2f0] sm:$0xff]
    %v135 = vld [vmem:[#allocation2 + $0x2f8] sm:$0xff]
    %v136 = vld [vmem:[#allocation2 + $0x300] sm:$0xff]
    %v137 = vld [vmem:[#allocation2 + $0x308] sm:$0xff]
    %v138 = vld [vmem:[#allocation2 + $0x310] sm:$0xff]
    %v139 = vld [vmem:[#allocation2 + $0x318] sm:$0xff]
    %v140 = vld [vmem:[#allocation2 + $0x320] sm:$0xff]
    %v141 = vld [vmem:[#allocation2 + $0x328] sm:$0xff]
    %v142 = vld [vmem:[#allocation2 + $0x330] sm:$0xff]
    %v143 = vld [vmem:[#allocation2 + $0x338] sm:$0xff]
    %v144 = vld [vmem:[#allocation2 + $0x340] sm:$0xff]
    %v145 = vld [vmem:[#allocation2 + $0x348] sm:$0xff]
    %v146 = vld [vmem:[#allocation2 + $0x350] sm:$0xff]
    %v147 = vld [vmem:[#allocation2 + $0x358] sm:$0xff]
    %v148 = vld [vmem:[#allocation2 + $0x360] sm:$0xff]
    %v149 = vld [vmem:[#allocation2 + $0x368] sm:$0xff]
    %v150 = vld [vmem:[#allocation2 + $0x370] sm:$0xff]
    %v151 = vld [vmem:[#allocation2 + $0x378] sm:$0xff]
    %v152 = vld [vmem:[#allocation2 + $0x380] sm:$0xff]
    %v153 = vld [vmem:[#allocation2 + $0x388] sm:$0xff]
    %v154 = vld [vmem:[#allocation2 + $0x390] sm:$0xff]
    %v155 = vld [vmem:[#allocation2 + $0x398] sm:$0xff]
    %v156 = vld [vmem:[#allocation2 + $0x3a0] sm:$0xff]
    %v157 = vld [vmem:[#allocation2 + $0x3a8] sm:$0xff]
    %v158 = vld [vmem:[#allocation2 + $0x3b0] sm:$0xff]
    %v159 = vld [vmem:[#allocation2 + $0x3b8] sm:$0xff]
    %v160 = vld [vmem:[#allocation2 + $0x3c0] sm:$0xff]
    %v161 = vld [vmem:[#allocation2 + $0x3c8] sm:$0xff]
    %v162 = vld [vmem:[#allocation2 + $0x3d0] sm:$0xff]
    %v163 = vld [vmem:[#allocation2 + $0x3d8] sm:$0xff]
    %v164 = vld [vmem:[#allocation2 + $0x3e0] sm:$0xff]
    %v165 = vld [vmem:[#allocation2 + $0x3e8] sm:$0xff]
    %v166 = vld [vmem:[#allocation2 + $0x3f0] sm:$0xff]
    %v167 = vld [vmem:[#allocation2 + $0x3f8] sm:$0xff]
    %v168 = vld [vmem:[#allocation2 + $0x400] sm:$0xff]
    %v169 = vld [vmem:[#allocation2 + $0x408] sm:$0xff]
    %v170 = vld [vmem:[#allocation2 + $0x410] sm:$0xff]
    %v171 = vld [vmem:[#allocation2 + $0x418] sm:$0xff]
    %v172 = vld [vmem:[#allocation2 + $0x420] sm:$0xff]
    %v173 = vld [vmem:[#allocation2 + $0x428] sm:$0xff]
    %v174 = vld [vmem:[#allocation2 + $0x430] sm:$0xff]
    %v175 = vld [vmem:[#allocation2 + $0x438] sm:$0xff]
    %v176 = vld [vmem:[#allocation2 + $0x440] sm:$0xff]
    %v177 = vld [vmem:[#allocation2 + $0x448] sm:$0xff]
    %v178 = vld [vmem:[#allocation2 + $0x450] sm:$0xff]
    %v179 = vld [vmem:[#allocation2 + $0x458] sm:$0xff]
    %v180 = vld [vmem:[#allocation2 + $0x460] sm:$0xff]
    %v181 = vld [vmem:[#allocation2 + $0x468] sm:$0xff]
    %v182 = vld [vmem:[#allocation2 + $0x470] sm:$0xff]
    %v183 = vld [vmem:[#allocation2 + $0x478] sm:$0xff]
    %v184 = vld [vmem:[#allocation2 + $0x480] sm:$0xff]
    %v185 = vld [vmem:[#allocation2 + $0x488] sm:$0xff]
    %v186 = vld [vmem:[#allocation2 + $0x490] sm:$0xff]
    %v187 = vld [vmem:[#allocation2 + $0x498] sm:$0xff]
    %v188 = vld [vmem:[#allocation2 + $0x4a0] sm:$0xff]
    %v189 = vld [vmem:[#allocation2 + $0x4a8] sm:$0xff]
    %v190 = vld [vmem:[#allocation2 + $0x4b0] sm:$0xff]
    %v191 = vld [vmem:[#allocation2 + $0x4b8] sm:$0xff]
    %v192 = vld [vmem:[#allocation2 + $0x4c0] sm:$0xff]
    %v193 = vld [vmem:[#allocation2 + $0x4c8] sm:$0xff]
    %v194 = vld [vmem:[#allocation2 + $0x4d0] sm:$0xff]
    %v195 = vld [vmem:[#allocation2 + $0x4d8] sm:$0xff]
    %v196 = vld [vmem:[#allocation2 + $0x4e0] sm:$0xff]
    %v197 = vld [vmem:[#allocation2 + $0x4e8] sm:$0xff]
    %v198 = vld [vmem:[#allocation2 + $0x4f0] sm:$0xff]
    %v199 = vld [vmem:[#allocation2 + $0x4f8] sm:$0xff]
    %v200 = vld [vmem:[#allocation2 + $0x500] sm:$0xff]
    %v201 = vld [vmem:[#allocation2 + $0x508] sm:$0xff]
    %v202 = vld [vmem:[#allocation2 + $0x510] sm:$0xff]
    %v203 = vld [vmem:[#allocation2 + $0x518] sm:$0xff]
    %v204 = vld [vmem:[#allocation2 + $0x520] sm:$0xff]
    %v205 = vld [vmem:[#allocation2 + $0x528] sm:$0xff]
    %v206 = vld [vmem:[#allocation2 + $0x530] sm:$0xff]
    %v207 = vld [vmem:[#allocation2 + $0x538] sm:$0xff]
    %v208 = vld [vmem:[#allocation2 + $0x540] sm:$0xff]
    %v209 = vld [vmem:[#allocation2 + $0x548] sm:$0xff]
    %v210 = vld [vmem:[#allocation2 + $0x550] sm:$0xff]
    %v211 = vld [vmem:[#allocation2 + $0x558] sm:$0xff]
    %v212 = vld [vmem:[#allocation2 + $0x560] sm:$0xff]
    %v213 = vld [vmem:[#allocation2 + $0x568] sm:$0xff]
    %v214 = vld [vmem:[#allocation2 + $0x570] sm:$0xff]
    %v215 = vld [vmem:[#allocation2 + $0x578] sm:$0xff]
    %v216 = vld [vmem:[#allocation2 + $0x580] sm:$0xff]
    %v217 = vld [vmem:[#allocation2 + $0x588] sm:$0xff]
    %v218 = vld [vmem:[#allocation2 + $0x590] sm:$0xff]
    %v219 = vld [vmem:[#allocation2 + $0x598] sm:$0xff]
    %v220 = vld [vmem:[#allocation2 + $0x5a0] sm:$0xff]
    %v221 = vld [vmem:[#allocation2 + $0x5a8] sm:$0xff]
    %v222 = vld [vmem:[#allocation2 + $0x5b0] sm:$0xff]
    %v223 = vld [vmem:[#allocation2 + $0x5b8] sm:$0xff]
    %v224 = vld [vmem:[#allocation2 + $0x5c0] sm:$0xff]
    %v225 = vld [vmem:[#allocation2 + $0x5c8] sm:$0xff]
    %v226 = vld [vmem:[#allocation2 + $0x5d0] sm:$0xff]
    %v227 = vld [vmem:[#allocation2 + $0x5d8] sm:$0xff]
    %v228 = vld [vmem:[#allocation2 + $0x5e0] sm:$0xff]
    %v229 = vld [vmem:[#allocation2 + $0x5e8] sm:$0xff]
    %v230 = vld [vmem:[#allocation2 + $0x5f0] sm:$0xff]
    %v231 = vld [vmem:[#allocation2 + $0x5f8] sm:$0xff]
    %v232 = vld [vmem:[#allocation2 + $0x600] sm:$0xff]
    %v233 = vld [vmem:[#allocation2 + $0x608] sm:$0xff]
    %v234 = vld [vmem:[#allocation2 + $0x610] sm:$0xff]
    %v235 = vld [vmem:[#allocation2 + $0x618] sm:$0xff]
    %v236 = vld [vmem:[#allocation2 + $0x620] sm:$0xff]
    %v237 = vld [vmem:[#allocation2 + $0x628] sm:$0xff]
    %v238 = vld [vmem:[#allocation2 + $0x630] sm:$0xff]
    %v239 = vld [vmem:[#allocation2 + $0x638] sm:$0xff]
    %v240 = vld [vmem:[#allocation2 + $0x640] sm:$0xff]
    %v241 = vld [vmem:[#allocation2 + $0x648] sm:$0xff]
    %v242 = vld [vmem:[#allocation2 + $0x650] sm:$0xff]
    %v243 = vld [vmem:[#allocation2 + $0x658] sm:$0xff]
    %v244 = vld [vmem:[#allocation2 + $0x660] sm:$0xff]
    %v245 = vld [vmem:[#allocation2 + $0x668] sm:$0xff]
    %v246 = vld [vmem:[#allocation2 + $0x670] sm:$0xff]
    %v247 = vld [vmem:[#allocation2 + $0x678] sm:$0xff]
    %v248 = vld [vmem:[#allocation2 + $0x680] sm:$0xff]
    %v249 = vld [vmem:[#allocation2 + $0x688] sm:$0xff]
    %v250 = vld [vmem:[#allocation2 + $0x690] sm:$0xff]
    %v251 = vld [vmem:[#allocation2 + $0x698] sm:$0xff]
    %v252 = vld [vmem:[#allocation2 + $0x6a0] sm:$0xff]
    %v253 = vld [vmem:[#allocation2 + $0x6a8] sm:$0xff]
    %v254 = vld [vmem:[#allocation2 + $0x6b0] sm:$0xff]
    %v255 = vld [vmem:[#allocation2 + $0x6b8] sm:$0xff]
    %v256 = vld [vmem:[#allocation2 + $0x6c0] sm:$0xff]
    %v257 = vld [vmem:[#allocation2 + $0x6c8] sm:$0xff]
    %v258 = vld [vmem:[#allocation2 + $0x6d0] sm:$0xff]
    %v259 = vld [vmem:[#allocation2 + $0x6d8] sm:$0xff]
    %v260 = vld [vmem:[#allocation2 + $0x6e0] sm:$0xff]
    %v261 = vld [vmem:[#allocation2 + $0x6e8] sm:$0xff]
    %v262 = vld [vmem:[#allocation2 + $0x6f0] sm:$0xff]
    %v263 = vld [vmem:[#allocation2 + $0x6f8] sm:$0xff]
    %v264 = vld [vmem:[#allocation2 + $0x700] sm:$0xff]
    %v265 = vld [vmem:[#allocation2 + $0x708] sm:$0xff]
    %v266 = vld [vmem:[#allocation2 + $0x710] sm:$0xff]
    %v267 = vld [vmem:[#allocation2 + $0x718] sm:$0xff]
    %v268 = vld [vmem:[#allocation2 + $0x720] sm:$0xff]
    %v269 = vld [vmem:[#allocation2 + $0x728] sm:$0xff]
    %v270 = vld [vmem:[#allocation2 + $0x730] sm:$0xff]
    %v271 = vld [vmem:[#allocation2 + $0x738] sm:$0xff]
    %v272 = vld [vmem:[#allocation2 + $0x740] sm:$0xff]
    %v273 = vld [vmem:[#allocation2 + $0x748] sm:$0xff]
    %v274 = vld [vmem:[#allocation2 + $0x750] sm:$0xff]
    %v275 = vld [vmem:[#allocation2 + $0x758] sm:$0xff]
    %v276 = vld [vmem:[#allocation2 + $0x760] sm:$0xff]
    %v277 = vld [vmem:[#allocation2 + $0x768] sm:$0xff]
    %v278 = vld [vmem:[#allocation2 + $0x770] sm:$0xff]
    %v279 = vld [vmem:[#allocation2 + $0x778] sm:$0xff]
    %v280 = vld [vmem:[#allocation2 + $0x780] sm:$0xff]
    %v281 = vld [vmem:[#allocation2 + $0x788] sm:$0xff]
    %v282 = vld [vmem:[#allocation2 + $0x790] sm:$0xff]
    %v283 = vld [vmem:[#allocation2 + $0x798] sm:$0xff]
    %v284 = vld [vmem:[#allocation2 + $0x7a0] sm:$0xff]
    %v285 = vld [vmem:[#allocation2 + $0x7a8] sm:$0xff]
    %v286 = vld [vmem:[#allocation2 + $0x7b0] sm:$0xff]
    %v287 = vld [vmem:[#allocation2 + $0x7b8] sm:$0xff]
    %v288 = vld [vmem:[#allocation2 + $0x7c0] sm:$0xff]
    %v289 = vld [vmem:[#allocation2 + $0x7c8] sm:$0xff]
    %v290 = vld [vmem:[#allocation2 + $0x7d0] sm:$0xff]
    %v291 = vld [vmem:[#allocation2 + $0x7d8] sm:$0xff]
    %v292 = vld [vmem:[#allocation2 + $0x7e0] sm:$0xff]
    %v293 = vld [vmem:[#allocation2 + $0x7e8] sm:$0xff]
    %v294 = vld [vmem:[#allocation2 + $0x7f0] sm:$0xff]
    %v295 = vld [vmem:[#allocation2 + $0x7f8] sm:$0xff]
    %v296 = vld [vmem:[#allocation2 + $0x800] sm:$0xff]
    %v297 = vld [vmem:[#allocation2 + $0x808] sm:$0xff]
    %v298 = vld [vmem:[#allocation2 + $0x810] sm:$0xff]
    %v299 = vld [vmem:[#allocation2 + $0x818] sm:$0xff]
    %v300 = vld [vmem:[#allocation2 + $0x820] sm:$0xff]
    %v301 = vld [vmem:[#allocation2 + $0x828] sm:$0xff]
    %v302 = vld [vmem:[#allocation2 + $0x830] sm:$0xff]
    %v303 = vld [vmem:[#allocation2 + $0x838] sm:$0xff]
    %v304 = vld [vmem:[#allocation2 + $0x840] sm:$0xff]
    %v305 = vld [vmem:[#allocation2 + $0x848] sm:$0xff]
    %v306 = vld [vmem:[#allocation2 + $0x850] sm:$0xff]
    %v307 = vld [vmem:[#allocation2 + $0x858] sm:$0xff]
    %v308 = vld [vmem:[#allocation2 + $0x860] sm:$0xff]
    %v309 = vld [vmem:[#allocation2 + $0x868] sm:$0xff]
    %v310 = vld [vmem:[#allocation2 + $0x870] sm:$0xff]
    %v311 = vld [vmem:[#allocation2 + $0x878] sm:$0xff]
    %v312 = vld [vmem:[#allocation2 + $0x880] sm:$0xff]
    %v313 = vld [vmem:[#allocation2 + $0x888] sm:$0xff]
    %v314 = vld [vmem:[#allocation2 + $0x890] sm:$0xff]
    %v315 = vld [vmem:[#allocation2 + $0x898] sm:$0xff]
    %v316 = vld [vmem:[#allocation2 + $0x8a0] sm:$0xff]
    %v317 = vld [vmem:[#allocation2 + $0x8a8] sm:$0xff]
    %v318 = vld [vmem:[#allocation2 + $0x8b0] sm:$0xff]
    %v319 = vld [vmem:[#allocation2 + $0x8b8] sm:$0xff]
    %v320 = vld [vmem:[#allocation2 + $0x8c0] sm:$0xff]
    %v321 = vld [vmem:[#allocation2 + $0x8c8] sm:$0xff]
    %v322 = vld [vmem:[#allocation2 + $0x8d0] sm:$0xff]
    %v323 = vld [vmem:[#allocation2 + $0x8d8] sm:$0xff]
    %v324 = vld [vmem:[#allocation2 + $0x8e0] sm:$0xff]
    %v325 = vld [vmem:[#allocation2 + $0x8e8] sm:$0xff]
    %v326 = vld [vmem:[%s1] sm:$0xff]
    %v327 = vld [vmem:[%s1 + $0x8] sm:$0xff]
    %v328 = vld [vmem:[%s1 + $0x10] sm:$0xff]
    %v329 = vld [vmem:[%s1 + $0x18] sm:$0xff]
    %v330 = vld [vmem:[%s1 + $0x20] sm:$0xff]
    %v331 = vld [vmem:[%s1 + $0x28] sm:$0xff]
    %v332 = vld [vmem:[%s1 + $0x30] sm:$0xff]
    %v333 = vld [vmem:[%s1 + $0x38] sm:$0xff]
    %v334 = vld [vmem:[%s1 + $0x40] sm:$0xff]
    %v335 = vld [vmem:[%s1 + $0x48] sm:$0xff]
    %v336 = vld [vmem:[%s1 + $0x50] sm:$0xff]
    %v337 = vld [vmem:[%s1 + $0x58] sm:$0xff]
    %v338 = vld [vmem:[%s1 + $0x60] sm:$0xff]
    %v339 = vld [vmem:[%s1 + $0x68] sm:$0xff]
    %v340 = vld [vmem:[%s1 + $0x70] sm:$0xff]
    %v341 = vld [vmem:[%s1 + $0x78] sm:$0xff]
    %v342 = vld [vmem:[#allocation4] sm:$0x1]
    %v344 = vlaneseq
    %v345 = vshrl.u32 %v344, 7
    %v346 = vsub.s32 0, %v345
    %v347 = vrot.slane %v342, %v346
    %349 = vmatprep.subr.mxu0 0.0
    %350 = vmatpush1.msra.mxu0 %v326
    %351 = vmatprep.subr.mxu0 0.0
    %352 = vmatpush1.msra.mxu0 %v327
    %353 = vmatprep.subr.mxu0 0.0
    %354 = vmatpush1.msra.mxu0 %v328
    %355 = vmatprep.subr.mxu0 0.0
    %356 = vmatpush1.msra.mxu0 %v329
    %357 = vmatprep.subr.mxu0 0.0
    %358 = vmatpush1.msra.mxu0 %v330
    %359 = vmatprep.subr.mxu0 0.0
    %360 = vmatpush1.msra.mxu0 %v331
    %361 = vmatprep.subr.mxu0 0.0
    %362 = vmatpush1.msra.mxu0 %v332
    %363 = vmatprep.subr.mxu0 0.0
    %364 = vmatpush1.msra.mxu0 %v333
    %365 = vmatprep.subr.mxu0 0.0
    %366 = vmatpush1.msra.mxu0 %v334
    %367 = vmatprep.subr.mxu0 0.0
    %368 = vmatpush1.msra.mxu0 %v335
    %369 = vmatprep.subr.mxu0 0.0
    %370 = vmatpush1.msra.mxu0 %v336
    %371 = vmatprep.subr.mxu0 0.0
    %372 = vmatpush1.msra.mxu0 %v337
    %373 = vmatprep.subr.mxu0 0.0
    %374 = vmatpush1.msra.mxu0 %v338
    %375 = vmatprep.subr.mxu0 0.0
    %376 = vmatpush1.msra.mxu0 %v339
    %377 = vmatprep.subr.mxu0 0.0
    %378 = vmatpush1.msra.mxu0 %v340
    %379 = vmatprep.subr.mxu0 0.0
    %380 = vmatpush1.msra.mxu0 %v341
    %381 = vmatprep.subr.mxu0 0.0
    %382 = vmatpush1.msra.mxu0 0.0
    %383 = vmatprep.subr.mxu0 0.0
    %384 = vmatpush1.msra.mxu0 0.0
    %385 = vmatprep.subr.mxu0 0.0
    %386 = vmatpush1.msra.mxu0 0.0
    %387 = vmatprep.subr.mxu0 0.0
    %388 = vmatpush1.msra.mxu0 0.0
    %389 = vmatprep.subr.mxu0 0.0
    %390 = vmatpush1.msra.mxu0 0.0
    %391 = vmatprep.subr.mxu0 0.0
    %392 = vmatpush1.msra.mxu0 0.0
    %393 = vmatprep.subr.mxu0 0.0
    %394 = vmatpush1.msra.mxu0 0.0
    %395 = vmatprep.subr.mxu0 0.0
    %396 = vmatpush1.msra.mxu0 0.0
    %397 = vmatprep.subr.mxu0 0.0
    %398 = vmatpush1.msra.mxu0 0.0
    %399 = vmatprep.subr.mxu0 0.0
    %400 = vmatpush1.msra.mxu0 0.0
    %401 = vmatprep.subr.mxu0 0.0
    %402 = vmatpush1.msra.mxu0 0.0
    %403 = vmatprep.subr.mxu0 0.0
    %404 = vmatpush1.msra.mxu0 0.0
    %405 = vmatprep.subr.mxu0 0.0
    %406 = vmatpush1.msra.mxu0 0.0
    %407 = vmatprep.subr.mxu0 0.0
    %408 = vmatpush1.msra.mxu0 0.0
    %409 = vmatprep.subr.mxu0 0.0
    %410 = vmatpush1.msra.mxu0 0.0
    %411 = vmatprep.subr.mxu0 0.0
    %412 = vmatpush1.msra.mxu0 0.0
    %413 = vmatprep.mubr.f32.mxu0 0.0
    %414 = vmatmul.mubr.f32.gmra.mrb[0].mxu0 %v40
    %v415 = vpop.f32.mrb[0].mxu0
    %v416 = vadd.f32 %v347, %v415
    %v417 = vpop.f32.mrb[0].mxu0
    %418 = vmatprep.mubr.f32.mxu0 0.0
    %419 = vmatmul.mubr.f32.gmra.mrb[0].mxu0 %v41
    %v420 = vpop.f32.mrb[0].mxu0
    %v421 = vadd.f32 %v347, %v420
    %v422 = vpop.f32.mrb[0].mxu0
    %423 = vmatprep.mubr.f32.mxu0 0.0
    %424 = vmatmul.mubr.f32.gmra.mrb[0].mxu0 %v42
    %v425 = vpop.f32.mrb[0].mxu0
    %v426 = vadd.f32 %v347, %v425
    %v427 = vpop.f32.mrb[0].mxu0
    %428 = vmatprep.mubr.f32.mxu0 0.0
    %429 = vmatmul.mubr.f32.gmra.mrb[0].mxu0 %v43
    %v430 = vpop.f32.mrb[0].mxu0
    %v431 = vadd.f32 %v347, %v430
    %v432 = vpop.f32.mrb[0].mxu0
    %433 = vmatprep.mubr.f32.mxu0 0.0
    %434 = vmatmul.mubr.f32.gmra.mrb[0].mxu0 %v44
    %v435 = vpop.f32.mrb[0].mxu0
    %v436 = vadd.f32 %v347, %v435
    %v437 = vpop.f32.mrb[0].mxu0
    %438 = vmatprep.mubr.f32.mxu0 0.0
    %439 = vmatmul.mubr.f32.gmra.mrb[0].mxu0 %v45
    %v440 = vpop.f32.mrb[0].mxu0
    %v441 = vadd.f32 %v347, %v440
    %v442 = vpop.f32.mrb[0].mxu0
    %443 = vmatprep.mubr.f32.mxu0 0.0
    %444 = vmatmul.mubr.f32.gmra.mrb[0].mxu0 %v46
    %v445 = vpop.f32.mrb[0].mxu0
    %v446 = vadd.f32 %v347, %v445
    %v447 = vpop.f32.mrb[0].mxu0
    %448 = vmatprep.mubr.f32.mxu0 0.0
    %449 = vmatmul.mubr.f32.gmra.mrb[0].mxu0 %v47
    %v450 = vpop.f32.mrb[0].mxu0
    %v451 = vadd.f32 %v347, %v450
    %v452 = vpop.f32.mrb[0].mxu0
    %453 = vmatprep.mubr.f32.mxu0 0.0
    %454 = vmatmul.mubr.f32.gmra.mrb[0].mxu0 %v48
    %v455 = vpop.f32.mrb[0].mxu0
    %v456 = vadd.f32 %v347, %v455
    %v457 = vpop.f32.mrb[0].mxu0
    %458 = vmatprep.mubr.f32.mxu0 0.0
    %459 = vmatmul.mubr.f32.gmra.mrb[0].mxu0 %v49
    %v460 = vpop.f32.mrb[0].mxu0
    %v461 = vadd.f32 %v347, %v460
    %v462 = vpop.f32.mrb[0].mxu0
    %463 = vmatprep.mubr.f32.mxu0 0.0
    %464 = vmatmul.mubr.f32.gmra.mrb[0].mxu0 %v50
    %v465 = vpop.f32.mrb[0].mxu0
    %v466 = vadd.f32 %v347, %v465
    %v467 = vpop.f32.mrb[0].mxu0
    %468 = vmatprep.mubr.f32.mxu0 0.0
    %469 = vmatmul.mubr.f32.gmra.mrb[0].mxu0 %v51
    %v470 = vpop.f32.mrb[0].mxu0
    %v471 = vadd.f32 %v347, %v470
    %v472 = vpop.f32.mrb[0].mxu0
    %473 = vmatprep.mubr.f32.mxu0 0.0
    %474 = vmatmul.mubr.f32.gmra.mrb[0].mxu0 %v52
    %v475 = vpop.f32.mrb[0].mxu0
    %v476 = vadd.f32 %v347, %v475
    %v477 = vpop.f32.mrb[0].mxu0
    %478 = vmatprep.mubr.f32.mxu0 0.0
    %479 = vmatmul.mubr.f32.gmra.mrb[0].mxu0 %v53
    %v480 = vpop.f32.mrb[0].mxu0
    %v481 = vadd.f32 %v347, %v480
    %v482 = vpop.f32.mrb[0].mxu0
    %483 = vmatprep.mubr.f32.mxu0 0.0
    %484 = vmatmul.mubr.f32.gmra.mrb[0].mxu0 %v54
    %v485 = vpop.f32.mrb[0].mxu0
    %v486 = vadd.f32 %v347, %v485
    %v487 = vpop.f32.mrb[0].mxu0
    %488 = vmatprep.mubr.f32.mxu0 0.0
    %489 = vmatmul.mubr.f32.gmra.mrb[0].mxu0 %v55
    %v490 = vpop.f32.mrb[0].mxu0
    %v491 = vadd.f32 %v347, %v490
    %v492 = vpop.f32.mrb[0].mxu0
    %493 = vmatprep.mubr.f32.mxu0 0.0
    %494 = vmatmul.mubr.f32.gmra.mrb[0].mxu0 %v56
    %v495 = vpop.f32.mrb[0].mxu0
    %v496 = vadd.f32 %v347, %v495
    %v497 = vpop.f32.mrb[0].mxu0
    %498 = vmatprep.mubr.f32.mxu0 0.0
    %499 = vmatmul.mubr.f32.gmra.mrb[0].mxu0 %v57
    %v500 = vpop.f32.mrb[0].mxu0
    %v501 = vadd.f32 %v347, %v500
    %v502 = vpop.f32.mrb[0].mxu0
    %503 = vmatprep.mubr.f32.mxu0 0.0
    %504 = vmatmul.mubr.f32.gmra.mrb[0].mxu0 %v58
    %v505 = vpop.f32.mrb[0].mxu0
    %v506 = vadd.f32 %v347, %v505
    %v507 = vpop.f32.mrb[0].mxu0
    %508 = vmatprep.mubr.f32.mxu0 0.0
    %509 = vmatmul.mubr.f32.gmra.mrb[0].mxu0 %v59
    %v510 = vpop.f32.mrb[0].mxu0
    %v511 = vadd.f32 %v347, %v510
    %v512 = vpop.f32.mrb[0].mxu0
    %513 = vmatprep.mubr.f32.mxu0 0.0
    %514 = vmatmul.mubr.f32.gmra.mrb[0].mxu0 %v60
    %v515 = vpop.f32.mrb[0].mxu0
    %v516 = vadd.f32 %v347, %v515
    %v517 = vpop.f32.mrb[0].mxu0
    %518 = vmatprep.mubr.f32.mxu0 0.0
    %519 = vmatmul.mubr.f32.gmra.mrb[0].mxu0 %v61
    %v520 = vpop.f32.mrb[0].mxu0
    %v521 = vadd.f32 %v347, %v520
    %v522 = vpop.f32.mrb[0].mxu0
    %523 = vmatprep.mubr.f32.mxu0 0.0
    %524 = vmatmul.mubr.f32.gmra.mrb[0].mxu0 %v62
    %v525 = vpop.f32.mrb[0].mxu0
    %v526 = vadd.f32 %v347, %v525
    %v527 = vpop.f32.mrb[0].mxu0
    %528 = vmatprep.mubr.f32.mxu0 0.0
    %529 = vmatmul.mubr.f32.gmra.mrb[0].mxu0 %v63
    %v530 = vpop.f32.mrb[0].mxu0
    %v531 = vadd.f32 %v347, %v530
    %v532 = vpop.f32.mrb[0].mxu0
    %533 = vmatprep.mubr.f32.mxu0 0.0
    %534 = vmatmul.mubr.f32.gmra.mrb[0].mxu0 %v64
    %v535 = vpop.f32.mrb[0].mxu0
    %v536 = vadd.f32 %v347, %v535
    %v537 = vpop.f32.mrb[0].mxu0
    %538 = vmatprep.mubr.f32.mxu0 0.0
    %539 = vmatmul.mubr.f32.gmra.mrb[0].mxu0 %v65
    %v540 = vpop.f32.mrb[0].mxu0
    %v541 = vadd.f32 %v347, %v540
    %v542 = vpop.f32.mrb[0].mxu0
    %543 = vmatprep.mubr.f32.mxu0 0.0
    %544 = vmatmul.mubr.f32.gmra.mrb[0].mxu0 %v66
    %v545 = vpop.f32.mrb[0].mxu0
    %v546 = vadd.f32 %v347, %v545
    %v547 = vpop.f32.mrb[0].mxu0
    %548 = vmatprep.mubr.f32.mxu0 0.0
    %549 = vmatmul.mubr.f32.gmra.mrb[0].mxu0 %v67
    %v550 = vpop.f32.mrb[0].mxu0
    %v551 = vadd.f32 %v347, %v550
    %v552 = vpop.f32.mrb[0].mxu0
    %553 = vmatprep.mubr.f32.mxu0 0.0
    %554 = vmatmul.mubr.f32.gmra.mrb[0].mxu0 %v68
    %v555 = vpop.f32.mrb[0].mxu0
    %v556 = vadd.f32 %v347, %v555
    %v557 = vpop.f32.mrb[0].mxu0
    %558 = vmatprep.mubr.f32.mxu0 0.0
    %559 = vmatmul.mubr.f32.gmra.mrb[0].mxu0 %v69
    %v560 = vpop.f32.mrb[0].mxu0
    %v561 = vadd.f32 %v347, %v560
    %v562 = vpop.f32.mrb[0].mxu0
    %563 = vmatprep.mubr.f32.mxu0 0.0
    %564 = vmatmul.mubr.f32.gmra.mrb[0].mxu0 %v70
    %v565 = vpop.f32.mrb[0].mxu0
    %v566 = vadd.f32 %v347, %v565
    %v567 = vpop.f32.mrb[0].mxu0
    %568 = vmatprep.mubr.f32.mxu0 0.0
    %569 = vmatmul.mubr.f32.gmra.mrb[0].mxu0 %v71
    %v570 = vpop.f32.mrb[0].mxu0
    %v571 = vadd.f32 %v347, %v570
    %v572 = vpop.f32.mrb[0].mxu0
    %573 = vmatprep.mubr.f32.mxu0 0.0
    %574 = vmatmul.mubr.f32.gmra.mrb[0].mxu0 %v72
    %v575 = vpop.f32.mrb[0].mxu0
    %v576 = vadd.f32 %v347, %v575
    %v577 = vpop.f32.mrb[0].mxu0
    %578 = vmatprep.mubr.f32.mxu0 0.0
    %579 = vmatmul.mubr.f32.gmra.mrb[0].mxu0 %v73
    %v580 = vpop.f32.mrb[0].mxu0
    %v581 = vadd.f32 %v347, %v580
    %v582 = vpop.f32.mrb[0].mxu0
    %583 = vmatprep.mubr.f32.mxu0 0.0
    %584 = vmatmul.mubr.f32.gmra.mrb[0].mxu0 %v74
    %v585 = vpop.f32.mrb[0].mxu0
    %v586 = vadd.f32 %v347, %v585
    %v587 = vpop.f32.mrb[0].mxu0
    %588 = vmatprep.mubr.f32.mxu0 0.0
    %589 = vmatmul.mubr.f32.gmra.mrb[0].mxu0 %v75
    %v590 = vpop.f32.mrb[0].mxu0
    %v591 = vadd.f32 %v347, %v590
    %v592 = vpop.f32.mrb[0].mxu0
    %593 = vmatprep.mubr.f32.mxu0 0.0
    %594 = vmatmul.mubr.f32.gmra.mrb[0].mxu0 %v76
    %v595 = vpop.f32.mrb[0].mxu0
    %v596 = vadd.f32 %v347, %v595
    %v597 = vpop.f32.mrb[0].mxu0
    %598 = vmatprep.mubr.f32.mxu0 0.0
    %599 = vmatmul.mubr.f32.gmra.mrb[0].mxu0 %v77
    %v600 = vpop.f32.mrb[0].mxu0
    %v601 = vadd.f32 %v347, %v600
    %v602 = vpop.f32.mrb[0].mxu0
    %603 = vmatprep.mubr.f32.mxu0 0.0
    %604 = vmatmul.mubr.f32.gmra.mrb[0].mxu0 %v78
    %v605 = vpop.f32.mrb[0].mxu0
    %v606 = vadd.f32 %v347, %v605
    %v607 = vpop.f32.mrb[0].mxu0
    %608 = vmatprep.mubr.f32.mxu0 0.0
    %609 = vmatmul.mubr.f32.gmra.mrb[0].mxu0 %v79
    %v610 = vpop.f32.mrb[0].mxu0
    %v611 = vadd.f32 %v347, %v610
    %v612 = vpop.f32.mrb[0].mxu0
    %613 = vmatprep.mubr.f32.mxu0 0.0
    %614 = vmatmul.mubr.f32.gmra.mrb[0].mxu0 %v80
    %v615 = vpop.f32.mrb[0].mxu0
    %v616 = vadd.f32 %v347, %v615
    %v617 = vpop.f32.mrb[0].mxu0
    %618 = vmatprep.mubr.f32.mxu0 0.0
    %619 = vmatmul.mubr.f32.gmra.mrb[0].mxu0 %v81
    %v620 = vpop.f32.mrb[0].mxu0
    %v621 = vadd.f32 %v347, %v620
    %v622 = vpop.f32.mrb[0].mxu0
    %623 = vmatprep.mubr.f32.mxu0 0.0
    %624 = vmatmul.mubr.f32.gmra.mrb[0].mxu0 %v82
    %v625 = vpop.f32.mrb[0].mxu0
    %v626 = vadd.f32 %v347, %v625
    %v627 = vpop.f32.mrb[0].mxu0
    %628 = vmatprep.mubr.f32.mxu0 0.0
    %629 = vmatmul.mubr.f32.gmra.mrb[0].mxu0 %v83
    %v630 = vpop.f32.mrb[0].mxu0
    %v631 = vadd.f32 %v347, %v630
    %v632 = vpop.f32.mrb[0].mxu0
    %633 = vmatprep.mubr.f32.mxu0 0.0
    %634 = vmatmul.mubr.f32.gmra.mrb[0].mxu0 %v84
    %v635 = vpop.f32.mrb[0].mxu0
    %v636 = vadd.f32 %v347, %v635
    %v637 = vpop.f32.mrb[0].mxu0
    %638 = vmatprep.mubr.f32.mxu0 0.0
    %639 = vmatmul.mubr.f32.gmra.mrb[0].mxu0 %v85
    %v640 = vpop.f32.mrb[0].mxu0
    %v641 = vadd.f32 %v347, %v640
    %v642 = vpop.f32.mrb[0].mxu0
    %643 = vmatprep.mubr.f32.mxu0 0.0
    %644 = vmatmul.mubr.f32.gmra.mrb[0].mxu0 %v86
    %v645 = vpop.f32.mrb[0].mxu0
    %v646 = vadd.f32 %v347, %v645
    %v647 = vpop.f32.mrb[0].mxu0
    %648 = vmatprep.mubr.f32.mxu0 0.0
    %649 = vmatmul.mubr.f32.gmra.mrb[0].mxu0 %v87
    %v650 = vpop.f32.mrb[0].mxu0
    %v651 = vadd.f32 %v347, %v650
    %v652 = vpop.f32.mrb[0].mxu0
    %653 = vmatprep.mubr.f32.mxu0 0.0
    %654 = vmatmul.mubr.f32.gmra.mrb[0].mxu0 %v88
    %v655 = vpop.f32.mrb[0].mxu0
    %v656 = vadd.f32 %v347, %v655
    %v657 = vpop.f32.mrb[0].mxu0
    %658 = vmatprep.mubr.f32.mxu0 0.0
    %659 = vmatmul.mubr.f32.gmra.mrb[0].mxu0 %v89
    %v660 = vpop.f32.mrb[0].mxu0
    %v661 = vadd.f32 %v347, %v660
    %v662 = vpop.f32.mrb[0].mxu0
    %663 = vmatprep.mubr.f32.mxu0 0.0
    %664 = vmatmul.mubr.f32.gmra.mrb[0].mxu0 %v90
    %v665 = vpop.f32.mrb[0].mxu0
    %v666 = vadd.f32 %v347, %v665
    %v667 = vpop.f32.mrb[0].mxu0
    %668 = vmatprep.mubr.f32.mxu0 0.0
    %669 = vmatmul.mubr.f32.gmra.mrb[0].mxu0 %v91
    %v670 = vpop.f32.mrb[0].mxu0
    %v671 = vadd.f32 %v347, %v670
    %v672 = vpop.f32.mrb[0].mxu0
    %673 = vmatprep.mubr.f32.mxu0 0.0
    %674 = vmatmul.mubr.f32.gmra.mrb[0].mxu0 %v92
    %v675 = vpop.f32.mrb[0].mxu0
    %v676 = vadd.f32 %v347, %v675
    %v677 = vpop.f32.mrb[0].mxu0
    %678 = vmatprep.mubr.f32.mxu0 0.0
    %679 = vmatmul.mubr.f32.gmra.mrb[0].mxu0 %v93
    %v680 = vpop.f32.mrb[0].mxu0
    %v681 = vadd.f32 %v347, %v680
    %v682 = vpop.f32.mrb[0].mxu0
    %683 = vmatprep.mubr.f32.mxu0 0.0
    %684 = vmatmul.mubr.f32.gmra.mrb[0].mxu0 %v94
    %v685 = vpop.f32.mrb[0].mxu0
    %v686 = vadd.f32 %v347, %v685
    %v687 = vpop.f32.mrb[0].mxu0
    %688 = vmatprep.mubr.f32.mxu0 0.0
    %689 = vmatmul.mubr.f32.gmra.mrb[0].mxu0 %v95
    %v690 = vpop.f32.mrb[0].mxu0
    %v691 = vadd.f32 %v347, %v690
    %v692 = vpop.f32.mrb[0].mxu0
    %693 = vmatprep.mubr.f32.mxu0 0.0
    %694 = vmatmul.mubr.f32.gmra.mrb[0].mxu0 %v96
    %v695 = vpop.f32.mrb[0].mxu0
    %v696 = vadd.f32 %v347, %v695
    %v697 = vpop.f32.mrb[0].mxu0
    %698 = vmatprep.mubr.f32.mxu0 0.0
    %699 = vmatmul.mubr.f32.gmra.mrb[0].mxu0 %v97
    %v700 = vpop.f32.mrb[0].mxu0
    %v701 = vadd.f32 %v347, %v700
    %v702 = vpop.f32.mrb[0].mxu0
    %703 = vmatprep.mubr.f32.mxu0 0.0
    %704 = vmatmul.mubr.f32.gmra.mrb[0].mxu0 %v98
    %v705 = vpop.f32.mrb[0].mxu0
    %v706 = vadd.f32 %v347, %v705
    %v707 = vpop.f32.mrb[0].mxu0
    %708 = vmatprep.mubr.f32.mxu0 0.0
    %709 = vmatmul.mubr.f32.gmra.mrb[0].mxu0 %v99
    %v710 = vpop.f32.mrb[0].mxu0
    %v711 = vadd.f32 %v347, %v710
    %v712 = vpop.f32.mrb[0].mxu0
    %713 = vmatprep.mubr.f32.mxu0 0.0
    %714 = vmatmul.mubr.f32.gmra.mrb[0].mxu0 %v100
    %v715 = vpop.f32.mrb[0].mxu0
    %v716 = vadd.f32 %v347, %v715
    %v717 = vpop.f32.mrb[0].mxu0
    %718 = vmatprep.mubr.f32.mxu0 0.0
    %719 = vmatmul.mubr.f32.gmra.mrb[0].mxu0 %v101
    %v720 = vpop.f32.mrb[0].mxu0
    %v721 = vadd.f32 %v347, %v720
    %v722 = vpop.f32.mrb[0].mxu0
    %723 = vmatprep.mubr.f32.mxu0 0.0
    %724 = vmatmul.mubr.f32.gmra.mrb[0].mxu0 %v102
    %v725 = vpop.f32.mrb[0].mxu0
    %v726 = vadd.f32 %v347, %v725
    %v727 = vpop.f32.mrb[0].mxu0
    %728 = vmatprep.mubr.f32.mxu0 0.0
    %729 = vmatmul.mubr.f32.gmra.mrb[0].mxu0 %v103
    %v730 = vpop.f32.mrb[0].mxu0
    %v731 = vadd.f32 %v347, %v730
    %v732 = vpop.f32.mrb[0].mxu0
    %733 = vmatprep.mubr.f32.mxu0 0.0
    %734 = vmatmul.mubr.f32.gmra.mrb[0].mxu0 %v104
    %v735 = vpop.f32.mrb[0].mxu0
    %v736 = vadd.f32 %v347, %v735
    %v737 = vpop.f32.mrb[0].mxu0
    %738 = vmatprep.mubr.f32.mxu0 0.0
    %739 = vmatmul.mubr.f32.gmra.mrb[0].mxu0 %v105
    %v740 = vpop.f32.mrb[0].mxu0
    %v741 = vadd.f32 %v347, %v740
    %v742 = vpop.f32.mrb[0].mxu0
    %743 = vmatprep.mubr.f32.mxu0 0.0
    %744 = vmatmul.mubr.f32.gmra.mrb[0].mxu0 %v106
    %v745 = vpop.f32.mrb[0].mxu0
    %v746 = vadd.f32 %v347, %v745
    %v747 = vpop.f32.mrb[0].mxu0
    %748 = vmatprep.mubr.f32.mxu0 0.0
    %749 = vmatmul.mubr.f32.gmra.mrb[0].mxu0 %v107
    %v750 = vpop.f32.mrb[0].mxu0
    %v751 = vadd.f32 %v347, %v750
    %v752 = vpop.f32.mrb[0].mxu0
    %753 = vmatprep.mubr.f32.mxu0 0.0
    %754 = vmatmul.mubr.f32.gmra.mrb[0].mxu0 %v108
    %v755 = vpop.f32.mrb[0].mxu0
    %v756 = vadd.f32 %v347, %v755
    %v757 = vpop.f32.mrb[0].mxu0
    %758 = vmatprep.mubr.f32.mxu0 0.0
    %759 = vmatmul.mubr.f32.gmra.mrb[0].mxu0 %v109
    %v760 = vpop.f32.mrb[0].mxu0
    %v761 = vadd.f32 %v347, %v760
    %v762 = vpop.f32.mrb[0].mxu0
    %763 = vmatprep.mubr.f32.mxu0 0.0
    %764 = vmatmul.mubr.f32.gmra.mrb[0].mxu0 %v110
    %v765 = vpop.f32.mrb[0].mxu0
    %v766 = vadd.f32 %v347, %v765
    %v767 = vpop.f32.mrb[0].mxu0
    %768 = vmatprep.mubr.f32.mxu0 0.0
    %769 = vmatmul.mubr.f32.gmra.mrb[0].mxu0 %v111
    %v770 = vpop.f32.mrb[0].mxu0
    %v771 = vadd.f32 %v347, %v770
    %v772 = vpop.f32.mrb[0].mxu0
    %773 = vmatprep.mubr.f32.mxu0 0.0
    %774 = vmatmul.mubr.f32.gmra.mrb[0].mxu0 %v112
    %v775 = vpop.f32.mrb[0].mxu0
    %v776 = vadd.f32 %v347, %v775
    %v777 = vpop.f32.mrb[0].mxu0
    %778 = vmatprep.mubr.f32.mxu0 0.0
    %779 = vmatmul.mubr.f32.gmra.mrb[0].mxu0 %v113
    %v780 = vpop.f32.mrb[0].mxu0
    %v781 = vadd.f32 %v347, %v780
    %v782 = vpop.f32.mrb[0].mxu0
    %783 = vmatprep.mubr.f32.mxu0 0.0
    %784 = vmatmul.mubr.f32.gmra.mrb[0].mxu0 %v114
    %v785 = vpop.f32.mrb[0].mxu0
    %v786 = vadd.f32 %v347, %v785
    %v787 = vpop.f32.mrb[0].mxu0
    %788 = vmatprep.mubr.f32.mxu0 0.0
    %789 = vmatmul.mubr.f32.gmra.mrb[0].mxu0 %v115
    %v790 = vpop.f32.mrb[0].mxu0
    %v791 = vadd.f32 %v347, %v790
    %v792 = vpop.f32.mrb[0].mxu0
    %793 = vmatprep.mubr.f32.mxu0 0.0
    %794 = vmatmul.mubr.f32.gmra.mrb[0].mxu0 %v116
    %v795 = vpop.f32.mrb[0].mxu0
    %v796 = vadd.f32 %v347, %v795
    %v797 = vpop.f32.mrb[0].mxu0
    %798 = vmatprep.mubr.f32.mxu0 0.0
    %799 = vmatmul.mubr.f32.gmra.mrb[0].mxu0 %v117
    %v800 = vpop.f32.mrb[0].mxu0
    %v801 = vadd.f32 %v347, %v800
    %v802 = vpop.f32.mrb[0].mxu0
    %803 = vmatprep.mubr.f32.mxu0 0.0
    %804 = vmatmul.mubr.f32.gmra.mrb[0].mxu0 %v118
    %v805 = vpop.f32.mrb[0].mxu0
    %v806 = vadd.f32 %v347, %v805
    %v807 = vpop.f32.mrb[0].mxu0
    %808 = vmatprep.mubr.f32.mxu0 0.0
    %809 = vmatmul.mubr.f32.gmra.mrb[0].mxu0 %v119
    %v810 = vpop.f32.mrb[0].mxu0
    %v811 = vadd.f32 %v347, %v810
    %v812 = vpop.f32.mrb[0].mxu0
    %813 = vmatprep.mubr.f32.mxu0 0.0
    %814 = vmatmul.mubr.f32.gmra.mrb[0].mxu0 %v120
    %v815 = vpop.f32.mrb[0].mxu0
    %v816 = vadd.f32 %v347, %v815
    %v817 = vpop.f32.mrb[0].mxu0
    %818 = vmatprep.mubr.f32.mxu0 0.0
    %819 = vmatmul.mubr.f32.gmra.mrb[0].mxu0 %v121
    %v820 = vpop.f32.mrb[0].mxu0
    %v821 = vadd.f32 %v347, %v820
    %v822 = vpop.f32.mrb[0].mxu0
    %823 = vmatprep.mubr.f32.mxu0 0.0
    %824 = vmatmul.mubr.f32.gmra.mrb[0].mxu0 %v122
    %v825 = vpop.f32.mrb[0].mxu0
    %v826 = vadd.f32 %v347, %v825
    %v827 = vpop.f32.mrb[0].mxu0
    %828 = vmatprep.mubr.f32.mxu0 0.0
    %829 = vmatmul.mubr.f32.gmra.mrb[0].mxu0 %v123
    %v830 = vpop.f32.mrb[0].mxu0
    %v831 = vadd.f32 %v347, %v830
    %v832 = vpop.f32.mrb[0].mxu0
    %833 = vmatprep.mubr.f32.mxu0 0.0
    %834 = vmatmul.mubr.f32.gmra.mrb[0].mxu0 %v124
    %v835 = vpop.f32.mrb[0].mxu0
    %v836 = vadd.f32 %v347, %v835
    %v837 = vpop.f32.mrb[0].mxu0
    %838 = vmatprep.mubr.f32.mxu0 0.0
    %839 = vmatmul.mubr.f32.gmra.mrb[0].mxu0 %v125
    %v840 = vpop.f32.mrb[0].mxu0
    %v841 = vadd.f32 %v347, %v840
    %v842 = vpop.f32.mrb[0].mxu0
    %843 = vmatprep.mubr.f32.mxu0 0.0
    %844 = vmatmul.mubr.f32.gmra.mrb[0].mxu0 %v126
    %v845 = vpop.f32.mrb[0].mxu0
    %v846 = vadd.f32 %v347, %v845
    %v847 = vpop.f32.mrb[0].mxu0
    %848 = vmatprep.mubr.f32.mxu0 0.0
    %849 = vmatmul.mubr.f32.gmra.mrb[0].mxu0 %v127
    %v850 = vpop.f32.mrb[0].mxu0
    %v851 = vadd.f32 %v347, %v850
    %v852 = vpop.f32.mrb[0].mxu0
    %853 = vmatprep.mubr.f32.mxu0 0.0
    %854 = vmatmul.mubr.f32.gmra.mrb[0].mxu0 %v128
    %v855 = vpop.f32.mrb[0].mxu0
    %v856 = vadd.f32 %v347, %v855
    %v857 = vpop.f32.mrb[0].mxu0
    %858 = vmatprep.mubr.f32.mxu0 0.0
    %859 = vmatmul.mubr.f32.gmra.mrb[0].mxu0 %v129
    %v860 = vpop.f32.mrb[0].mxu0
    %v861 = vadd.f32 %v347, %v860
    %v862 = vpop.f32.mrb[0].mxu0
    %863 = vmatprep.mubr.f32.mxu0 0.0
    %864 = vmatmul.mubr.f32.gmra.mrb[0].mxu0 %v130
    %v865 = vpop.f32.mrb[0].mxu0
    %v866 = vadd.f32 %v347, %v865
    %v867 = vpop.f32.mrb[0].mxu0
    %868 = vmatprep.mubr.f32.mxu0 0.0
    %869 = vmatmul.mubr.f32.gmra.mrb[0].mxu0 %v131
    %v870 = vpop.f32.mrb[0].mxu0
    %v871 = vadd.f32 %v347, %v870
    %v872 = vpop.f32.mrb[0].mxu0
    %873 = vmatprep.mubr.f32.mxu0 0.0
    %874 = vmatmul.mubr.f32.gmra.mrb[0].mxu0 %v132
    %v875 = vpop.f32.mrb[0].mxu0
    %v876 = vadd.f32 %v347, %v875
    %v877 = vpop.f32.mrb[0].mxu0
    %878 = vmatprep.mubr.f32.mxu0 0.0
    %879 = vmatmul.mubr.f32.gmra.mrb[0].mxu0 %v133
    %v880 = vpop.f32.mrb[0].mxu0
    %v881 = vadd.f32 %v347, %v880
    %v882 = vpop.f32.mrb[0].mxu0
    %883 = vmatprep.mubr.f32.mxu0 0.0
    %884 = vmatmul.mubr.f32.gmra.mrb[0].mxu0 %v134
    %v885 = vpop.f32.mrb[0].mxu0
    %v886 = vadd.f32 %v347, %v885
    %v887 = vpop.f32.mrb[0].mxu0
    %888 = vmatprep.mubr.f32.mxu0 0.0
    %889 = vmatmul.mubr.f32.gmra.mrb[0].mxu0 %v135
    %v890 = vpop.f32.mrb[0].mxu0
    %v891 = vadd.f32 %v347, %v890
    %v892 = vpop.f32.mrb[0].mxu0
    %893 = vmatprep.mubr.f32.mxu0 0.0
    %894 = vmatmul.mubr.f32.gmra.mrb[0].mxu0 %v136
    %v895 = vpop.f32.mrb[0].mxu0
    %v896 = vadd.f32 %v347, %v895
    %v897 = vpop.f32.mrb[0].mxu0
    %898 = vmatprep.mubr.f32.mxu0 0.0
    %899 = vmatmul.mubr.f32.gmra.mrb[0].mxu0 %v137
    %v900 = vpop.f32.mrb[0].mxu0
    %v901 = vadd.f32 %v347, %v900
    %v902 = vpop.f32.mrb[0].mxu0
    %903 = vmatprep.mubr.f32.mxu0 0.0
    %904 = vmatmul.mubr.f32.gmra.mrb[0].mxu0 %v138
    %v905 = vpop.f32.mrb[0].mxu0
    %v906 = vadd.f32 %v347, %v905
    %v907 = vpop.f32.mrb[0].mxu0
    %908 = vmatprep.mubr.f32.mxu0 0.0
    %909 = vmatmul.mubr.f32.gmra.mrb[0].mxu0 %v139
    %v910 = vpop.f32.mrb[0].mxu0
    %v911 = vadd.f32 %v347, %v910
    %v912 = vpop.f32.mrb[0].mxu0
    %913 = vmatprep.mubr.f32.mxu0 0.0
    %914 = vmatmul.mubr.f32.gmra.mrb[0].mxu0 %v140
    %v915 = vpop.f32.mrb[0].mxu0
    %v916 = vadd.f32 %v347, %v915
    %v917 = vpop.f32.mrb[0].mxu0
    %918 = vmatprep.mubr.f32.mxu0 0.0
    %919 = vmatmul.mubr.f32.gmra.mrb[0].mxu0 %v141
    %v920 = vpop.f32.mrb[0].mxu0
    %v921 = vadd.f32 %v347, %v920
    %v922 = vpop.f32.mrb[0].mxu0
    %923 = vmatprep.mubr.f32.mxu0 0.0
    %924 = vmatmul.mubr.f32.gmra.mrb[0].mxu0 %v142
    %v925 = vpop.f32.mrb[0].mxu0
    %v926 = vadd.f32 %v347, %v925
    %v927 = vpop.f32.mrb[0].mxu0
    %928 = vmatprep.mubr.f32.mxu0 0.0
    %929 = vmatmul.mubr.f32.gmra.mrb[0].mxu0 %v143
    %v930 = vpop.f32.mrb[0].mxu0
    %v931 = vadd.f32 %v347, %v930
    %v932 = vpop.f32.mrb[0].mxu0
    %933 = vmatprep.mubr.f32.mxu0 0.0
    %934 = vmatmul.mubr.f32.gmra.mrb[0].mxu0 %v144
    %v935 = vpop.f32.mrb[0].mxu0
    %v936 = vadd.f32 %v347, %v935
    %v937 = vpop.f32.mrb[0].mxu0
    %938 = vmatprep.mubr.f32.mxu0 0.0
    %939 = vmatmul.mubr.f32.gmra.mrb[0].mxu0 %v145
    %v940 = vpop.f32.mrb[0].mxu0
    %v941 = vadd.f32 %v347, %v940
    %v942 = vpop.f32.mrb[0].mxu0
    %943 = vmatprep.mubr.f32.mxu0 0.0
    %944 = vmatmul.mubr.f32.gmra.mrb[0].mxu0 %v146
    %v945 = vpop.f32.mrb[0].mxu0
    %v946 = vadd.f32 %v347, %v945
    %v947 = vpop.f32.mrb[0].mxu0
    %948 = vmatprep.mubr.f32.mxu0 0.0
    %949 = vmatmul.mubr.f32.gmra.mrb[0].mxu0 %v147
    %v950 = vpop.f32.mrb[0].mxu0
    %v951 = vadd.f32 %v347, %v950
    %v952 = vpop.f32.mrb[0].mxu0
    %953 = vmatprep.mubr.f32.mxu0 0.0
    %954 = vmatmul.mubr.f32.gmra.mrb[0].mxu0 %v148
    %v955 = vpop.f32.mrb[0].mxu0
    %v956 = vadd.f32 %v347, %v955
    %v957 = vpop.f32.mrb[0].mxu0
    %958 = vmatprep.mubr.f32.mxu0 0.0
    %959 = vmatmul.mubr.f32.gmra.mrb[0].mxu0 %v149
    %v960 = vpop.f32.mrb[0].mxu0
    %v961 = vadd.f32 %v347, %v960
    %v962 = vpop.f32.mrb[0].mxu0
    %963 = vmatprep.mubr.f32.mxu0 0.0
    %964 = vmatmul.mubr.f32.gmra.mrb[0].mxu0 %v150
    %v965 = vpop.f32.mrb[0].mxu0
    %v966 = vadd.f32 %v347, %v965
    %v967 = vpop.f32.mrb[0].mxu0
    %968 = vmatprep.mubr.f32.mxu0 0.0
    %969 = vmatmul.mubr.f32.gmra.mrb[0].mxu0 %v151
    %v970 = vpop.f32.mrb[0].mxu0
    %v971 = vadd.f32 %v347, %v970
    %v972 = vpop.f32.mrb[0].mxu0
    %973 = vmatprep.mubr.f32.mxu0 0.0
    %974 = vmatmul.mubr.f32.gmra.mrb[0].mxu0 %v152
    %v975 = vpop.f32.mrb[0].mxu0
    %v976 = vadd.f32 %v347, %v975
    %v977 = vpop.f32.mrb[0].mxu0
    %978 = vmatprep.mubr.f32.mxu0 0.0
    %979 = vmatmul.mubr.f32.gmra.mrb[0].mxu0 %v153
    %v980 = vpop.f32.mrb[0].mxu0
    %v981 = vadd.f32 %v347, %v980
    %v982 = vpop.f32.mrb[0].mxu0
    %983 = vmatprep.mubr.f32.mxu0 0.0
    %984 = vmatmul.mubr.f32.gmra.mrb[0].mxu0 %v154
    %v985 = vpop.f32.mrb[0].mxu0
    %v986 = vadd.f32 %v347, %v985
    %v987 = vpop.f32.mrb[0].mxu0
    %988 = vmatprep.mubr.f32.mxu0 0.0
    %989 = vmatmul.mubr.f32.gmra.mrb[0].mxu0 %v155
    %v990 = vpop.f32.mrb[0].mxu0
    %v991 = vadd.f32 %v347, %v990
    %v992 = vpop.f32.mrb[0].mxu0
    %993 = vmatprep.mubr.f32.mxu0 0.0
    %994 = vmatmul.mubr.f32.gmra.mrb[0].mxu0 %v156
    %v995 = vpop.f32.mrb[0].mxu0
    %v996 = vadd.f32 %v347, %v995
    %v997 = vpop.f32.mrb[0].mxu0
    %998 = vmatprep.mubr.f32.mxu0 0.0
    %999 = vmatmul.mubr.f32.gmra.mrb[0].mxu0 %v157
    %v1000 = vpop.f32.mrb[0].mxu0
    %v1001 = vadd.f32 %v347, %v1000
    %v1002 = vpop.f32.mrb[0].mxu0
    %1003 = vmatprep.mubr.f32.mxu0 0.0
    %1004 = vmatmul.mubr.f32.gmra.mrb[0].mxu0 %v158
    %v1005 = vpop.f32.mrb[0].mxu0
    %v1006 = vadd.f32 %v347, %v1005
    %v1007 = vpop.f32.mrb[0].mxu0
    %1008 = vmatprep.mubr.f32.mxu0 0.0
    %1009 = vmatmul.mubr.f32.gmra.mrb[0].mxu0 %v159
    %v1010 = vpop.f32.mrb[0].mxu0
    %v1011 = vadd.f32 %v347, %v1010
    %v1012 = vpop.f32.mrb[0].mxu0
    %1013 = vmatprep.mubr.f32.mxu0 0.0
    %1014 = vmatmul.mubr.f32.gmra.mrb[0].mxu0 %v160
    %v1015 = vpop.f32.mrb[0].mxu0
    %v1016 = vadd.f32 %v347, %v1015
    %v1017 = vpop.f32.mrb[0].mxu0
    %1018 = vmatprep.mubr.f32.mxu0 0.0
    %1019 = vmatmul.mubr.f32.gmra.mrb[0].mxu0 %v161
    %v1020 = vpop.f32.mrb[0].mxu0
    %v1021 = vadd.f32 %v347, %v1020
    %v1022 = vpop.f32.mrb[0].mxu0
    %1023 = vmatprep.mubr.f32.mxu0 0.0
    %1024 = vmatmul.mubr.f32.gmra.mrb[0].mxu0 %v162
    %v1025 = vpop.f32.mrb[0].mxu0
    %v1026 = vadd.f32 %v347, %v1025
    %v1027 = vpop.f32.mrb[0].mxu0
    %1028 = vmatprep.mubr.f32.mxu0 0.0
    %1029 = vmatmul.mubr.f32.gmra.mrb[0].mxu0 %v163
    %v1030 = vpop.f32.mrb[0].mxu0
    %v1031 = vadd.f32 %v347, %v1030
    %v1032 = vpop.f32.mrb[0].mxu0
    %1033 = vmatprep.mubr.f32.mxu0 0.0
    %1034 = vmatmul.mubr.f32.gmra.mrb[0].mxu0 %v164
    %v1035 = vpop.f32.mrb[0].mxu0
    %v1036 = vadd.f32 %v347, %v1035
    %v1037 = vpop.f32.mrb[0].mxu0
    %1038 = vmatprep.mubr.f32.mxu0 0.0
    %1039 = vmatmul.mubr.f32.gmra.mrb[0].mxu0 %v165
    %v1040 = vpop.f32.mrb[0].mxu0
    %v1041 = vadd.f32 %v347, %v1040
    %v1042 = vpop.f32.mrb[0].mxu0
    %1043 = vmatprep.mubr.f32.mxu0 0.0
    %1044 = vmatmul.mubr.f32.gmra.mrb[0].mxu0 %v166
    %v1045 = vpop.f32.mrb[0].mxu0
    %v1046 = vadd.f32 %v347, %v1045
    %v1047 = vpop.f32.mrb[0].mxu0
    %1048 = vmatprep.mubr.f32.mxu0 0.0
    %1049 = vmatmul.mubr.f32.gmra.mrb[0].mxu0 %v167
    %v1050 = vpop.f32.mrb[0].mxu0
    %v1051 = vadd.f32 %v347, %v1050
    %v1052 = vpop.f32.mrb[0].mxu0
    %1053 = vmatprep.mubr.f32.mxu0 0.0
    %1054 = vmatmul.mubr.f32.gmra.mrb[0].mxu0 %v168
    %v1055 = vpop.f32.mrb[0].mxu0
    %v1056 = vadd.f32 %v347, %v1055
    %v1057 = vpop.f32.mrb[0].mxu0
    %1058 = vmatprep.mubr.f32.mxu0 0.0
    %1059 = vmatmul.mubr.f32.gmra.mrb[0].mxu0 %v169
    %v1060 = vpop.f32.mrb[0].mxu0
    %v1061 = vadd.f32 %v347, %v1060
    %v1062 = vpop.f32.mrb[0].mxu0
    %1063 = vmatprep.mubr.f32.mxu0 0.0
    %1064 = vmatmul.mubr.f32.gmra.mrb[0].mxu0 %v170
    %v1065 = vpop.f32.mrb[0].mxu0
    %v1066 = vadd.f32 %v347, %v1065
    %v1067 = vpop.f32.mrb[0].mxu0
    %1068 = vmatprep.mubr.f32.mxu0 0.0
    %1069 = vmatmul.mubr.f32.gmra.mrb[0].mxu0 %v171
    %v1070 = vpop.f32.mrb[0].mxu0
    %v1071 = vadd.f32 %v347, %v1070
    %v1072 = vpop.f32.mrb[0].mxu0
    %1073 = vmatprep.mubr.f32.mxu0 0.0
    %1074 = vmatmul.mubr.f32.gmra.mrb[0].mxu0 %v172
    %v1075 = vpop.f32.mrb[0].mxu0
    %v1076 = vadd.f32 %v347, %v1075
    %v1077 = vpop.f32.mrb[0].mxu0
    %1078 = vmatprep.mubr.f32.mxu0 0.0
    %1079 = vmatmul.mubr.f32.gmra.mrb[0].mxu0 %v173
    %v1080 = vpop.f32.mrb[0].mxu0
    %v1081 = vadd.f32 %v347, %v1080
    %v1082 = vpop.f32.mrb[0].mxu0
    %1083 = vmatprep.mubr.f32.mxu0 0.0
    %1084 = vmatmul.mubr.f32.gmra.mrb[0].mxu0 %v174
    %v1085 = vpop.f32.mrb[0].mxu0
    %v1086 = vadd.f32 %v347, %v1085
    %v1087 = vpop.f32.mrb[0].mxu0
    %1088 = vmatprep.mubr.f32.mxu0 0.0
    %1089 = vmatmul.mubr.f32.gmra.mrb[0].mxu0 %v175
    %v1090 = vpop.f32.mrb[0].mxu0
    %v1091 = vadd.f32 %v347, %v1090
    %v1092 = vpop.f32.mrb[0].mxu0
    %1093 = vmatprep.mubr.f32.mxu0 0.0
    %1094 = vmatmul.mubr.f32.gmra.mrb[0].mxu0 %v176
    %v1095 = vpop.f32.mrb[0].mxu0
    %v1096 = vadd.f32 %v347, %v1095
    %v1097 = vpop.f32.mrb[0].mxu0
    %1098 = vmatprep.mubr.f32.mxu0 0.0
    %1099 = vmatmul.mubr.f32.gmra.mrb[0].mxu0 %v177
    %v1100 = vpop.f32.mrb[0].mxu0
    %v1101 = vadd.f32 %v347, %v1100
    %v1102 = vpop.f32.mrb[0].mxu0
    %1103 = vmatprep.mubr.f32.mxu0 0.0
    %1104 = vmatmul.mubr.f32.gmra.mrb[0].mxu0 %v178
    %v1105 = vpop.f32.mrb[0].mxu0
    %v1106 = vadd.f32 %v347, %v1105
    %v1107 = vpop.f32.mrb[0].mxu0
    %1108 = vmatprep.mubr.f32.mxu0 0.0
    %1109 = vmatmul.mubr.f32.gmra.mrb[0].mxu0 %v179
    %v1110 = vpop.f32.mrb[0].mxu0
    %v1111 = vadd.f32 %v347, %v1110
    %v1112 = vpop.f32.mrb[0].mxu0
    %1113 = vmatprep.mubr.f32.mxu0 0.0
    %1114 = vmatmul.mubr.f32.gmra.mrb[0].mxu0 %v180
    %v1115 = vpop.f32.mrb[0].mxu0
    %v1116 = vadd.f32 %v347, %v1115
    %v1117 = vpop.f32.mrb[0].mxu0
    %1118 = vmatprep.mubr.f32.mxu0 0.0
    %1119 = vmatmul.mubr.f32.gmra.mrb[0].mxu0 %v181
    %v1120 = vpop.f32.mrb[0].mxu0
    %v1121 = vadd.f32 %v347, %v1120
    %v1122 = vpop.f32.mrb[0].mxu0
    %1123 = vmatprep.mubr.f32.mxu0 0.0
    %1124 = vmatmul.mubr.f32.gmra.mrb[0].mxu0 %v182
    %v1125 = vpop.f32.mrb[0].mxu0
    %v1126 = vadd.f32 %v347, %v1125
    %v1127 = vpop.f32.mrb[0].mxu0
    %1128 = vmatprep.mubr.f32.mxu0 0.0
    %1129 = vmatmul.mubr.f32.gmra.mrb[0].mxu0 %v183
    %v1130 = vpop.f32.mrb[0].mxu0
    %v1131 = vadd.f32 %v347, %v1130
    %v1132 = vpop.f32.mrb[0].mxu0
    %1133 = vmatprep.mubr.f32.mxu0 0.0
    %1134 = vmatmul.mubr.f32.gmra.mrb[0].mxu0 %v184
    %v1135 = vpop.f32.mrb[0].mxu0
    %v1136 = vadd.f32 %v347, %v1135
    %v1137 = vpop.f32.mrb[0].mxu0
    %1138 = vmatprep.mubr.f32.mxu0 0.0
    %1139 = vmatmul.mubr.f32.gmra.mrb[0].mxu0 %v185
    %v1140 = vpop.f32.mrb[0].mxu0
    %v1141 = vadd.f32 %v347, %v1140
    %v1142 = vpop.f32.mrb[0].mxu0
    %1143 = vmatprep.mubr.f32.mxu0 0.0
    %1144 = vmatmul.mubr.f32.gmra.mrb[0].mxu0 %v186
    %v1145 = vpop.f32.mrb[0].mxu0
    %v1146 = vadd.f32 %v347, %v1145
    %v1147 = vpop.f32.mrb[0].mxu0
    %1148 = vmatprep.mubr.f32.mxu0 0.0
    %1149 = vmatmul.mubr.f32.gmra.mrb[0].mxu0 %v187
    %v1150 = vpop.f32.mrb[0].mxu0
    %v1151 = vadd.f32 %v347, %v1150
    %v1152 = vpop.f32.mrb[0].mxu0
    %1153 = vmatprep.mubr.f32.mxu0 0.0
    %1154 = vmatmul.mubr.f32.gmra.mrb[0].mxu0 %v188
    %v1155 = vpop.f32.mrb[0].mxu0
    %v1156 = vadd.f32 %v347, %v1155
    %v1157 = vpop.f32.mrb[0].mxu0
    %1158 = vmatprep.mubr.f32.mxu0 0.0
    %1159 = vmatmul.mubr.f32.gmra.mrb[0].mxu0 %v189
    %v1160 = vpop.f32.mrb[0].mxu0
    %v1161 = vadd.f32 %v347, %v1160
    %v1162 = vpop.f32.mrb[0].mxu0
    %1163 = vmatprep.mubr.f32.mxu0 0.0
    %1164 = vmatmul.mubr.f32.gmra.mrb[0].mxu0 %v190
    %v1165 = vpop.f32.mrb[0].mxu0
    %v1166 = vadd.f32 %v347, %v1165
    %v1167 = vpop.f32.mrb[0].mxu0
    %1168 = vmatprep.mubr.f32.mxu0 0.0
    %1169 = vmatmul.mubr.f32.gmra.mrb[0].mxu0 %v191
    %v1170 = vpop.f32.mrb[0].mxu0
    %v1171 = vadd.f32 %v347, %v1170
    %v1172 = vpop.f32.mrb[0].mxu0
    %1173 = vmatprep.mubr.f32.mxu0 0.0
    %1174 = vmatmul.mubr.f32.gmra.mrb[0].mxu0 %v192
    %v1175 = vpop.f32.mrb[0].mxu0
    %v1176 = vadd.f32 %v347, %v1175
    %v1177 = vpop.f32.mrb[0].mxu0
    %1178 = vmatprep.mubr.f32.mxu0 0.0
    %1179 = vmatmul.mubr.f32.gmra.mrb[0].mxu0 %v193
    %v1180 = vpop.f32.mrb[0].mxu0
    %v1181 = vadd.f32 %v347, %v1180
    %v1182 = vpop.f32.mrb[0].mxu0
    %1183 = vmatprep.mubr.f32.mxu0 0.0
    %1184 = vmatmul.mubr.f32.gmra.mrb[0].mxu0 %v194
    %v1185 = vpop.f32.mrb[0].mxu0
    %v1186 = vadd.f32 %v347, %v1185
    %v1187 = vpop.f32.mrb[0].mxu0
    %1188 = vmatprep.mubr.f32.mxu0 0.0
    %1189 = vmatmul.mubr.f32.gmra.mrb[0].mxu0 %v195
    %v1190 = vpop.f32.mrb[0].mxu0
    %v1191 = vadd.f32 %v347, %v1190
    %v1192 = vpop.f32.mrb[0].mxu0
    %1193 = vmatprep.mubr.f32.mxu0 0.0
    %1194 = vmatmul.mubr.f32.gmra.mrb[0].mxu0 %v196
    %v1195 = vpop.f32.mrb[0].mxu0
    %v1196 = vadd.f32 %v347, %v1195
    %v1197 = vpop.f32.mrb[0].mxu0
    %1198 = vmatprep.mubr.f32.mxu0 0.0
    %1199 = vmatmul.mubr.f32.gmra.mrb[0].mxu0 %v197
    %v1200 = vpop.f32.mrb[0].mxu0
    %v1201 = vadd.f32 %v347, %v1200
    %v1202 = vpop.f32.mrb[0].mxu0
    %1203 = vmatprep.mubr.f32.mxu0 0.0
    %1204 = vmatmul.mubr.f32.gmra.mrb[0].mxu0 %v198
    %v1205 = vpop.f32.mrb[0].mxu0
    %v1206 = vadd.f32 %v347, %v1205
    %v1207 = vpop.f32.mrb[0].mxu0
    %1208 = vmatprep.mubr.f32.mxu0 0.0
    %1209 = vmatmul.mubr.f32.gmra.mrb[0].mxu0 %v199
    %v1210 = vpop.f32.mrb[0].mxu0
    %v1211 = vadd.f32 %v347, %v1210
    %v1212 = vpop.f32.mrb[0].mxu0
    %1213 = vmatprep.mubr.f32.mxu0 0.0
    %1214 = vmatmul.mubr.f32.gmra.mrb[0].mxu0 %v200
    %v1215 = vpop.f32.mrb[0].mxu0
    %v1216 = vadd.f32 %v347, %v1215
    %v1217 = vpop.f32.mrb[0].mxu0
    %1218 = vmatprep.mubr.f32.mxu0 0.0
    %1219 = vmatmul.mubr.f32.gmra.mrb[0].mxu0 %v201
    %v1220 = vpop.f32.mrb[0].mxu0
    %v1221 = vadd.f32 %v347, %v1220
    %v1222 = vpop.f32.mrb[0].mxu0
    %1223 = vmatprep.mubr.f32.mxu0 0.0
    %1224 = vmatmul.mubr.f32.gmra.mrb[0].mxu0 %v202
    %v1225 = vpop.f32.mrb[0].mxu0
    %v1226 = vadd.f32 %v347, %v1225
    %v1227 = vpop.f32.mrb[0].mxu0
    %1228 = vmatprep.mubr.f32.mxu0 0.0
    %1229 = vmatmul.mubr.f32.gmra.mrb[0].mxu0 %v203
    %v1230 = vpop.f32.mrb[0].mxu0
    %v1231 = vadd.f32 %v347, %v1230
    %v1232 = vpop.f32.mrb[0].mxu0
    %1233 = vmatprep.mubr.f32.mxu0 0.0
    %1234 = vmatmul.mubr.f32.gmra.mrb[0].mxu0 %v204
    %v1235 = vpop.f32.mrb[0].mxu0
    %v1236 = vadd.f32 %v347, %v1235
    %v1237 = vpop.f32.mrb[0].mxu0
    %1238 = vmatprep.mubr.f32.mxu0 0.0
    %1239 = vmatmul.mubr.f32.gmra.mrb[0].mxu0 %v205
    %v1240 = vpop.f32.mrb[0].mxu0
    %v1241 = vadd.f32 %v347, %v1240
    %v1242 = vpop.f32.mrb[0].mxu0
    %1243 = vmatprep.mubr.f32.mxu0 0.0
    %1244 = vmatmul.mubr.f32.gmra.mrb[0].mxu0 %v206
    %v1245 = vpop.f32.mrb[0].mxu0
    %v1246 = vadd.f32 %v347, %v1245
    %v1247 = vpop.f32.mrb[0].mxu0
    %1248 = vmatprep.mubr.f32.mxu0 0.0
    %1249 = vmatmul.mubr.f32.gmra.mrb[0].mxu0 %v207
    %v1250 = vpop.f32.mrb[0].mxu0
    %v1251 = vadd.f32 %v347, %v1250
    %v1252 = vpop.f32.mrb[0].mxu0
    %1253 = vmatprep.mubr.f32.mxu0 0.0
    %1254 = vmatmul.mubr.f32.gmra.mrb[0].mxu0 %v208
    %v1255 = vpop.f32.mrb[0].mxu0
    %v1256 = vadd.f32 %v347, %v1255
    %v1257 = vpop.f32.mrb[0].mxu0
    %1258 = vmatprep.mubr.f32.mxu0 0.0
    %1259 = vmatmul.mubr.f32.gmra.mrb[0].mxu0 %v209
    %v1260 = vpop.f32.mrb[0].mxu0
    %v1261 = vadd.f32 %v347, %v1260
    %v1262 = vpop.f32.mrb[0].mxu0
    %1263 = vmatprep.mubr.f32.mxu0 0.0
    %1264 = vmatmul.mubr.f32.gmra.mrb[0].mxu0 %v210
    %v1265 = vpop.f32.mrb[0].mxu0
    %v1266 = vadd.f32 %v347, %v1265
    %v1267 = vpop.f32.mrb[0].mxu0
    %1268 = vmatprep.mubr.f32.mxu0 0.0
    %1269 = vmatmul.mubr.f32.gmra.mrb[0].mxu0 %v211
    %v1270 = vpop.f32.mrb[0].mxu0
    %v1271 = vadd.f32 %v347, %v1270
    %v1272 = vpop.f32.mrb[0].mxu0
    %1273 = vmatprep.mubr.f32.mxu0 0.0
    %1274 = vmatmul.mubr.f32.gmra.mrb[0].mxu0 %v212
    %v1275 = vpop.f32.mrb[0].mxu0
    %v1276 = vadd.f32 %v347, %v1275
    %v1277 = vpop.f32.mrb[0].mxu0
    %1278 = vmatprep.mubr.f32.mxu0 0.0
    %1279 = vmatmul.mubr.f32.gmra.mrb[0].mxu0 %v213
    %v1280 = vpop.f32.mrb[0].mxu0
    %v1281 = vadd.f32 %v347, %v1280
    %v1282 = vpop.f32.mrb[0].mxu0
    %1283 = vmatprep.mubr.f32.mxu0 0.0
    %1284 = vmatmul.mubr.f32.gmra.mrb[0].mxu0 %v214
    %v1285 = vpop.f32.mrb[0].mxu0
    %v1286 = vadd.f32 %v347, %v1285
    %v1287 = vpop.f32.mrb[0].mxu0
    %1288 = vmatprep.mubr.f32.mxu0 0.0
    %1289 = vmatmul.mubr.f32.gmra.mrb[0].mxu0 %v215
    %v1290 = vpop.f32.mrb[0].mxu0
    %v1291 = vadd.f32 %v347, %v1290
    %v1292 = vpop.f32.mrb[0].mxu0
    %1293 = vmatprep.mubr.f32.mxu0 0.0
    %1294 = vmatmul.mubr.f32.gmra.mrb[0].mxu0 %v216
    %v1295 = vpop.f32.mrb[0].mxu0
    %v1296 = vadd.f32 %v347, %v1295
    %v1297 = vpop.f32.mrb[0].mxu0
    %1298 = vmatprep.mubr.f32.mxu0 0.0
    %1299 = vmatmul.mubr.f32.gmra.mrb[0].mxu0 %v217
    %v1300 = vpop.f32.mrb[0].mxu0
    %v1301 = vadd.f32 %v347, %v1300
    %v1302 = vpop.f32.mrb[0].mxu0
    %1303 = vmatprep.mubr.f32.mxu0 0.0
    %1304 = vmatmul.mubr.f32.gmra.mrb[0].mxu0 %v218
    %v1305 = vpop.f32.mrb[0].mxu0
    %v1306 = vadd.f32 %v347, %v1305
    %v1307 = vpop.f32.mrb[0].mxu0
    %1308 = vmatprep.mubr.f32.mxu0 0.0
    %1309 = vmatmul.mubr.f32.gmra.mrb[0].mxu0 %v219
    %v1310 = vpop.f32.mrb[0].mxu0
    %v1311 = vadd.f32 %v347, %v1310
    %v1312 = vpop.f32.mrb[0].mxu0
    %1313 = vmatprep.mubr.f32.mxu0 0.0
    %1314 = vmatmul.mubr.f32.gmra.mrb[0].mxu0 %v220
    %v1315 = vpop.f32.mrb[0].mxu0
    %v1316 = vadd.f32 %v347, %v1315
    %v1317 = vpop.f32.mrb[0].mxu0
    %1318 = vmatprep.mubr.f32.mxu0 0.0
    %1319 = vmatmul.mubr.f32.gmra.mrb[0].mxu0 %v221
    %v1320 = vpop.f32.mrb[0].mxu0
    %v1321 = vadd.f32 %v347, %v1320
    %v1322 = vpop.f32.mrb[0].mxu0
    %1323 = vmatprep.mubr.f32.mxu0 0.0
    %1324 = vmatmul.mubr.f32.gmra.mrb[0].mxu0 %v222
    %v1325 = vpop.f32.mrb[0].mxu0
    %v1326 = vadd.f32 %v347, %v1325
    %v1327 = vpop.f32.mrb[0].mxu0
    %1328 = vmatprep.mubr.f32.mxu0 0.0
    %1329 = vmatmul.mubr.f32.gmra.mrb[0].mxu0 %v223
    %v1330 = vpop.f32.mrb[0].mxu0
    %v1331 = vadd.f32 %v347, %v1330
    %v1332 = vpop.f32.mrb[0].mxu0
    %1333 = vmatprep.mubr.f32.mxu0 0.0
    %1334 = vmatmul.mubr.f32.gmra.mrb[0].mxu0 %v224
    %v1335 = vpop.f32.mrb[0].mxu0
    %v1336 = vadd.f32 %v347, %v1335
    %v1337 = vpop.f32.mrb[0].mxu0
    %1338 = vmatprep.mubr.f32.mxu0 0.0
    %1339 = vmatmul.mubr.f32.gmra.mrb[0].mxu0 %v225
    %v1340 = vpop.f32.mrb[0].mxu0
    %v1341 = vadd.f32 %v347, %v1340
    %v1342 = vpop.f32.mrb[0].mxu0
    %1343 = vmatprep.mubr.f32.mxu0 0.0
    %1344 = vmatmul.mubr.f32.gmra.mrb[0].mxu0 %v226
    %v1345 = vpop.f32.mrb[0].mxu0
    %v1346 = vadd.f32 %v347, %v1345
    %v1347 = vpop.f32.mrb[0].mxu0
    %1348 = vmatprep.mubr.f32.mxu0 0.0
    %1349 = vmatmul.mubr.f32.gmra.mrb[0].mxu0 %v227
    %v1350 = vpop.f32.mrb[0].mxu0
    %v1351 = vadd.f32 %v347, %v1350
    %v1352 = vpop.f32.mrb[0].mxu0
    %1353 = vmatprep.mubr.f32.mxu0 0.0
    %1354 = vmatmul.mubr.f32.gmra.mrb[0].mxu0 %v228
    %v1355 = vpop.f32.mrb[0].mxu0
    %v1356 = vadd.f32 %v347, %v1355
    %v1357 = vpop.f32.mrb[0].mxu0
    %1358 = vmatprep.mubr.f32.mxu0 0.0
    %1359 = vmatmul.mubr.f32.gmra.mrb[0].mxu0 %v229
    %v1360 = vpop.f32.mrb[0].mxu0
    %v1361 = vadd.f32 %v347, %v1360
    %v1362 = vpop.f32.mrb[0].mxu0
    %1363 = vmatprep.mubr.f32.mxu0 0.0
    %1364 = vmatmul.mubr.f32.gmra.mrb[0].mxu0 %v230
    %v1365 = vpop.f32.mrb[0].mxu0
    %v1366 = vadd.f32 %v347, %v1365
    %v1367 = vpop.f32.mrb[0].mxu0
    %1368 = vmatprep.mubr.f32.mxu0 0.0
    %1369 = vmatmul.mubr.f32.gmra.mrb[0].mxu0 %v231
    %v1370 = vpop.f32.mrb[0].mxu0
    %v1371 = vadd.f32 %v347, %v1370
    %v1372 = vpop.f32.mrb[0].mxu0
    %1373 = vmatprep.mubr.f32.mxu0 0.0
    %1374 = vmatmul.mubr.f32.gmra.mrb[0].mxu0 %v232
    %v1375 = vpop.f32.mrb[0].mxu0
    %v1376 = vadd.f32 %v347, %v1375
    %v1377 = vpop.f32.mrb[0].mxu0
    %1378 = vmatprep.mubr.f32.mxu0 0.0
    %1379 = vmatmul.mubr.f32.gmra.mrb[0].mxu0 %v233
    %v1380 = vpop.f32.mrb[0].mxu0
    %v1381 = vadd.f32 %v347, %v1380
    %v1382 = vpop.f32.mrb[0].mxu0
    %1383 = vmatprep.mubr.f32.mxu0 0.0
    %1384 = vmatmul.mubr.f32.gmra.mrb[0].mxu0 %v234
    %v1385 = vpop.f32.mrb[0].mxu0
    %v1386 = vadd.f32 %v347, %v1385
    %v1387 = vpop.f32.mrb[0].mxu0
    %1388 = vmatprep.mubr.f32.mxu0 0.0
    %1389 = vmatmul.mubr.f32.gmra.mrb[0].mxu0 %v235
    %v1390 = vpop.f32.mrb[0].mxu0
    %v1391 = vadd.f32 %v347, %v1390
    %v1392 = vpop.f32.mrb[0].mxu0
    %1393 = vmatprep.mubr.f32.mxu0 0.0
    %1394 = vmatmul.mubr.f32.gmra.mrb[0].mxu0 %v236
    %v1395 = vpop.f32.mrb[0].mxu0
    %v1396 = vadd.f32 %v347, %v1395
    %v1397 = vpop.f32.mrb[0].mxu0
    %1398 = vmatprep.mubr.f32.mxu0 0.0
    %1399 = vmatmul.mubr.f32.gmra.mrb[0].mxu0 %v237
    %v1400 = vpop.f32.mrb[0].mxu0
    %v1401 = vadd.f32 %v347, %v1400
    %v1402 = vpop.f32.mrb[0].mxu0
    %1403 = vmatprep.mubr.f32.mxu0 0.0
    %1404 = vmatmul.mubr.f32.gmra.mrb[0].mxu0 %v238
    %v1405 = vpop.f32.mrb[0].mxu0
    %v1406 = vadd.f32 %v347, %v1405
    %v1407 = vpop.f32.mrb[0].mxu0
    %1408 = vmatprep.mubr.f32.mxu0 0.0
    %1409 = vmatmul.mubr.f32.gmra.mrb[0].mxu0 %v239
    %v1410 = vpop.f32.mrb[0].mxu0
    %v1411 = vadd.f32 %v347, %v1410
    %v1412 = vpop.f32.mrb[0].mxu0
    %1413 = vmatprep.mubr.f32.mxu0 0.0
    %1414 = vmatmul.mubr.f32.gmra.mrb[0].mxu0 %v240
    %v1415 = vpop.f32.mrb[0].mxu0
    %v1416 = vadd.f32 %v347, %v1415
    %v1417 = vpop.f32.mrb[0].mxu0
    %1418 = vmatprep.mubr.f32.mxu0 0.0
    %1419 = vmatmul.mubr.f32.gmra.mrb[0].mxu0 %v241
    %v1420 = vpop.f32.mrb[0].mxu0
    %v1421 = vadd.f32 %v347, %v1420
    %v1422 = vpop.f32.mrb[0].mxu0
    %1423 = vmatprep.mubr.f32.mxu0 0.0
    %1424 = vmatmul.mubr.f32.gmra.mrb[0].mxu0 %v242
    %v1425 = vpop.f32.mrb[0].mxu0
    %v1426 = vadd.f32 %v347, %v1425
    %v1427 = vpop.f32.mrb[0].mxu0
    %1428 = vmatprep.mubr.f32.mxu0 0.0
    %1429 = vmatmul.mubr.f32.gmra.mrb[0].mxu0 %v243
    %v1430 = vpop.f32.mrb[0].mxu0
    %v1431 = vadd.f32 %v347, %v1430
    %v1432 = vpop.f32.mrb[0].mxu0
    %1433 = vmatprep.mubr.f32.mxu0 0.0
    %1434 = vmatmul.mubr.f32.gmra.mrb[0].mxu0 %v244
    %v1435 = vpop.f32.mrb[0].mxu0
    %v1436 = vadd.f32 %v347, %v1435
    %v1437 = vpop.f32.mrb[0].mxu0
    %1438 = vmatprep.mubr.f32.mxu0 0.0
    %1439 = vmatmul.mubr.f32.gmra.mrb[0].mxu0 %v245
    %v1440 = vpop.f32.mrb[0].mxu0
    %v1441 = vadd.f32 %v347, %v1440
    %v1442 = vpop.f32.mrb[0].mxu0
    %1443 = vmatprep.mubr.f32.mxu0 0.0
    %1444 = vmatmul.mubr.f32.gmra.mrb[0].mxu0 %v246
    %v1445 = vpop.f32.mrb[0].mxu0
    %v1446 = vadd.f32 %v347, %v1445
    %v1447 = vpop.f32.mrb[0].mxu0
    %1448 = vmatprep.mubr.f32.mxu0 0.0
    %1449 = vmatmul.mubr.f32.gmra.mrb[0].mxu0 %v247
    %v1450 = vpop.f32.mrb[0].mxu0
    %v1451 = vadd.f32 %v347, %v1450
    %v1452 = vpop.f32.mrb[0].mxu0
    %1453 = vmatprep.mubr.f32.mxu0 0.0
    %1454 = vmatmul.mubr.f32.gmra.mrb[0].mxu0 %v248
    %v1455 = vpop.f32.mrb[0].mxu0
    %v1456 = vadd.f32 %v347, %v1455
    %v1457 = vpop.f32.mrb[0].mxu0
    %1458 = vmatprep.mubr.f32.mxu0 0.0
    %1459 = vmatmul.mubr.f32.gmra.mrb[0].mxu0 %v249
    %v1460 = vpop.f32.mrb[0].mxu0
    %v1461 = vadd.f32 %v347, %v1460
    %v1462 = vpop.f32.mrb[0].mxu0
    %1463 = vmatprep.mubr.f32.mxu0 0.0
    %1464 = vmatmul.mubr.f32.gmra.mrb[0].mxu0 %v250
    %v1465 = vpop.f32.mrb[0].mxu0
    %v1466 = vadd.f32 %v347, %v1465
    %v1467 = vpop.f32.mrb[0].mxu0
    %1468 = vmatprep.mubr.f32.mxu0 0.0
    %1469 = vmatmul.mubr.f32.gmra.mrb[0].mxu0 %v251
    %v1470 = vpop.f32.mrb[0].mxu0
    %v1471 = vadd.f32 %v347, %v1470
    %v1472 = vpop.f32.mrb[0].mxu0
    %1473 = vmatprep.mubr.f32.mxu0 0.0
    %1474 = vmatmul.mubr.f32.gmra.mrb[0].mxu0 %v252
    %v1475 = vpop.f32.mrb[0].mxu0
    %v1476 = vadd.f32 %v347, %v1475
    %v1477 = vpop.f32.mrb[0].mxu0
    %1478 = vmatprep.mubr.f32.mxu0 0.0
    %1479 = vmatmul.mubr.f32.gmra.mrb[0].mxu0 %v253
    %v1480 = vpop.f32.mrb[0].mxu0
    %v1481 = vadd.f32 %v347, %v1480
    %v1482 = vpop.f32.mrb[0].mxu0
    %1483 = vmatprep.mubr.f32.mxu0 0.0
    %1484 = vmatmul.mubr.f32.gmra.mrb[0].mxu0 %v254
    %v1485 = vpop.f32.mrb[0].mxu0
    %v1486 = vadd.f32 %v347, %v1485
    %v1487 = vpop.f32.mrb[0].mxu0
    %1488 = vmatprep.mubr.f32.mxu0 0.0
    %1489 = vmatmul.mubr.f32.gmra.mrb[0].mxu0 %v255
    %v1490 = vpop.f32.mrb[0].mxu0
    %v1491 = vadd.f32 %v347, %v1490
    %v1492 = vpop.f32.mrb[0].mxu0
    %1493 = vmatprep.mubr.f32.mxu0 0.0
    %1494 = vmatmul.mubr.f32.gmra.mrb[0].mxu0 %v256
    %v1495 = vpop.f32.mrb[0].mxu0
    %v1496 = vadd.f32 %v347, %v1495
    %v1497 = vpop.f32.mrb[0].mxu0
    %1498 = vmatprep.mubr.f32.mxu0 0.0
    %1499 = vmatmul.mubr.f32.gmra.mrb[0].mxu0 %v257
    %v1500 = vpop.f32.mrb[0].mxu0
    %v1501 = vadd.f32 %v347, %v1500
    %v1502 = vpop.f32.mrb[0].mxu0
    %1503 = vmatprep.mubr.f32.mxu0 0.0
    %1504 = vmatmul.mubr.f32.gmra.mrb[0].mxu0 %v258
    %v1505 = vpop.f32.mrb[0].mxu0
    %v1506 = vadd.f32 %v347, %v1505
    %v1507 = vpop.f32.mrb[0].mxu0
    %1508 = vmatprep.mubr.f32.mxu0 0.0
    %1509 = vmatmul.mubr.f32.gmra.mrb[0].mxu0 %v259
    %v1510 = vpop.f32.mrb[0].mxu0
    %v1511 = vadd.f32 %v347, %v1510
    %v1512 = vpop.f32.mrb[0].mxu0
    %1513 = vmatprep.mubr.f32.mxu0 0.0
    %1514 = vmatmul.mubr.f32.gmra.mrb[0].mxu0 %v260
    %v1515 = vpop.f32.mrb[0].mxu0
    %v1516 = vadd.f32 %v347, %v1515
    %v1517 = vpop.f32.mrb[0].mxu0
    %1518 = vmatprep.mubr.f32.mxu0 0.0
    %1519 = vmatmul.mubr.f32.gmra.mrb[0].mxu0 %v261
    %v1520 = vpop.f32.mrb[0].mxu0
    %v1521 = vadd.f32 %v347, %v1520
    %v1522 = vpop.f32.mrb[0].mxu0
    %1523 = vmatprep.mubr.f32.mxu0 0.0
    %1524 = vmatmul.mubr.f32.gmra.mrb[0].mxu0 %v262
    %v1525 = vpop.f32.mrb[0].mxu0
    %v1526 = vadd.f32 %v347, %v1525
    %v1527 = vpop.f32.mrb[0].mxu0
    %1528 = vmatprep.mubr.f32.mxu0 0.0
    %1529 = vmatmul.mubr.f32.gmra.mrb[0].mxu0 %v263
    %v1530 = vpop.f32.mrb[0].mxu0
    %v1531 = vadd.f32 %v347, %v1530
    %v1532 = vpop.f32.mrb[0].mxu0
    %1533 = vmatprep.mubr.f32.mxu0 0.0
    %1534 = vmatmul.mubr.f32.gmra.mrb[0].mxu0 %v264
    %v1535 = vpop.f32.mrb[0].mxu0
    %v1536 = vadd.f32 %v347, %v1535
    %v1537 = vpop.f32.mrb[0].mxu0
    %1538 = vmatprep.mubr.f32.mxu0 0.0
    %1539 = vmatmul.mubr.f32.gmra.mrb[0].mxu0 %v265
    %v1540 = vpop.f32.mrb[0].mxu0
    %v1541 = vadd.f32 %v347, %v1540
    %v1542 = vpop.f32.mrb[0].mxu0
    %1543 = vmatprep.mubr.f32.mxu0 0.0
    %1544 = vmatmul.mubr.f32.gmra.mrb[0].mxu0 %v266
    %v1545 = vpop.f32.mrb[0].mxu0
    %v1546 = vadd.f32 %v347, %v1545
    %v1547 = vpop.f32.mrb[0].mxu0
    %1548 = vmatprep.mubr.f32.mxu0 0.0
    %1549 = vmatmul.mubr.f32.gmra.mrb[0].mxu0 %v267
    %v1550 = vpop.f32.mrb[0].mxu0
    %v1551 = vadd.f32 %v347, %v1550
    %v1552 = vpop.f32.mrb[0].mxu0
    %1553 = vmatprep.mubr.f32.mxu0 0.0
    %1554 = vmatmul.mubr.f32.gmra.mrb[0].mxu0 %v268
    %v1555 = vpop.f32.mrb[0].mxu0
    %v1556 = vadd.f32 %v347, %v1555
    %v1557 = vpop.f32.mrb[0].mxu0
    %1558 = vmatprep.mubr.f32.mxu0 0.0
    %1559 = vmatmul.mubr.f32.gmra.mrb[0].mxu0 %v269
    %v1560 = vpop.f32.mrb[0].mxu0
    %v1561 = vadd.f32 %v347, %v1560
    %v1562 = vpop.f32.mrb[0].mxu0
    %1563 = vmatprep.mubr.f32.mxu0 0.0
    %1564 = vmatmul.mubr.f32.gmra.mrb[0].mxu0 %v270
    %v1565 = vpop.f32.mrb[0].mxu0
    %v1566 = vadd.f32 %v347, %v1565
    %v1567 = vpop.f32.mrb[0].mxu0
    %1568 = vmatprep.mubr.f32.mxu0 0.0
    %1569 = vmatmul.mubr.f32.gmra.mrb[0].mxu0 %v271
    %v1570 = vpop.f32.mrb[0].mxu0
    %v1571 = vadd.f32 %v347, %v1570
    %v1572 = vpop.f32.mrb[0].mxu0
    %1573 = vmatprep.mubr.f32.mxu0 0.0
    %1574 = vmatmul.mubr.f32.gmra.mrb[0].mxu0 %v272
    %v1575 = vpop.f32.mrb[0].mxu0
    %v1576 = vadd.f32 %v347, %v1575
    %v1577 = vpop.f32.mrb[0].mxu0
    %1578 = vmatprep.mubr.f32.mxu0 0.0
    %1579 = vmatmul.mubr.f32.gmra.mrb[0].mxu0 %v273
    %v1580 = vpop.f32.mrb[0].mxu0
    %v1581 = vadd.f32 %v347, %v1580
    %v1582 = vpop.f32.mrb[0].mxu0
    %1583 = vmatprep.mubr.f32.mxu0 0.0
    %1584 = vmatmul.mubr.f32.gmra.mrb[0].mxu0 %v274
    %v1585 = vpop.f32.mrb[0].mxu0
    %v1586 = vadd.f32 %v347, %v1585
    %v1587 = vpop.f32.mrb[0].mxu0
    %1588 = vmatprep.mubr.f32.mxu0 0.0
    %1589 = vmatmul.mubr.f32.gmra.mrb[0].mxu0 %v275
    %v1590 = vpop.f32.mrb[0].mxu0
    %v1591 = vadd.f32 %v347, %v1590
    %v1592 = vpop.f32.mrb[0].mxu0
    %1593 = vmatprep.mubr.f32.mxu0 0.0
    %1594 = vmatmul.mubr.f32.gmra.mrb[0].mxu0 %v276
    %v1595 = vpop.f32.mrb[0].mxu0
    %v1596 = vadd.f32 %v347, %v1595
    %v1597 = vpop.f32.mrb[0].mxu0
    %1598 = vmatprep.mubr.f32.mxu0 0.0
    %1599 = vmatmul.mubr.f32.gmra.mrb[0].mxu0 %v277
    %v1600 = vpop.f32.mrb[0].mxu0
    %v1601 = vadd.f32 %v347, %v1600
    %v1602 = vpop.f32.mrb[0].mxu0
    %1603 = vmatprep.mubr.f32.mxu0 0.0
    %1604 = vmatmul.mubr.f32.gmra.mrb[0].mxu0 %v278
    %v1605 = vpop.f32.mrb[0].mxu0
    %v1606 = vadd.f32 %v347, %v1605
    %v1607 = vpop.f32.mrb[0].mxu0
    %1608 = vmatprep.mubr.f32.mxu0 0.0
    %1609 = vmatmul.mubr.f32.gmra.mrb[0].mxu0 %v279
    %v1610 = vpop.f32.mrb[0].mxu0
    %v1611 = vadd.f32 %v347, %v1610
    %v1612 = vpop.f32.mrb[0].mxu0
    %1613 = vmatprep.mubr.f32.mxu0 0.0
    %1614 = vmatmul.mubr.f32.gmra.mrb[0].mxu0 %v280
    %v1615 = vpop.f32.mrb[0].mxu0
    %v1616 = vadd.f32 %v347, %v1615
    %v1617 = vpop.f32.mrb[0].mxu0
    %1618 = vmatprep.mubr.f32.mxu0 0.0
    %1619 = vmatmul.mubr.f32.gmra.mrb[0].mxu0 %v281
    %v1620 = vpop.f32.mrb[0].mxu0
    %v1621 = vadd.f32 %v347, %v1620
    %v1622 = vpop.f32.mrb[0].mxu0
    %1623 = vmatprep.mubr.f32.mxu0 0.0
    %1624 = vmatmul.mubr.f32.gmra.mrb[0].mxu0 %v282
    %v1625 = vpop.f32.mrb[0].mxu0
    %v1626 = vadd.f32 %v347, %v1625
    %v1627 = vpop.f32.mrb[0].mxu0
    %1628 = vmatprep.mubr.f32.mxu0 0.0
    %1629 = vmatmul.mubr.f32.gmra.mrb[0].mxu0 %v283
    %v1630 = vpop.f32.mrb[0].mxu0
    %v1631 = vadd.f32 %v347, %v1630
    %v1632 = vpop.f32.mrb[0].mxu0
    %1633 = vmatprep.mubr.f32.mxu0 0.0
    %1634 = vmatmul.mubr.f32.gmra.mrb[0].mxu0 %v284
    %v1635 = vpop.f32.mrb[0].mxu0
    %v1636 = vadd.f32 %v347, %v1635
    %v1637 = vpop.f32.mrb[0].mxu0
    %1638 = vmatprep.mubr.f32.mxu0 0.0
    %1639 = vmatmul.mubr.f32.gmra.mrb[0].mxu0 %v285
    %v1640 = vpop.f32.mrb[0].mxu0
    %v1641 = vadd.f32 %v347, %v1640
    %v1642 = vpop.f32.mrb[0].mxu0
    %1643 = vmatprep.mubr.f32.mxu0 0.0
    %1644 = vmatmul.mubr.f32.gmra.mrb[0].mxu0 %v286
    %v1645 = vpop.f32.mrb[0].mxu0
    %v1646 = vadd.f32 %v347, %v1645
    %v1647 = vpop.f32.mrb[0].mxu0
    %1648 = vmatprep.mubr.f32.mxu0 0.0
    %1649 = vmatmul.mubr.f32.gmra.mrb[0].mxu0 %v287
    %v1650 = vpop.f32.mrb[0].mxu0
    %v1651 = vadd.f32 %v347, %v1650
    %v1652 = vpop.f32.mrb[0].mxu0
    %1653 = vmatprep.mubr.f32.mxu0 0.0
    %1654 = vmatmul.mubr.f32.gmra.mrb[0].mxu0 %v288
    %v1655 = vpop.f32.mrb[0].mxu0
    %v1656 = vadd.f32 %v347, %v1655
    %v1657 = vpop.f32.mrb[0].mxu0
    %1658 = vmatprep.mubr.f32.mxu0 0.0
    %1659 = vmatmul.mubr.f32.gmra.mrb[0].mxu0 %v289
    %v1660 = vpop.f32.mrb[0].mxu0
    %v1661 = vadd.f32 %v347, %v1660
    %v1662 = vpop.f32.mrb[0].mxu0
    %1663 = vmatprep.mubr.f32.mxu0 0.0
    %1664 = vmatmul.mubr.f32.gmra.mrb[0].mxu0 %v290
    %v1665 = vpop.f32.mrb[0].mxu0
    %v1666 = vadd.f32 %v347, %v1665
    %v1667 = vpop.f32.mrb[0].mxu0
    %1668 = vmatprep.mubr.f32.mxu0 0.0
    %1669 = vmatmul.mubr.f32.gmra.mrb[0].mxu0 %v291
    %v1670 = vpop.f32.mrb[0].mxu0
    %v1671 = vadd.f32 %v347, %v1670
    %v1672 = vpop.f32.mrb[0].mxu0
    %1673 = vmatprep.mubr.f32.mxu0 0.0
    %1674 = vmatmul.mubr.f32.gmra.mrb[0].mxu0 %v292
    %v1675 = vpop.f32.mrb[0].mxu0
    %v1676 = vadd.f32 %v347, %v1675
    %v1677 = vpop.f32.mrb[0].mxu0
    %1678 = vmatprep.mubr.f32.mxu0 0.0
    %1679 = vmatmul.mubr.f32.gmra.mrb[0].mxu0 %v293
    %v1680 = vpop.f32.mrb[0].mxu0
    %v1681 = vadd.f32 %v347, %v1680
    %v1682 = vpop.f32.mrb[0].mxu0
    %1683 = vmatprep.mubr.f32.mxu0 0.0
    %1684 = vmatmul.mubr.f32.gmra.mrb[0].mxu0 %v294
    %v1685 = vpop.f32.mrb[0].mxu0
    %v1686 = vadd.f32 %v347, %v1685
    %v1687 = vpop.f32.mrb[0].mxu0
    %1688 = vmatprep.mubr.f32.mxu0 0.0
    %1689 = vmatmul.mubr.f32.gmra.mrb[0].mxu0 %v295
    %v1690 = vpop.f32.mrb[0].mxu0
    %v1691 = vadd.f32 %v347, %v1690
    %v1692 = vpop.f32.mrb[0].mxu0
    %1693 = vmatprep.mubr.f32.mxu0 0.0
    %1694 = vmatmul.mubr.f32.gmra.mrb[0].mxu0 %v296
    %v1695 = vpop.f32.mrb[0].mxu0
    %v1696 = vadd.f32 %v347, %v1695
    %v1697 = vpop.f32.mrb[0].mxu0
    %1698 = vmatprep.mubr.f32.mxu0 0.0
    %1699 = vmatmul.mubr.f32.gmra.mrb[0].mxu0 %v297
    %v1700 = vpop.f32.mrb[0].mxu0
    %v1701 = vadd.f32 %v347, %v1700
    %v1702 = vpop.f32.mrb[0].mxu0
    %1703 = vmatprep.mubr.f32.mxu0 0.0
    %1704 = vmatmul.mubr.f32.gmra.mrb[0].mxu0 %v298
    %v1705 = vpop.f32.mrb[0].mxu0
    %v1706 = vadd.f32 %v347, %v1705
    %v1707 = vpop.f32.mrb[0].mxu0
    %1708 = vmatprep.mubr.f32.mxu0 0.0
    %1709 = vmatmul.mubr.f32.gmra.mrb[0].mxu0 %v299
    %v1710 = vpop.f32.mrb[0].mxu0
    %v1711 = vadd.f32 %v347, %v1710
    %v1712 = vpop.f32.mrb[0].mxu0
    %1713 = vmatprep.mubr.f32.mxu0 0.0
    %1714 = vmatmul.mubr.f32.gmra.mrb[0].mxu0 %v300
    %v1715 = vpop.f32.mrb[0].mxu0
    %v1716 = vadd.f32 %v347, %v1715
    %v1717 = vpop.f32.mrb[0].mxu0
    %1718 = vmatprep.mubr.f32.mxu0 0.0
    %1719 = vmatmul.mubr.f32.gmra.mrb[0].mxu0 %v301
    %v1720 = vpop.f32.mrb[0].mxu0
    %v1721 = vadd.f32 %v347, %v1720
    %v1722 = vpop.f32.mrb[0].mxu0
    %1723 = vmatprep.mubr.f32.mxu0 0.0
    %1724 = vmatmul.mubr.f32.gmra.mrb[0].mxu0 %v302
    %v1725 = vpop.f32.mrb[0].mxu0
    %v1726 = vadd.f32 %v347, %v1725
    %v1727 = vpop.f32.mrb[0].mxu0
    %1728 = vmatprep.mubr.f32.mxu0 0.0
    %1729 = vmatmul.mubr.f32.gmra.mrb[0].mxu0 %v303
    %v1730 = vpop.f32.mrb[0].mxu0
    %v1731 = vadd.f32 %v347, %v1730
    %v1732 = vpop.f32.mrb[0].mxu0
    %1733 = vmatprep.mubr.f32.mxu0 0.0
    %1734 = vmatmul.mubr.f32.gmra.mrb[0].mxu0 %v304
    %v1735 = vpop.f32.mrb[0].mxu0
    %v1736 = vadd.f32 %v347, %v1735
    %v1737 = vpop.f32.mrb[0].mxu0
    %1738 = vmatprep.mubr.f32.mxu0 0.0
    %1739 = vmatmul.mubr.f32.gmra.mrb[0].mxu0 %v305
    %v1740 = vpop.f32.mrb[0].mxu0
    %v1741 = vadd.f32 %v347, %v1740
    %v1742 = vpop.f32.mrb[0].mxu0
    %1743 = vmatprep.mubr.f32.mxu0 0.0
    %1744 = vmatmul.mubr.f32.gmra.mrb[0].mxu0 %v306
    %v1745 = vpop.f32.mrb[0].mxu0
    %v1746 = vadd.f32 %v347, %v1745
    %v1747 = vpop.f32.mrb[0].mxu0
    %1748 = vmatprep.mubr.f32.mxu0 0.0
    %1749 = vmatmul.mubr.f32.gmra.mrb[0].mxu0 %v307
    %v1750 = vpop.f32.mrb[0].mxu0
    %v1751 = vadd.f32 %v347, %v1750
    %v1752 = vpop.f32.mrb[0].mxu0
    %1753 = vmatprep.mubr.f32.mxu0 0.0
    %1754 = vmatmul.mubr.f32.gmra.mrb[0].mxu0 %v308
    %v1755 = vpop.f32.mrb[0].mxu0
    %v1756 = vadd.f32 %v347, %v1755
    %v1757 = vpop.f32.mrb[0].mxu0
    %1758 = vmatprep.mubr.f32.mxu0 0.0
    %1759 = vmatmul.mubr.f32.gmra.mrb[0].mxu0 %v309
    %v1760 = vpop.f32.mrb[0].mxu0
    %v1761 = vadd.f32 %v347, %v1760
    %v1762 = vpop.f32.mrb[0].mxu0
    %1763 = vmatprep.mubr.f32.mxu0 0.0
    %1764 = vmatmul.mubr.f32.gmra.mrb[0].mxu0 %v310
    %v1765 = vpop.f32.mrb[0].mxu0
    %v1766 = vadd.f32 %v347, %v1765
    %v1767 = vpop.f32.mrb[0].mxu0
    %1768 = vmatprep.mubr.f32.mxu0 0.0
    %1769 = vmatmul.mubr.f32.gmra.mrb[0].mxu0 %v311
    %v1770 = vpop.f32.mrb[0].mxu0
    %v1771 = vadd.f32 %v347, %v1770
    %v1772 = vpop.f32.mrb[0].mxu0
    %1773 = vmatprep.mubr.f32.mxu0 0.0
    %1774 = vmatmul.mubr.f32.gmra.mrb[0].mxu0 %v312
    %v1775 = vpop.f32.mrb[0].mxu0
    %v1776 = vadd.f32 %v347, %v1775
    %v1777 = vpop.f32.mrb[0].mxu0
    %1778 = vmatprep.mubr.f32.mxu0 0.0
    %1779 = vmatmul.mubr.f32.gmra.mrb[0].mxu0 %v313
    %v1780 = vpop.f32.mrb[0].mxu0
    %v1781 = vadd.f32 %v347, %v1780
    %v1782 = vpop.f32.mrb[0].mxu0
    %1783 = vmatprep.mubr.f32.mxu0 0.0
    %1784 = vmatmul.mubr.f32.gmra.mrb[0].mxu0 %v314
    %v1785 = vpop.f32.mrb[0].mxu0
    %v1786 = vadd.f32 %v347, %v1785
    %v1787 = vpop.f32.mrb[0].mxu0
    %1788 = vmatprep.mubr.f32.mxu0 0.0
    %1789 = vmatmul.mubr.f32.gmra.mrb[0].mxu0 %v315
    %v1790 = vpop.f32.mrb[0].mxu0
    %v1791 = vadd.f32 %v347, %v1790
    %v1792 = vpop.f32.mrb[0].mxu0
    %1793 = vmatprep.mubr.f32.mxu0 0.0
    %1794 = vmatmul.mubr.f32.gmra.mrb[0].mxu0 %v316
    %v1795 = vpop.f32.mrb[0].mxu0
    %v1796 = vadd.f32 %v347, %v1795
    %v1797 = vpop.f32.mrb[0].mxu0
    %1798 = vmatprep.mubr.f32.mxu0 0.0
    %1799 = vmatmul.mubr.f32.gmra.mrb[0].mxu0 %v317
    %v1800 = vpop.f32.mrb[0].mxu0
    %v1801 = vadd.f32 %v347, %v1800
    %v1802 = vpop.f32.mrb[0].mxu0
    %1803 = vmatprep.mubr.f32.mxu0 0.0
    %1804 = vmatmul.mubr.f32.gmra.mrb[0].mxu0 %v318
    %v1805 = vpop.f32.mrb[0].mxu0
    %v1806 = vadd.f32 %v347, %v1805
    %v1807 = vpop.f32.mrb[0].mxu0
    %1808 = vmatprep.mubr.f32.mxu0 0.0
    %1809 = vmatmul.mubr.f32.gmra.mrb[0].mxu0 %v319
    %v1810 = vpop.f32.mrb[0].mxu0
    %v1811 = vadd.f32 %v347, %v1810
    %v1812 = vpop.f32.mrb[0].mxu0
    %1813 = vmatprep.mubr.f32.mxu0 0.0
    %1814 = vmatmul.mubr.f32.gmra.mrb[0].mxu0 %v320
    %v1815 = vpop.f32.mrb[0].mxu0
    %v1816 = vadd.f32 %v347, %v1815
    %v1817 = vpop.f32.mrb[0].mxu0
    %1818 = vmatprep.mubr.f32.mxu0 0.0
    %1819 = vmatmul.mubr.f32.gmra.mrb[0].mxu0 %v321
    %v1820 = vpop.f32.mrb[0].mxu0
    %v1821 = vadd.f32 %v347, %v1820
    %v1822 = vpop.f32.mrb[0].mxu0
    %1823 = vmatprep.mubr.f32.mxu0 0.0
    %1824 = vmatmul.mubr.f32.gmra.mrb[0].mxu0 %v322
    %v1825 = vpop.f32.mrb[0].mxu0
    %v1826 = vadd.f32 %v347, %v1825
    %v1827 = vpop.f32.mrb[0].mxu0
    %1828 = vmatprep.mubr.f32.mxu0 0.0
    %1829 = vmatmul.mubr.f32.gmra.mrb[0].mxu0 %v323
    %v1830 = vpop.f32.mrb[0].mxu0
    %v1831 = vadd.f32 %v347, %v1830
    %v1832 = vpop.f32.mrb[0].mxu0
    %1833 = vmatprep.mubr.f32.mxu0 0.0
    %1834 = vmatmul.mubr.f32.gmra.mrb[0].mxu0 %v324
    %v1835 = vpop.f32.mrb[0].mxu0
    %v1836 = vadd.f32 %v347, %v1835
    %v1837 = vpop.f32.mrb[0].mxu0
    %1838 = vmatprep.mubr.f32.mxu0 0.0
    %1839 = vmatmul.mubr.f32.gmra.mrb[0].mxu0 %v325
    %v1840 = vpop.f32.mrb[0].mxu0
    %v1841 = vadd.f32 %v347, %v1840
    %v1842 = vpop.f32.mrb[0].mxu0
    %1843 = vdwg.mxu0
    %v1844 = vxor.u32 %v416, 2147483648
    %v1845 = vxor.u32 %v421, 2147483648
    %v1846 = vxor.u32 %v426, 2147483648
    %v1847 = vxor.u32 %v431, 2147483648
    %v1848 = vxor.u32 %v436, 2147483648
    %v1849 = vxor.u32 %v441, 2147483648
    %v1850 = vxor.u32 %v446, 2147483648
    %v1851 = vxor.u32 %v451, 2147483648
    %v1852 = vxor.u32 %v456, 2147483648
    %v1853 = vxor.u32 %v461, 2147483648
    %v1854 = vxor.u32 %v466, 2147483648
    %v1855 = vxor.u32 %v471, 2147483648
    %v1856 = vxor.u32 %v476, 2147483648
    %v1857 = vxor.u32 %v481, 2147483648
    %v1858 = vxor.u32 %v486, 2147483648
    %v1859 = vxor.u32 %v491, 2147483648
    %v1860 = vxor.u32 %v496, 2147483648
    %v1861 = vxor.u32 %v501, 2147483648
    %v1862 = vxor.u32 %v506, 2147483648
    %v1863 = vxor.u32 %v511, 2147483648
    %v1864 = vxor.u32 %v516, 2147483648
    %v1865 = vxor.u32 %v521, 2147483648
    %v1866 = vxor.u32 %v526, 2147483648
    %v1867 = vxor.u32 %v531, 2147483648
    %v1868 = vxor.u32 %v536, 2147483648
    %v1869 = vxor.u32 %v541, 2147483648
    %v1870 = vxor.u32 %v546, 2147483648
    %v1871 = vxor.u32 %v551, 2147483648
    %v1872 = vxor.u32 %v556, 2147483648
    %v1873 = vxor.u32 %v561, 2147483648
    %v1874 = vxor.u32 %v566, 2147483648
    %v1875 = vxor.u32 %v571, 2147483648
    %v1876 = vxor.u32 %v576, 2147483648
    %v1877 = vxor.u32 %v581, 2147483648
    %v1878 = vxor.u32 %v586, 2147483648
    %v1879 = vxor.u32 %v591, 2147483648
    %v1880 = vxor.u32 %v596, 2147483648
    %v1881 = vxor.u32 %v601, 2147483648
    %v1882 = vxor.u32 %v606, 2147483648
    %v1883 = vxor.u32 %v611, 2147483648
    %v1884 = vxor.u32 %v616, 2147483648
    %v1885 = vxor.u32 %v621, 2147483648
    %v1886 = vxor.u32 %v626, 2147483648
    %v1887 = vxor.u32 %v631, 2147483648
    %v1888 = vxor.u32 %v636, 2147483648
    %v1889 = vxor.u32 %v641, 2147483648
    %v1890 = vxor.u32 %v646, 2147483648
    %v1891 = vxor.u32 %v651, 2147483648
    %v1892 = vxor.u32 %v656, 2147483648
    %v1893 = vxor.u32 %v661, 2147483648
    %v1894 = vxor.u32 %v666, 2147483648
    %v1895 = vxor.u32 %v671, 2147483648
    %v1896 = vxor.u32 %v676, 2147483648
    %v1897 = vxor.u32 %v681, 2147483648
    %v1898 = vxor.u32 %v686, 2147483648
    %v1899 = vxor.u32 %v691, 2147483648
    %v1900 = vxor.u32 %v696, 2147483648
    %v1901 = vxor.u32 %v701, 2147483648
    %v1902 = vxor.u32 %v706, 2147483648
    %v1903 = vxor.u32 %v711, 2147483648
    %v1904 = vxor.u32 %v716, 2147483648
    %v1905 = vxor.u32 %v721, 2147483648
    %v1906 = vxor.u32 %v726, 2147483648
    %v1907 = vxor.u32 %v731, 2147483648
    %v1908 = vxor.u32 %v736, 2147483648
    %v1909 = vxor.u32 %v741, 2147483648
    %v1910 = vxor.u32 %v746, 2147483648
    %v1911 = vxor.u32 %v751, 2147483648
    %v1912 = vxor.u32 %v756, 2147483648
    %v1913 = vxor.u32 %v761, 2147483648
    %v1914 = vxor.u32 %v766, 2147483648
    %v1915 = vxor.u32 %v771, 2147483648
    %v1916 = vxor.u32 %v776, 2147483648
    %v1917 = vxor.u32 %v781, 2147483648
    %v1918 = vxor.u32 %v786, 2147483648
    %v1919 = vxor.u32 %v791, 2147483648
    %v1920 = vxor.u32 %v796, 2147483648
    %v1921 = vxor.u32 %v801, 2147483648
    %v1922 = vxor.u32 %v806, 2147483648
    %v1923 = vxor.u32 %v811, 2147483648
    %v1924 = vxor.u32 %v816, 2147483648
    %v1925 = vxor.u32 %v821, 2147483648
    %v1926 = vxor.u32 %v826, 2147483648
    %v1927 = vxor.u32 %v831, 2147483648
    %v1928 = vxor.u32 %v836, 2147483648
    %v1929 = vxor.u32 %v841, 2147483648
    %v1930 = vxor.u32 %v846, 2147483648
    %v1931 = vxor.u32 %v851, 2147483648
    %v1932 = vxor.u32 %v856, 2147483648
    %v1933 = vxor.u32 %v861, 2147483648
    %v1934 = vxor.u32 %v866, 2147483648
    %v1935 = vxor.u32 %v871, 2147483648
    %v1936 = vxor.u32 %v876, 2147483648
    %v1937 = vxor.u32 %v881, 2147483648
    %v1938 = vxor.u32 %v886, 2147483648
    %v1939 = vxor.u32 %v891, 2147483648
    %v1940 = vxor.u32 %v896, 2147483648
    %v1941 = vxor.u32 %v901, 2147483648
    %v1942 = vxor.u32 %v906, 2147483648
    %v1943 = vxor.u32 %v911, 2147483648
    %v1944 = vxor.u32 %v916, 2147483648
    %v1945 = vxor.u32 %v921, 2147483648
    %v1946 = vxor.u32 %v926, 2147483648
    %v1947 = vxor.u32 %v931, 2147483648
    %v1948 = vxor.u32 %v936, 2147483648
    %v1949 = vxor.u32 %v941, 2147483648
    %v1950 = vxor.u32 %v946, 2147483648
    %v1951 = vxor.u32 %v951, 2147483648
    %v1952 = vxor.u32 %v956, 2147483648
    %v1953 = vxor.u32 %v961, 2147483648
    %v1954 = vxor.u32 %v966, 2147483648
    %v1955 = vxor.u32 %v971, 2147483648
    %v1956 = vxor.u32 %v976, 2147483648
    %v1957 = vxor.u32 %v981, 2147483648
    %v1958 = vxor.u32 %v986, 2147483648
    %v1959 = vxor.u32 %v991, 2147483648
    %v1960 = vxor.u32 %v996, 2147483648
    %v1961 = vxor.u32 %v1001, 2147483648
    %v1962 = vxor.u32 %v1006, 2147483648
    %v1963 = vxor.u32 %v1011, 2147483648
    %v1964 = vxor.u32 %v1016, 2147483648
    %v1965 = vxor.u32 %v1021, 2147483648
    %v1966 = vxor.u32 %v1026, 2147483648
    %v1967 = vxor.u32 %v1031, 2147483648
    %v1968 = vxor.u32 %v1036, 2147483648
    %v1969 = vxor.u32 %v1041, 2147483648
    %v1970 = vxor.u32 %v1046, 2147483648
    %v1971 = vxor.u32 %v1051, 2147483648
    %v1972 = vxor.u32 %v1056, 2147483648
    %v1973 = vxor.u32 %v1061, 2147483648
    %v1974 = vxor.u32 %v1066, 2147483648
    %v1975 = vxor.u32 %v1071, 2147483648
    %v1976 = vxor.u32 %v1076, 2147483648
    %v1977 = vxor.u32 %v1081, 2147483648
    %v1978 = vxor.u32 %v1086, 2147483648
    %v1979 = vxor.u32 %v1091, 2147483648
    %v1980 = vxor.u32 %v1096, 2147483648
    %v1981 = vxor.u32 %v1101, 2147483648
    %v1982 = vxor.u32 %v1106, 2147483648
    %v1983 = vxor.u32 %v1111, 2147483648
    %v1984 = vxor.u32 %v1116, 2147483648
    %v1985 = vxor.u32 %v1121, 2147483648
    %v1986 = vxor.u32 %v1126, 2147483648
    %v1987 = vxor.u32 %v1131, 2147483648
    %v1988 = vxor.u32 %v1136, 2147483648
    %v1989 = vxor.u32 %v1141, 2147483648
    %v1990 = vxor.u32 %v1146, 2147483648
    %v1991 = vxor.u32 %v1151, 2147483648
    %v1992 = vxor.u32 %v1156, 2147483648
    %v1993 = vxor.u32 %v1161, 2147483648
    %v1994 = vxor.u32 %v1166, 2147483648
    %v1995 = vxor.u32 %v1171, 2147483648
    %v1996 = vxor.u32 %v1176, 2147483648
    %v1997 = vxor.u32 %v1181, 2147483648
    %v1998 = vxor.u32 %v1186, 2147483648
    %v1999 = vxor.u32 %v1191, 2147483648
    %v2000 = vxor.u32 %v1196, 2147483648
    %v2001 = vxor.u32 %v1201, 2147483648
    %v2002 = vxor.u32 %v1206, 2147483648
    %v2003 = vxor.u32 %v1211, 2147483648
    %v2004 = vxor.u32 %v1216, 2147483648
    %v2005 = vxor.u32 %v1221, 2147483648
    %v2006 = vxor.u32 %v1226, 2147483648
    %v2007 = vxor.u32 %v1231, 2147483648
    %v2008 = vxor.u32 %v1236, 2147483648
    %v2009 = vxor.u32 %v1241, 2147483648
    %v2010 = vxor.u32 %v1246, 2147483648
    %v2011 = vxor.u32 %v1251, 2147483648
    %v2012 = vxor.u32 %v1256, 2147483648
    %v2013 = vxor.u32 %v1261, 2147483648
    %v2014 = vxor.u32 %v1266, 2147483648
    %v2015 = vxor.u32 %v1271, 2147483648
    %v2016 = vxor.u32 %v1276, 2147483648
    %v2017 = vxor.u32 %v1281, 2147483648
    %v2018 = vxor.u32 %v1286, 2147483648
    %v2019 = vxor.u32 %v1291, 2147483648
    %v2020 = vxor.u32 %v1296, 2147483648
    %v2021 = vxor.u32 %v1301, 2147483648
    %v2022 = vxor.u32 %v1306, 2147483648
    %v2023 = vxor.u32 %v1311, 2147483648
    %v2024 = vxor.u32 %v1316, 2147483648
    %v2025 = vxor.u32 %v1321, 2147483648
    %v2026 = vxor.u32 %v1326, 2147483648
    %v2027 = vxor.u32 %v1331, 2147483648
    %v2028 = vxor.u32 %v1336, 2147483648
    %v2029 = vxor.u32 %v1341, 2147483648
    %v2030 = vxor.u32 %v1346, 2147483648
    %v2031 = vxor.u32 %v1351, 2147483648
    %v2032 = vxor.u32 %v1356, 2147483648
    %v2033 = vxor.u32 %v1361, 2147483648
    %v2034 = vxor.u32 %v1366, 2147483648
    %v2035 = vxor.u32 %v1371, 2147483648
    %v2036 = vxor.u32 %v1376, 2147483648
    %v2037 = vxor.u32 %v1381, 2147483648
    %v2038 = vxor.u32 %v1386, 2147483648
    %v2039 = vxor.u32 %v1391, 2147483648
    %v2040 = vxor.u32 %v1396, 2147483648
    %v2041 = vxor.u32 %v1401, 2147483648
    %v2042 = vxor.u32 %v1406, 2147483648
    %v2043 = vxor.u32 %v1411, 2147483648
    %v2044 = vxor.u32 %v1416, 2147483648
    %v2045 = vxor.u32 %v1421, 2147483648
    %v2046 = vxor.u32 %v1426, 2147483648
    %v2047 = vxor.u32 %v1431, 2147483648
    %v2048 = vxor.u32 %v1436, 2147483648
    %v2049 = vxor.u32 %v1441, 2147483648
    %v2050 = vxor.u32 %v1446, 2147483648
    %v2051 = vxor.u32 %v1451, 2147483648
    %v2052 = vxor.u32 %v1456, 2147483648
    %v2053 = vxor.u32 %v1461, 2147483648
    %v2054 = vxor.u32 %v1466, 2147483648
    %v2055 = vxor.u32 %v1471, 2147483648
    %v2056 = vxor.u32 %v1476, 2147483648
    %v2057 = vxor.u32 %v1481, 2147483648
    %v2058 = vxor.u32 %v1486, 2147483648
    %v2059 = vxor.u32 %v1491, 2147483648
    %v2060 = vxor.u32 %v1496, 2147483648
    %v2061 = vxor.u32 %v1501, 2147483648
    %v2062 = vxor.u32 %v1506, 2147483648
    %v2063 = vxor.u32 %v1511, 2147483648
    %v2064 = vxor.u32 %v1516, 2147483648
    %v2065 = vxor.u32 %v1521, 2147483648
    %v2066 = vxor.u32 %v1526, 2147483648
    %v2067 = vxor.u32 %v1531, 2147483648
    %v2068 = vxor.u32 %v1536, 2147483648
    %v2069 = vxor.u32 %v1541, 2147483648
    %v2070 = vxor.u32 %v1546, 2147483648
    %v2071 = vxor.u32 %v1551, 2147483648
    %v2072 = vxor.u32 %v1556, 2147483648
    %v2073 = vxor.u32 %v1561, 2147483648
    %v2074 = vxor.u32 %v1566, 2147483648
    %v2075 = vxor.u32 %v1571, 2147483648
    %v2076 = vxor.u32 %v1576, 2147483648
    %v2077 = vxor.u32 %v1581, 2147483648
    %v2078 = vxor.u32 %v1586, 2147483648
    %v2079 = vxor.u32 %v1591, 2147483648
    %v2080 = vxor.u32 %v1596, 2147483648
    %v2081 = vxor.u32 %v1601, 2147483648
    %v2082 = vxor.u32 %v1606, 2147483648
    %v2083 = vxor.u32 %v1611, 2147483648
    %v2084 = vxor.u32 %v1616, 2147483648
    %v2085 = vxor.u32 %v1621, 2147483648
    %v2086 = vxor.u32 %v1626, 2147483648
    %v2087 = vxor.u32 %v1631, 2147483648
    %v2088 = vxor.u32 %v1636, 2147483648
    %v2089 = vxor.u32 %v1641, 2147483648
    %v2090 = vxor.u32 %v1646, 2147483648
    %v2091 = vxor.u32 %v1651, 2147483648
    %v2092 = vxor.u32 %v1656, 2147483648
    %v2093 = vxor.u32 %v1661, 2147483648
    %v2094 = vxor.u32 %v1666, 2147483648
    %v2095 = vxor.u32 %v1671, 2147483648
    %v2096 = vxor.u32 %v1676, 2147483648
    %v2097 = vxor.u32 %v1681, 2147483648
    %v2098 = vxor.u32 %v1686, 2147483648
    %v2099 = vxor.u32 %v1691, 2147483648
    %v2100 = vxor.u32 %v1696, 2147483648
    %v2101 = vxor.u32 %v1701, 2147483648
    %v2102 = vxor.u32 %v1706, 2147483648
    %v2103 = vxor.u32 %v1711, 2147483648
    %v2104 = vxor.u32 %v1716, 2147483648
    %v2105 = vxor.u32 %v1721, 2147483648
    %v2106 = vxor.u32 %v1726, 2147483648
    %v2107 = vxor.u32 %v1731, 2147483648
    %v2108 = vxor.u32 %v1736, 2147483648
    %v2109 = vxor.u32 %v1741, 2147483648
    %v2110 = vxor.u32 %v1746, 2147483648
    %v2111 = vxor.u32 %v1751, 2147483648
    %v2112 = vxor.u32 %v1756, 2147483648
    %v2113 = vxor.u32 %v1761, 2147483648
    %v2114 = vxor.u32 %v1766, 2147483648
    %v2115 = vxor.u32 %v1771, 2147483648
    %v2116 = vxor.u32 %v1776, 2147483648
    %v2117 = vxor.u32 %v1781, 2147483648
    %v2118 = vxor.u32 %v1786, 2147483648
    %v2119 = vxor.u32 %v1791, 2147483648
    %v2120 = vxor.u32 %v1796, 2147483648
    %v2121 = vxor.u32 %v1801, 2147483648
    %v2122 = vxor.u32 %v1806, 2147483648
    %v2123 = vxor.u32 %v1811, 2147483648
    %v2124 = vxor.u32 %v1816, 2147483648
    %v2125 = vxor.u32 %v1821, 2147483648
    %v2126 = vxor.u32 %v1826, 2147483648
    %v2127 = vxor.u32 %v1831, 2147483648
    %v2128 = vxor.u32 %v1836, 2147483648
    %v2129 = vxor.u32 %v1841, 2147483648
    %v2130 = vmul.f32 %v1844, 1.442695
    %v2131 = vpow.pop %v2130
    %v2132 = vmul.f32 %v1845, 1.442695
    %v2133 = vpow.pop %v2132
    %v2134 = vmul.f32 %v1846, 1.442695
    %v2135 = vpow.pop %v2134
    %v2136 = vmul.f32 %v1847, 1.442695
    %v2137 = vpow.pop %v2136
    %v2138 = vmul.f32 %v1848, 1.442695
    %v2139 = vpow.pop %v2138
    %v2140 = vmul.f32 %v1849, 1.442695
    %v2141 = vpow.pop %v2140
    %v2142 = vmul.f32 %v1850, 1.442695
    %v2143 = vpow.pop %v2142
    %v2144 = vmul.f32 %v1851, 1.442695
    %v2145 = vpow.pop %v2144
    %v2146 = vmul.f32 %v1852, 1.442695
    %v2147 = vpow.pop %v2146
    %v2148 = vmul.f32 %v1853, 1.442695
    %v2149 = vpow.pop %v2148
    %v2150 = vmul.f32 %v1854, 1.442695
    %v2151 = vpow.pop %v2150
    %v2152 = vmul.f32 %v1855, 1.442695
    %v2153 = vpow.pop %v2152
    %v2154 = vmul.f32 %v1856, 1.442695
    %v2155 = vpow.pop %v2154
    %v2156 = vmul.f32 %v1857, 1.442695
    %v2157 = vpow.pop %v2156
    %v2158 = vmul.f32 %v1858, 1.442695
    %v2159 = vpow.pop %v2158
    %v2160 = vmul.f32 %v1859, 1.442695
    %v2161 = vpow.pop %v2160
    %v2162 = vmul.f32 %v1860, 1.442695
    %v2163 = vpow.pop %v2162
    %v2164 = vmul.f32 %v1861, 1.442695
    %v2165 = vpow.pop %v2164
    %v2166 = vmul.f32 %v1862, 1.442695
    %v2167 = vpow.pop %v2166
    %v2168 = vmul.f32 %v1863, 1.442695
    %v2169 = vpow.pop %v2168
    %v2170 = vmul.f32 %v1864, 1.442695
    %v2171 = vpow.pop %v2170
    %v2172 = vmul.f32 %v1865, 1.442695
    %v2173 = vpow.pop %v2172
    %v2174 = vmul.f32 %v1866, 1.442695
    %v2175 = vpow.pop %v2174
    %v2176 = vmul.f32 %v1867, 1.442695
    %v2177 = vpow.pop %v2176
    %v2178 = vmul.f32 %v1868, 1.442695
    %v2179 = vpow.pop %v2178
    %v2180 = vmul.f32 %v1869, 1.442695
    %v2181 = vpow.pop %v2180
    %v2182 = vmul.f32 %v1870, 1.442695
    %v2183 = vpow.pop %v2182
    %v2184 = vmul.f32 %v1871, 1.442695
    %v2185 = vpow.pop %v2184
    %v2186 = vmul.f32 %v1872, 1.442695
    %v2187 = vpow.pop %v2186
    %v2188 = vmul.f32 %v1873, 1.442695
    %v2189 = vpow.pop %v2188
    %v2190 = vmul.f32 %v1874, 1.442695
    %v2191 = vpow.pop %v2190
    %v2192 = vmul.f32 %v1875, 1.442695
    %v2193 = vpow.pop %v2192
    %v2194 = vmul.f32 %v1876, 1.442695
    %v2195 = vpow.pop %v2194
    %v2196 = vmul.f32 %v1877, 1.442695
    %v2197 = vpow.pop %v2196
    %v2198 = vmul.f32 %v1878, 1.442695
    %v2199 = vpow.pop %v2198
    %v2200 = vmul.f32 %v1879, 1.442695
    %v2201 = vpow.pop %v2200
    %v2202 = vmul.f32 %v1880, 1.442695
    %v2203 = vpow.pop %v2202
    %v2204 = vmul.f32 %v1881, 1.442695
    %v2205 = vpow.pop %v2204
    %v2206 = vmul.f32 %v1882, 1.442695
    %v2207 = vpow.pop %v2206
    %v2208 = vmul.f32 %v1883, 1.442695
    %v2209 = vpow.pop %v2208
    %v2210 = vmul.f32 %v1884, 1.442695
    %v2211 = vpow.pop %v2210
    %v2212 = vmul.f32 %v1885, 1.442695
    %v2213 = vpow.pop %v2212
    %v2214 = vmul.f32 %v1886, 1.442695
    %v2215 = vpow.pop %v2214
    %v2216 = vmul.f32 %v1887, 1.442695
    %v2217 = vpow.pop %v2216
    %v2218 = vmul.f32 %v1888, 1.442695
    %v2219 = vpow.pop %v2218
    %v2220 = vmul.f32 %v1889, 1.442695
    %v2221 = vpow.pop %v2220
    %v2222 = vmul.f32 %v1890, 1.442695
    %v2223 = vpow.pop %v2222
    %v2224 = vmul.f32 %v1891, 1.442695
    %v2225 = vpow.pop %v2224
    %v2226 = vmul.f32 %v1892, 1.442695
    %v2227 = vpow.pop %v2226
    %v2228 = vmul.f32 %v1893, 1.442695
    %v2229 = vpow.pop %v2228
    %v2230 = vmul.f32 %v1894, 1.442695
    %v2231 = vpow.pop %v2230
    %v2232 = vmul.f32 %v1895, 1.442695
    %v2233 = vpow.pop %v2232
    %v2234 = vmul.f32 %v1896, 1.442695
    %v2235 = vpow.pop %v2234
    %v2236 = vmul.f32 %v1897, 1.442695
    %v2237 = vpow.pop %v2236
    %v2238 = vmul.f32 %v1898, 1.442695
    %v2239 = vpow.pop %v2238
    %v2240 = vmul.f32 %v1899, 1.442695
    %v2241 = vpow.pop %v2240
    %v2242 = vmul.f32 %v1900, 1.442695
    %v2243 = vpow.pop %v2242
    %v2244 = vmul.f32 %v1901, 1.442695
    %v2245 = vpow.pop %v2244
    %v2246 = vmul.f32 %v1902, 1.442695
    %v2247 = vpow.pop %v2246
    %v2248 = vmul.f32 %v1903, 1.442695
    %v2249 = vpow.pop %v2248
    %v2250 = vmul.f32 %v1904, 1.442695
    %v2251 = vpow.pop %v2250
    %v2252 = vmul.f32 %v1905, 1.442695
    %v2253 = vpow.pop %v2252
    %v2254 = vmul.f32 %v1906, 1.442695
    %v2255 = vpow.pop %v2254
    %v2256 = vmul.f32 %v1907, 1.442695
    %v2257 = vpow.pop %v2256
    %v2258 = vmul.f32 %v1908, 1.442695
    %v2259 = vpow.pop %v2258
    %v2260 = vmul.f32 %v1909, 1.442695
    %v2261 = vpow.pop %v2260
    %v2262 = vmul.f32 %v1910, 1.442695
    %v2263 = vpow.pop %v2262
    %v2264 = vmul.f32 %v1911, 1.442695
    %v2265 = vpow.pop %v2264
    %v2266 = vmul.f32 %v1912, 1.442695
    %v2267 = vpow.pop %v2266
    %v2268 = vmul.f32 %v1913, 1.442695
    %v2269 = vpow.pop %v2268
    %v2270 = vmul.f32 %v1914, 1.442695
    %v2271 = vpow.pop %v2270
    %v2272 = vmul.f32 %v1915, 1.442695
    %v2273 = vpow.pop %v2272
    %v2274 = vmul.f32 %v1916, 1.442695
    %v2275 = vpow.pop %v2274
    %v2276 = vmul.f32 %v1917, 1.442695
    %v2277 = vpow.pop %v2276
    %v2278 = vmul.f32 %v1918, 1.442695
    %v2279 = vpow.pop %v2278
    %v2280 = vmul.f32 %v1919, 1.442695
    %v2281 = vpow.pop %v2280
    %v2282 = vmul.f32 %v1920, 1.442695
    %v2283 = vpow.pop %v2282
    %v2284 = vmul.f32 %v1921, 1.442695
    %v2285 = vpow.pop %v2284
    %v2286 = vmul.f32 %v1922, 1.442695
    %v2287 = vpow.pop %v2286
    %v2288 = vmul.f32 %v1923, 1.442695
    %v2289 = vpow.pop %v2288
    %v2290 = vmul.f32 %v1924, 1.442695
    %v2291 = vpow.pop %v2290
    %v2292 = vmul.f32 %v1925, 1.442695
    %v2293 = vpow.pop %v2292
    %v2294 = vmul.f32 %v1926, 1.442695
    %v2295 = vpow.pop %v2294
    %v2296 = vmul.f32 %v1927, 1.442695
    %v2297 = vpow.pop %v2296
    %v2298 = vmul.f32 %v1928, 1.442695
    %v2299 = vpow.pop %v2298
    %v2300 = vmul.f32 %v1929, 1.442695
    %v2301 = vpow.pop %v2300
    %v2302 = vmul.f32 %v1930, 1.442695
    %v2303 = vpow.pop %v2302
    %v2304 = vmul.f32 %v1931, 1.442695
    %v2305 = vpow.pop %v2304
    %v2306 = vmul.f32 %v1932, 1.442695
    %v2307 = vpow.pop %v2306
    %v2308 = vmul.f32 %v1933, 1.442695
    %v2309 = vpow.pop %v2308
    %v2310 = vmul.f32 %v1934, 1.442695
    %v2311 = vpow.pop %v2310
    %v2312 = vmul.f32 %v1935, 1.442695
    %v2313 = vpow.pop %v2312
    %v2314 = vmul.f32 %v1936, 1.442695
    %v2315 = vpow.pop %v2314
    %v2316 = vmul.f32 %v1937, 1.442695
    %v2317 = vpow.pop %v2316
    %v2318 = vmul.f32 %v1938, 1.442695
    %v2319 = vpow.pop %v2318
    %v2320 = vmul.f32 %v1939, 1.442695
    %v2321 = vpow.pop %v2320
    %v2322 = vmul.f32 %v1940, 1.442695
    %v2323 = vpow.pop %v2322
    %v2324 = vmul.f32 %v1941, 1.442695
    %v2325 = vpow.pop %v2324
    %v2326 = vmul.f32 %v1942, 1.442695
    %v2327 = vpow.pop %v2326
    %v2328 = vmul.f32 %v1943, 1.442695
    %v2329 = vpow.pop %v2328
    %v2330 = vmul.f32 %v1944, 1.442695
    %v2331 = vpow.pop %v2330
    %v2332 = vmul.f32 %v1945, 1.442695
    %v2333 = vpow.pop %v2332
    %v2334 = vmul.f32 %v1946, 1.442695
    %v2335 = vpow.pop %v2334
    %v2336 = vmul.f32 %v1947, 1.442695
    %v2337 = vpow.pop %v2336
    %v2338 = vmul.f32 %v1948, 1.442695
    %v2339 = vpow.pop %v2338
    %v2340 = vmul.f32 %v1949, 1.442695
    %v2341 = vpow.pop %v2340
    %v2342 = vmul.f32 %v1950, 1.442695
    %v2343 = vpow.pop %v2342
    %v2344 = vmul.f32 %v1951, 1.442695
    %v2345 = vpow.pop %v2344
    %v2346 = vmul.f32 %v1952, 1.442695
    %v2347 = vpow.pop %v2346
    %v2348 = vmul.f32 %v1953, 1.442695
    %v2349 = vpow.pop %v2348
    %v2350 = vmul.f32 %v1954, 1.442695
    %v2351 = vpow.pop %v2350
    %v2352 = vmul.f32 %v1955, 1.442695
    %v2353 = vpow.pop %v2352
    %v2354 = vmul.f32 %v1956, 1.442695
    %v2355 = vpow.pop %v2354
    %v2356 = vmul.f32 %v1957, 1.442695
    %v2357 = vpow.pop %v2356
    %v2358 = vmul.f32 %v1958, 1.442695
    %v2359 = vpow.pop %v2358
    %v2360 = vmul.f32 %v1959, 1.442695
    %v2361 = vpow.pop %v2360
    %v2362 = vmul.f32 %v1960, 1.442695
    %v2363 = vpow.pop %v2362
    %v2364 = vmul.f32 %v1961, 1.442695
    %v2365 = vpow.pop %v2364
    %v2366 = vmul.f32 %v1962, 1.442695
    %v2367 = vpow.pop %v2366
    %v2368 = vmul.f32 %v1963, 1.442695
    %v2369 = vpow.pop %v2368
    %v2370 = vmul.f32 %v1964, 1.442695
    %v2371 = vpow.pop %v2370
    %v2372 = vmul.f32 %v1965, 1.442695
    %v2373 = vpow.pop %v2372
    %v2374 = vmul.f32 %v1966, 1.442695
    %v2375 = vpow.pop %v2374
    %v2376 = vmul.f32 %v1967, 1.442695
    %v2377 = vpow.pop %v2376
    %v2378 = vmul.f32 %v1968, 1.442695
    %v2379 = vpow.pop %v2378
    %v2380 = vmul.f32 %v1969, 1.442695
    %v2381 = vpow.pop %v2380
    %v2382 = vmul.f32 %v1970, 1.442695
    %v2383 = vpow.pop %v2382
    %v2384 = vmul.f32 %v1971, 1.442695
    %v2385 = vpow.pop %v2384
    %v2386 = vmul.f32 %v1972, 1.442695
    %v2387 = vpow.pop %v2386
    %v2388 = vmul.f32 %v1973, 1.442695
    %v2389 = vpow.pop %v2388
    %v2390 = vmul.f32 %v1974, 1.442695
    %v2391 = vpow.pop %v2390
    %v2392 = vmul.f32 %v1975, 1.442695
    %v2393 = vpow.pop %v2392
    %v2394 = vmul.f32 %v1976, 1.442695
    %v2395 = vpow.pop %v2394
    %v2396 = vmul.f32 %v1977, 1.442695
    %v2397 = vpow.pop %v2396
    %v2398 = vmul.f32 %v1978, 1.442695
    %v2399 = vpow.pop %v2398
    %v2400 = vmul.f32 %v1979, 1.442695
    %v2401 = vpow.pop %v2400
    %v2402 = vmul.f32 %v1980, 1.442695
    %v2403 = vpow.pop %v2402
    %v2404 = vmul.f32 %v1981, 1.442695
    %v2405 = vpow.pop %v2404
    %v2406 = vmul.f32 %v1982, 1.442695
    %v2407 = vpow.pop %v2406
    %v2408 = vmul.f32 %v1983, 1.442695
    %v2409 = vpow.pop %v2408
    %v2410 = vmul.f32 %v1984, 1.442695
    %v2411 = vpow.pop %v2410
    %v2412 = vmul.f32 %v1985, 1.442695
    %v2413 = vpow.pop %v2412
    %v2414 = vmul.f32 %v1986, 1.442695
    %v2415 = vpow.pop %v2414
    %v2416 = vmul.f32 %v1987, 1.442695
    %v2417 = vpow.pop %v2416
    %v2418 = vmul.f32 %v1988, 1.442695
    %v2419 = vpow.pop %v2418
    %v2420 = vmul.f32 %v1989, 1.442695
    %v2421 = vpow.pop %v2420
    %v2422 = vmul.f32 %v1990, 1.442695
    %v2423 = vpow.pop %v2422
    %v2424 = vmul.f32 %v1991, 1.442695
    %v2425 = vpow.pop %v2424
    %v2426 = vmul.f32 %v1992, 1.442695
    %v2427 = vpow.pop %v2426
    %v2428 = vmul.f32 %v1993, 1.442695
    %v2429 = vpow.pop %v2428
    %v2430 = vmul.f32 %v1994, 1.442695
    %v2431 = vpow.pop %v2430
    %v2432 = vmul.f32 %v1995, 1.442695
    %v2433 = vpow.pop %v2432
    %v2434 = vmul.f32 %v1996, 1.442695
    %v2435 = vpow.pop %v2434
    %v2436 = vmul.f32 %v1997, 1.442695
    %v2437 = vpow.pop %v2436
    %v2438 = vmul.f32 %v1998, 1.442695
    %v2439 = vpow.pop %v2438
    %v2440 = vmul.f32 %v1999, 1.442695
    %v2441 = vpow.pop %v2440
    %v2442 = vmul.f32 %v2000, 1.442695
    %v2443 = vpow.pop %v2442
    %v2444 = vmul.f32 %v2001, 1.442695
    %v2445 = vpow.pop %v2444
    %v2446 = vmul.f32 %v2002, 1.442695
    %v2447 = vpow.pop %v2446
    %v2448 = vmul.f32 %v2003, 1.442695
    %v2449 = vpow.pop %v2448
    %v2450 = vmul.f32 %v2004, 1.442695
    %v2451 = vpow.pop %v2450
    %v2452 = vmul.f32 %v2005, 1.442695
    %v2453 = vpow.pop %v2452
    %v2454 = vmul.f32 %v2006, 1.442695
    %v2455 = vpow.pop %v2454
    %v2456 = vmul.f32 %v2007, 1.442695
    %v2457 = vpow.pop %v2456
    %v2458 = vmul.f32 %v2008, 1.442695
    %v2459 = vpow.pop %v2458
    %v2460 = vmul.f32 %v2009, 1.442695
    %v2461 = vpow.pop %v2460
    %v2462 = vmul.f32 %v2010, 1.442695
    %v2463 = vpow.pop %v2462
    %v2464 = vmul.f32 %v2011, 1.442695
    %v2465 = vpow.pop %v2464
    %v2466 = vmul.f32 %v2012, 1.442695
    %v2467 = vpow.pop %v2466
    %v2468 = vmul.f32 %v2013, 1.442695
    %v2469 = vpow.pop %v2468
    %v2470 = vmul.f32 %v2014, 1.442695
    %v2471 = vpow.pop %v2470
    %v2472 = vmul.f32 %v2015, 1.442695
    %v2473 = vpow.pop %v2472
    %v2474 = vmul.f32 %v2016, 1.442695
    %v2475 = vpow.pop %v2474
    %v2476 = vmul.f32 %v2017, 1.442695
    %v2477 = vpow.pop %v2476
    %v2478 = vmul.f32 %v2018, 1.442695
    %v2479 = vpow.pop %v2478
    %v2480 = vmul.f32 %v2019, 1.442695
    %v2481 = vpow.pop %v2480
    %v2482 = vmul.f32 %v2020, 1.442695
    %v2483 = vpow.pop %v2482
    %v2484 = vmul.f32 %v2021, 1.442695
    %v2485 = vpow.pop %v2484
    %v2486 = vmul.f32 %v2022, 1.442695
    %v2487 = vpow.pop %v2486
    %v2488 = vmul.f32 %v2023, 1.442695
    %v2489 = vpow.pop %v2488
    %v2490 = vmul.f32 %v2024, 1.442695
    %v2491 = vpow.pop %v2490
    %v2492 = vmul.f32 %v2025, 1.442695
    %v2493 = vpow.pop %v2492
    %v2494 = vmul.f32 %v2026, 1.442695
    %v2495 = vpow.pop %v2494
    %v2496 = vmul.f32 %v2027, 1.442695
    %v2497 = vpow.pop %v2496
    %v2498 = vmul.f32 %v2028, 1.442695
    %v2499 = vpow.pop %v2498
    %v2500 = vmul.f32 %v2029, 1.442695
    %v2501 = vpow.pop %v2500
    %v2502 = vmul.f32 %v2030, 1.442695
    %v2503 = vpow.pop %v2502
    %v2504 = vmul.f32 %v2031, 1.442695
    %v2505 = vpow.pop %v2504
    %v2506 = vmul.f32 %v2032, 1.442695
    %v2507 = vpow.pop %v2506
    %v2508 = vmul.f32 %v2033, 1.442695
    %v2509 = vpow.pop %v2508
    %v2510 = vmul.f32 %v2034, 1.442695
    %v2511 = vpow.pop %v2510
    %v2512 = vmul.f32 %v2035, 1.442695
    %v2513 = vpow.pop %v2512
    %v2514 = vmul.f32 %v2036, 1.442695
    %v2515 = vpow.pop %v2514
    %v2516 = vmul.f32 %v2037, 1.442695
    %v2517 = vpow.pop %v2516
    %v2518 = vmul.f32 %v2038, 1.442695
    %v2519 = vpow.pop %v2518
    %v2520 = vmul.f32 %v2039, 1.442695
    %v2521 = vpow.pop %v2520
    %v2522 = vmul.f32 %v2040, 1.442695
    %v2523 = vpow.pop %v2522
    %v2524 = vmul.f32 %v2041, 1.442695
    %v2525 = vpow.pop %v2524
    %v2526 = vmul.f32 %v2042, 1.442695
    %v2527 = vpow.pop %v2526
    %v2528 = vmul.f32 %v2043, 1.442695
    %v2529 = vpow.pop %v2528
    %v2530 = vmul.f32 %v2044, 1.442695
    %v2531 = vpow.pop %v2530
    %v2532 = vmul.f32 %v2045, 1.442695
    %v2533 = vpow.pop %v2532
    %v2534 = vmul.f32 %v2046, 1.442695
    %v2535 = vpow.pop %v2534
    %v2536 = vmul.f32 %v2047, 1.442695
    %v2537 = vpow.pop %v2536
    %v2538 = vmul.f32 %v2048, 1.442695
    %v2539 = vpow.pop %v2538
    %v2540 = vmul.f32 %v2049, 1.442695
    %v2541 = vpow.pop %v2540
    %v2542 = vmul.f32 %v2050, 1.442695
    %v2543 = vpow.pop %v2542
    %v2544 = vmul.f32 %v2051, 1.442695
    %v2545 = vpow.pop %v2544
    %v2546 = vmul.f32 %v2052, 1.442695
    %v2547 = vpow.pop %v2546
    %v2548 = vmul.f32 %v2053, 1.442695
    %v2549 = vpow.pop %v2548
    %v2550 = vmul.f32 %v2054, 1.442695
    %v2551 = vpow.pop %v2550
    %v2552 = vmul.f32 %v2055, 1.442695
    %v2553 = vpow.pop %v2552
    %v2554 = vmul.f32 %v2056, 1.442695
    %v2555 = vpow.pop %v2554
    %v2556 = vmul.f32 %v2057, 1.442695
    %v2557 = vpow.pop %v2556
    %v2558 = vmul.f32 %v2058, 1.442695
    %v2559 = vpow.pop %v2558
    %v2560 = vmul.f32 %v2059, 1.442695
    %v2561 = vpow.pop %v2560
    %v2562 = vmul.f32 %v2060, 1.442695
    %v2563 = vpow.pop %v2562
    %v2564 = vmul.f32 %v2061, 1.442695
    %v2565 = vpow.pop %v2564
    %v2566 = vmul.f32 %v2062, 1.442695
    %v2567 = vpow.pop %v2566
    %v2568 = vmul.f32 %v2063, 1.442695
    %v2569 = vpow.pop %v2568
    %v2570 = vmul.f32 %v2064, 1.442695
    %v2571 = vpow.pop %v2570
    %v2572 = vmul.f32 %v2065, 1.442695
    %v2573 = vpow.pop %v2572
    %v2574 = vmul.f32 %v2066, 1.442695
    %v2575 = vpow.pop %v2574
    %v2576 = vmul.f32 %v2067, 1.442695
    %v2577 = vpow.pop %v2576
    %v2578 = vmul.f32 %v2068, 1.442695
    %v2579 = vpow.pop %v2578
    %v2580 = vmul.f32 %v2069, 1.442695
    %v2581 = vpow.pop %v2580
    %v2582 = vmul.f32 %v2070, 1.442695
    %v2583 = vpow.pop %v2582
    %v2584 = vmul.f32 %v2071, 1.442695
    %v2585 = vpow.pop %v2584
    %v2586 = vmul.f32 %v2072, 1.442695
    %v2587 = vpow.pop %v2586
    %v2588 = vmul.f32 %v2073, 1.442695
    %v2589 = vpow.pop %v2588
    %v2590 = vmul.f32 %v2074, 1.442695
    %v2591 = vpow.pop %v2590
    %v2592 = vmul.f32 %v2075, 1.442695
    %v2593 = vpow.pop %v2592
    %v2594 = vmul.f32 %v2076, 1.442695
    %v2595 = vpow.pop %v2594
    %v2596 = vmul.f32 %v2077, 1.442695
    %v2597 = vpow.pop %v2596
    %v2598 = vmul.f32 %v2078, 1.442695
    %v2599 = vpow.pop %v2598
    %v2600 = vmul.f32 %v2079, 1.442695
    %v2601 = vpow.pop %v2600
    %v2602 = vmul.f32 %v2080, 1.442695
    %v2603 = vpow.pop %v2602
    %v2604 = vmul.f32 %v2081, 1.442695
    %v2605 = vpow.pop %v2604
    %v2606 = vmul.f32 %v2082, 1.442695
    %v2607 = vpow.pop %v2606
    %v2608 = vmul.f32 %v2083, 1.442695
    %v2609 = vpow.pop %v2608
    %v2610 = vmul.f32 %v2084, 1.442695
    %v2611 = vpow.pop %v2610
    %v2612 = vmul.f32 %v2085, 1.442695
    %v2613 = vpow.pop %v2612
    %v2614 = vmul.f32 %v2086, 1.442695
    %v2615 = vpow.pop %v2614
    %v2616 = vmul.f32 %v2087, 1.442695
    %v2617 = vpow.pop %v2616
    %v2618 = vmul.f32 %v2088, 1.442695
    %v2619 = vpow.pop %v2618
    %v2620 = vmul.f32 %v2089, 1.442695
    %v2621 = vpow.pop %v2620
    %v2622 = vmul.f32 %v2090, 1.442695
    %v2623 = vpow.pop %v2622
    %v2624 = vmul.f32 %v2091, 1.442695
    %v2625 = vpow.pop %v2624
    %v2626 = vmul.f32 %v2092, 1.442695
    %v2627 = vpow.pop %v2626
    %v2628 = vmul.f32 %v2093, 1.442695
    %v2629 = vpow.pop %v2628
    %v2630 = vmul.f32 %v2094, 1.442695
    %v2631 = vpow.pop %v2630
    %v2632 = vmul.f32 %v2095, 1.442695
    %v2633 = vpow.pop %v2632
    %v2634 = vmul.f32 %v2096, 1.442695
    %v2635 = vpow.pop %v2634
    %v2636 = vmul.f32 %v2097, 1.442695
    %v2637 = vpow.pop %v2636
    %v2638 = vmul.f32 %v2098, 1.442695
    %v2639 = vpow.pop %v2638
    %v2640 = vmul.f32 %v2099, 1.442695
    %v2641 = vpow.pop %v2640
    %v2642 = vmul.f32 %v2100, 1.442695
    %v2643 = vpow.pop %v2642
    %v2644 = vmul.f32 %v2101, 1.442695
    %v2645 = vpow.pop %v2644
    %v2646 = vmul.f32 %v2102, 1.442695
    %v2647 = vpow.pop %v2646
    %v2648 = vmul.f32 %v2103, 1.442695
    %v2649 = vpow.pop %v2648
    %v2650 = vmul.f32 %v2104, 1.442695
    %v2651 = vpow.pop %v2650
    %v2652 = vmul.f32 %v2105, 1.442695
    %v2653 = vpow.pop %v2652
    %v2654 = vmul.f32 %v2106, 1.442695
    %v2655 = vpow.pop %v2654
    %v2656 = vmul.f32 %v2107, 1.442695
    %v2657 = vpow.pop %v2656
    %v2658 = vmul.f32 %v2108, 1.442695
    %v2659 = vpow.pop %v2658
    %v2660 = vmul.f32 %v2109, 1.442695
    %v2661 = vpow.pop %v2660
    %v2662 = vmul.f32 %v2110, 1.442695
    %v2663 = vpow.pop %v2662
    %v2664 = vmul.f32 %v2111, 1.442695
    %v2665 = vpow.pop %v2664
    %v2666 = vmul.f32 %v2112, 1.442695
    %v2667 = vpow.pop %v2666
    %v2668 = vmul.f32 %v2113, 1.442695
    %v2669 = vpow.pop %v2668
    %v2670 = vmul.f32 %v2114, 1.442695
    %v2671 = vpow.pop %v2670
    %v2672 = vmul.f32 %v2115, 1.442695
    %v2673 = vpow.pop %v2672
    %v2674 = vmul.f32 %v2116, 1.442695
    %v2675 = vpow.pop %v2674
    %v2676 = vmul.f32 %v2117, 1.442695
    %v2677 = vpow.pop %v2676
    %v2678 = vmul.f32 %v2118, 1.442695
    %v2679 = vpow.pop %v2678
    %v2680 = vmul.f32 %v2119, 1.442695
    %v2681 = vpow.pop %v2680
    %v2682 = vmul.f32 %v2120, 1.442695
    %v2683 = vpow.pop %v2682
    %v2684 = vmul.f32 %v2121, 1.442695
    %v2685 = vpow.pop %v2684
    %v2686 = vmul.f32 %v2122, 1.442695
    %v2687 = vpow.pop %v2686
    %v2688 = vmul.f32 %v2123, 1.442695
    %v2689 = vpow.pop %v2688
    %v2690 = vmul.f32 %v2124, 1.442695
    %v2691 = vpow.pop %v2690
    %v2692 = vmul.f32 %v2125, 1.442695
    %v2693 = vpow.pop %v2692
    %v2694 = vmul.f32 %v2126, 1.442695
    %v2695 = vpow.pop %v2694
    %v2696 = vmul.f32 %v2127, 1.442695
    %v2697 = vpow.pop %v2696
    %v2698 = vmul.f32 %v2128, 1.442695
    %v2699 = vpow.pop %v2698
    %v2700 = vmul.f32 %v2129, 1.442695
    %v2701 = vpow.pop %v2700
    %v2702 = vadd.f32 %v2131, 1.0
    %v2703 = vadd.f32 %v2133, 1.0
    %v2704 = vadd.f32 %v2135, 1.0
    %v2705 = vadd.f32 %v2137, 1.0
    %v2706 = vadd.f32 %v2139, 1.0
    %v2707 = vadd.f32 %v2141, 1.0
    %v2708 = vadd.f32 %v2143, 1.0
    %v2709 = vadd.f32 %v2145, 1.0
    %v2710 = vadd.f32 %v2147, 1.0
    %v2711 = vadd.f32 %v2149, 1.0
    %v2712 = vadd.f32 %v2151, 1.0
    %v2713 = vadd.f32 %v2153, 1.0
    %v2714 = vadd.f32 %v2155, 1.0
    %v2715 = vadd.f32 %v2157, 1.0
    %v2716 = vadd.f32 %v2159, 1.0
    %v2717 = vadd.f32 %v2161, 1.0
    %v2718 = vadd.f32 %v2163, 1.0
    %v2719 = vadd.f32 %v2165, 1.0
    %v2720 = vadd.f32 %v2167, 1.0
    %v2721 = vadd.f32 %v2169, 1.0
    %v2722 = vadd.f32 %v2171, 1.0
    %v2723 = vadd.f32 %v2173, 1.0
    %v2724 = vadd.f32 %v2175, 1.0
    %v2725 = vadd.f32 %v2177, 1.0
    %v2726 = vadd.f32 %v2179, 1.0
    %v2727 = vadd.f32 %v2181, 1.0
    %v2728 = vadd.f32 %v2183, 1.0
    %v2729 = vadd.f32 %v2185, 1.0
    %v2730 = vadd.f32 %v2187, 1.0
    %v2731 = vadd.f32 %v2189, 1.0
    %v2732 = vadd.f32 %v2191, 1.0
    %v2733 = vadd.f32 %v2193, 1.0
    %v2734 = vadd.f32 %v2195, 1.0
    %v2735 = vadd.f32 %v2197, 1.0
    %v2736 = vadd.f32 %v2199, 1.0
    %v2737 = vadd.f32 %v2201, 1.0
    %v2738 = vadd.f32 %v2203, 1.0
    %v2739 = vadd.f32 %v2205, 1.0
    %v2740 = vadd.f32 %v2207, 1.0
    %v2741 = vadd.f32 %v2209, 1.0
    %v2742 = vadd.f32 %v2211, 1.0
    %v2743 = vadd.f32 %v2213, 1.0
    %v2744 = vadd.f32 %v2215, 1.0
    %v2745 = vadd.f32 %v2217, 1.0
    %v2746 = vadd.f32 %v2219, 1.0
    %v2747 = vadd.f32 %v2221, 1.0
    %v2748 = vadd.f32 %v2223, 1.0
    %v2749 = vadd.f32 %v2225, 1.0
    %v2750 = vadd.f32 %v2227, 1.0
    %v2751 = vadd.f32 %v2229, 1.0
    %v2752 = vadd.f32 %v2231, 1.0
    %v2753 = vadd.f32 %v2233, 1.0
    %v2754 = vadd.f32 %v2235, 1.0
    %v2755 = vadd.f32 %v2237, 1.0
    %v2756 = vadd.f32 %v2239, 1.0
    %v2757 = vadd.f32 %v2241, 1.0
    %v2758 = vadd.f32 %v2243, 1.0
    %v2759 = vadd.f32 %v2245, 1.0
    %v2760 = vadd.f32 %v2247, 1.0
    %v2761 = vadd.f32 %v2249, 1.0
    %v2762 = vadd.f32 %v2251, 1.0
    %v2763 = vadd.f32 %v2253, 1.0
    %v2764 = vadd.f32 %v2255, 1.0
    %v2765 = vadd.f32 %v2257, 1.0
    %v2766 = vadd.f32 %v2259, 1.0
    %v2767 = vadd.f32 %v2261, 1.0
    %v2768 = vadd.f32 %v2263, 1.0
    %v2769 = vadd.f32 %v2265, 1.0
    %v2770 = vadd.f32 %v2267, 1.0
    %v2771 = vadd.f32 %v2269, 1.0
    %v2772 = vadd.f32 %v2271, 1.0
    %v2773 = vadd.f32 %v2273, 1.0
    %v2774 = vadd.f32 %v2275, 1.0
    %v2775 = vadd.f32 %v2277, 1.0
    %v2776 = vadd.f32 %v2279, 1.0
    %v2777 = vadd.f32 %v2281, 1.0
    %v2778 = vadd.f32 %v2283, 1.0
    %v2779 = vadd.f32 %v2285, 1.0
    %v2780 = vadd.f32 %v2287, 1.0
    %v2781 = vadd.f32 %v2289, 1.0
    %v2782 = vadd.f32 %v2291, 1.0
    %v2783 = vadd.f32 %v2293, 1.0
    %v2784 = vadd.f32 %v2295, 1.0
    %v2785 = vadd.f32 %v2297, 1.0
    %v2786 = vadd.f32 %v2299, 1.0
    %v2787 = vadd.f32 %v2301, 1.0
    %v2788 = vadd.f32 %v2303, 1.0
    %v2789 = vadd.f32 %v2305, 1.0
    %v2790 = vadd.f32 %v2307, 1.0
    %v2791 = vadd.f32 %v2309, 1.0
    %v2792 = vadd.f32 %v2311, 1.0
    %v2793 = vadd.f32 %v2313, 1.0
    %v2794 = vadd.f32 %v2315, 1.0
    %v2795 = vadd.f32 %v2317, 1.0
    %v2796 = vadd.f32 %v2319, 1.0
    %v2797 = vadd.f32 %v2321, 1.0
    %v2798 = vadd.f32 %v2323, 1.0
    %v2799 = vadd.f32 %v2325, 1.0
    %v2800 = vadd.f32 %v2327, 1.0
    %v2801 = vadd.f32 %v2329, 1.0
    %v2802 = vadd.f32 %v2331, 1.0
    %v2803 = vadd.f32 %v2333, 1.0
    %v2804 = vadd.f32 %v2335, 1.0
    %v2805 = vadd.f32 %v2337, 1.0
    %v2806 = vadd.f32 %v2339, 1.0
    %v2807 = vadd.f32 %v2341, 1.0
    %v2808 = vadd.f32 %v2343, 1.0
    %v2809 = vadd.f32 %v2345, 1.0
    %v2810 = vadd.f32 %v2347, 1.0
    %v2811 = vadd.f32 %v2349, 1.0
    %v2812 = vadd.f32 %v2351, 1.0
    %v2813 = vadd.f32 %v2353, 1.0
    %v2814 = vadd.f32 %v2355, 1.0
    %v2815 = vadd.f32 %v2357, 1.0
    %v2816 = vadd.f32 %v2359, 1.0
    %v2817 = vadd.f32 %v2361, 1.0
    %v2818 = vadd.f32 %v2363, 1.0
    %v2819 = vadd.f32 %v2365, 1.0
    %v2820 = vadd.f32 %v2367, 1.0
    %v2821 = vadd.f32 %v2369, 1.0
    %v2822 = vadd.f32 %v2371, 1.0
    %v2823 = vadd.f32 %v2373, 1.0
    %v2824 = vadd.f32 %v2375, 1.0
    %v2825 = vadd.f32 %v2377, 1.0
    %v2826 = vadd.f32 %v2379, 1.0
    %v2827 = vadd.f32 %v2381, 1.0
    %v2828 = vadd.f32 %v2383, 1.0
    %v2829 = vadd.f32 %v2385, 1.0
    %v2830 = vadd.f32 %v2387, 1.0
    %v2831 = vadd.f32 %v2389, 1.0
    %v2832 = vadd.f32 %v2391, 1.0
    %v2833 = vadd.f32 %v2393, 1.0
    %v2834 = vadd.f32 %v2395, 1.0
    %v2835 = vadd.f32 %v2397, 1.0
    %v2836 = vadd.f32 %v2399, 1.0
    %v2837 = vadd.f32 %v2401, 1.0
    %v2838 = vadd.f32 %v2403, 1.0
    %v2839 = vadd.f32 %v2405, 1.0
    %v2840 = vadd.f32 %v2407, 1.0
    %v2841 = vadd.f32 %v2409, 1.0
    %v2842 = vadd.f32 %v2411, 1.0
    %v2843 = vadd.f32 %v2413, 1.0
    %v2844 = vadd.f32 %v2415, 1.0
    %v2845 = vadd.f32 %v2417, 1.0
    %v2846 = vadd.f32 %v2419, 1.0
    %v2847 = vadd.f32 %v2421, 1.0
    %v2848 = vadd.f32 %v2423, 1.0
    %v2849 = vadd.f32 %v2425, 1.0
    %v2850 = vadd.f32 %v2427, 1.0
    %v2851 = vadd.f32 %v2429, 1.0
    %v2852 = vadd.f32 %v2431, 1.0
    %v2853 = vadd.f32 %v2433, 1.0
    %v2854 = vadd.f32 %v2435, 1.0
    %v2855 = vadd.f32 %v2437, 1.0
    %v2856 = vadd.f32 %v2439, 1.0
    %v2857 = vadd.f32 %v2441, 1.0
    %v2858 = vadd.f32 %v2443, 1.0
    %v2859 = vadd.f32 %v2445, 1.0
    %v2860 = vadd.f32 %v2447, 1.0
    %v2861 = vadd.f32 %v2449, 1.0
    %v2862 = vadd.f32 %v2451, 1.0
    %v2863 = vadd.f32 %v2453, 1.0
    %v2864 = vadd.f32 %v2455, 1.0
    %v2865 = vadd.f32 %v2457, 1.0
    %v2866 = vadd.f32 %v2459, 1.0
    %v2867 = vadd.f32 %v2461, 1.0
    %v2868 = vadd.f32 %v2463, 1.0
    %v2869 = vadd.f32 %v2465, 1.0
    %v2870 = vadd.f32 %v2467, 1.0
    %v2871 = vadd.f32 %v2469, 1.0
    %v2872 = vadd.f32 %v2471, 1.0
    %v2873 = vadd.f32 %v2473, 1.0
    %v2874 = vadd.f32 %v2475, 1.0
    %v2875 = vadd.f32 %v2477, 1.0
    %v2876 = vadd.f32 %v2479, 1.0
    %v2877 = vadd.f32 %v2481, 1.0
    %v2878 = vadd.f32 %v2483, 1.0
    %v2879 = vadd.f32 %v2485, 1.0
    %v2880 = vadd.f32 %v2487, 1.0
    %v2881 = vadd.f32 %v2489, 1.0
    %v2882 = vadd.f32 %v2491, 1.0
    %v2883 = vadd.f32 %v2493, 1.0
    %v2884 = vadd.f32 %v2495, 1.0
    %v2885 = vadd.f32 %v2497, 1.0
    %v2886 = vadd.f32 %v2499, 1.0
    %v2887 = vadd.f32 %v2501, 1.0
    %v2888 = vadd.f32 %v2503, 1.0
    %v2889 = vadd.f32 %v2505, 1.0
    %v2890 = vadd.f32 %v2507, 1.0
    %v2891 = vadd.f32 %v2509, 1.0
    %v2892 = vadd.f32 %v2511, 1.0
    %v2893 = vadd.f32 %v2513, 1.0
    %v2894 = vadd.f32 %v2515, 1.0
    %v2895 = vadd.f32 %v2517, 1.0
    %v2896 = vadd.f32 %v2519, 1.0
    %v2897 = vadd.f32 %v2521, 1.0
    %v2898 = vadd.f32 %v2523, 1.0
    %v2899 = vadd.f32 %v2525, 1.0
    %v2900 = vadd.f32 %v2527, 1.0
    %v2901 = vadd.f32 %v2529, 1.0
    %v2902 = vadd.f32 %v2531, 1.0
    %v2903 = vadd.f32 %v2533, 1.0
    %v2904 = vadd.f32 %v2535, 1.0
    %v2905 = vadd.f32 %v2537, 1.0
    %v2906 = vadd.f32 %v2539, 1.0
    %v2907 = vadd.f32 %v2541, 1.0
    %v2908 = vadd.f32 %v2543, 1.0
    %v2909 = vadd.f32 %v2545, 1.0
    %v2910 = vadd.f32 %v2547, 1.0
    %v2911 = vadd.f32 %v2549, 1.0
    %v2912 = vadd.f32 %v2551, 1.0
    %v2913 = vadd.f32 %v2553, 1.0
    %v2914 = vadd.f32 %v2555, 1.0
    %v2915 = vadd.f32 %v2557, 1.0
    %v2916 = vadd.f32 %v2559, 1.0
    %v2917 = vadd.f32 %v2561, 1.0
    %v2918 = vadd.f32 %v2563, 1.0
    %v2919 = vadd.f32 %v2565, 1.0
    %v2920 = vadd.f32 %v2567, 1.0
    %v2921 = vadd.f32 %v2569, 1.0
    %v2922 = vadd.f32 %v2571, 1.0
    %v2923 = vadd.f32 %v2573, 1.0
    %v2924 = vadd.f32 %v2575, 1.0
    %v2925 = vadd.f32 %v2577, 1.0
    %v2926 = vadd.f32 %v2579, 1.0
    %v2927 = vadd.f32 %v2581, 1.0
    %v2928 = vadd.f32 %v2583, 1.0
    %v2929 = vadd.f32 %v2585, 1.0
    %v2930 = vadd.f32 %v2587, 1.0
    %v2931 = vadd.f32 %v2589, 1.0
    %v2932 = vadd.f32 %v2591, 1.0
    %v2933 = vadd.f32 %v2593, 1.0
    %v2934 = vadd.f32 %v2595, 1.0
    %v2935 = vadd.f32 %v2597, 1.0
    %v2936 = vadd.f32 %v2599, 1.0
    %v2937 = vadd.f32 %v2601, 1.0
    %v2938 = vadd.f32 %v2603, 1.0
    %v2939 = vadd.f32 %v2605, 1.0
    %v2940 = vadd.f32 %v2607, 1.0
    %v2941 = vadd.f32 %v2609, 1.0
    %v2942 = vadd.f32 %v2611, 1.0
    %v2943 = vadd.f32 %v2613, 1.0
    %v2944 = vadd.f32 %v2615, 1.0
    %v2945 = vadd.f32 %v2617, 1.0
    %v2946 = vadd.f32 %v2619, 1.0
    %v2947 = vadd.f32 %v2621, 1.0
    %v2948 = vadd.f32 %v2623, 1.0
    %v2949 = vadd.f32 %v2625, 1.0
    %v2950 = vadd.f32 %v2627, 1.0
    %v2951 = vadd.f32 %v2629, 1.0
    %v2952 = vadd.f32 %v2631, 1.0
    %v2953 = vadd.f32 %v2633, 1.0
    %v2954 = vadd.f32 %v2635, 1.0
    %v2955 = vadd.f32 %v2637, 1.0
    %v2956 = vadd.f32 %v2639, 1.0
    %v2957 = vadd.f32 %v2641, 1.0
    %v2958 = vadd.f32 %v2643, 1.0
    %v2959 = vadd.f32 %v2645, 1.0
    %v2960 = vadd.f32 %v2647, 1.0
    %v2961 = vadd.f32 %v2649, 1.0
    %v2962 = vadd.f32 %v2651, 1.0
    %v2963 = vadd.f32 %v2653, 1.0
    %v2964 = vadd.f32 %v2655, 1.0
    %v2965 = vadd.f32 %v2657, 1.0
    %v2966 = vadd.f32 %v2659, 1.0
    %v2967 = vadd.f32 %v2661, 1.0
    %v2968 = vadd.f32 %v2663, 1.0
    %v2969 = vadd.f32 %v2665, 1.0
    %v2970 = vadd.f32 %v2667, 1.0
    %v2971 = vadd.f32 %v2669, 1.0
    %v2972 = vadd.f32 %v2671, 1.0
    %v2973 = vadd.f32 %v2673, 1.0
    %v2974 = vadd.f32 %v2675, 1.0
    %v2975 = vadd.f32 %v2677, 1.0
    %v2976 = vadd.f32 %v2679, 1.0
    %v2977 = vadd.f32 %v2681, 1.0
    %v2978 = vadd.f32 %v2683, 1.0
    %v2979 = vadd.f32 %v2685, 1.0
    %v2980 = vadd.f32 %v2687, 1.0
    %v2981 = vadd.f32 %v2689, 1.0
    %v2982 = vadd.f32 %v2691, 1.0
    %v2983 = vadd.f32 %v2693, 1.0
    %v2984 = vadd.f32 %v2695, 1.0
    %v2985 = vadd.f32 %v2697, 1.0
    %v2986 = vadd.f32 %v2699, 1.0
    %v2987 = vadd.f32 %v2701, 1.0
    %v2988 = vrcp.pop %v2702
    %v2989 = vmul.f32 1.0, %v2988
    %v2990 = vrcp.pop %v2703
    %v2991 = vmul.f32 1.0, %v2990
    %v2992 = vrcp.pop %v2704
    %v2993 = vmul.f32 1.0, %v2992
    %v2994 = vrcp.pop %v2705
    %v2995 = vmul.f32 1.0, %v2994
    %v2996 = vrcp.pop %v2706
    %v2997 = vmul.f32 1.0, %v2996
    %v2998 = vrcp.pop %v2707
    %v2999 = vmul.f32 1.0, %v2998
    %v3000 = vrcp.pop %v2708
    %v3001 = vmul.f32 1.0, %v3000
    %v3002 = vrcp.pop %v2709
    %v3003 = vmul.f32 1.0, %v3002
    %v3004 = vrcp.pop %v2710
    %v3005 = vmul.f32 1.0, %v3004
    %v3006 = vrcp.pop %v2711
    %v3007 = vmul.f32 1.0, %v3006
    %v3008 = vrcp.pop %v2712
    %v3009 = vmul.f32 1.0, %v3008
    %v3010 = vrcp.pop %v2713
    %v3011 = vmul.f32 1.0, %v3010
    %v3012 = vrcp.pop %v2714
    %v3013 = vmul.f32 1.0, %v3012
    %v3014 = vrcp.pop %v2715
    %v3015 = vmul.f32 1.0, %v3014
    %v3016 = vrcp.pop %v2716
    %v3017 = vmul.f32 1.0, %v3016
    %v3018 = vrcp.pop %v2717
    %v3019 = vmul.f32 1.0, %v3018
    %v3020 = vrcp.pop %v2718
    %v3021 = vmul.f32 1.0, %v3020
    %v3022 = vrcp.pop %v2719
    %v3023 = vmul.f32 1.0, %v3022
    %v3024 = vrcp.pop %v2720
    %v3025 = vmul.f32 1.0, %v3024
    %v3026 = vrcp.pop %v2721
    %v3027 = vmul.f32 1.0, %v3026
    %v3028 = vrcp.pop %v2722
    %v3029 = vmul.f32 1.0, %v3028
    %v3030 = vrcp.pop %v2723
    %v3031 = vmul.f32 1.0, %v3030
    %v3032 = vrcp.pop %v2724
    %v3033 = vmul.f32 1.0, %v3032
    %v3034 = vrcp.pop %v2725
    %v3035 = vmul.f32 1.0, %v3034
    %v3036 = vrcp.pop %v2726
    %v3037 = vmul.f32 1.0, %v3036
    %v3038 = vrcp.pop %v2727
    %v3039 = vmul.f32 1.0, %v3038
    %v3040 = vrcp.pop %v2728
    %v3041 = vmul.f32 1.0, %v3040
    %v3042 = vrcp.pop %v2729
    %v3043 = vmul.f32 1.0, %v3042
    %v3044 = vrcp.pop %v2730
    %v3045 = vmul.f32 1.0, %v3044
    %v3046 = vrcp.pop %v2731
    %v3047 = vmul.f32 1.0, %v3046
    %v3048 = vrcp.pop %v2732
    %v3049 = vmul.f32 1.0, %v3048
    %v3050 = vrcp.pop %v2733
    %v3051 = vmul.f32 1.0, %v3050
    %v3052 = vrcp.pop %v2734
    %v3053 = vmul.f32 1.0, %v3052
    %v3054 = vrcp.pop %v2735
    %v3055 = vmul.f32 1.0, %v3054
    %v3056 = vrcp.pop %v2736
    %v3057 = vmul.f32 1.0, %v3056
    %v3058 = vrcp.pop %v2737
    %v3059 = vmul.f32 1.0, %v3058
    %v3060 = vrcp.pop %v2738
    %v3061 = vmul.f32 1.0, %v3060
    %v3062 = vrcp.pop %v2739
    %v3063 = vmul.f32 1.0, %v3062
    %v3064 = vrcp.pop %v2740
    %v3065 = vmul.f32 1.0, %v3064
    %v3066 = vrcp.pop %v2741
    %v3067 = vmul.f32 1.0, %v3066
    %v3068 = vrcp.pop %v2742
    %v3069 = vmul.f32 1.0, %v3068
    %v3070 = vrcp.pop %v2743
    %v3071 = vmul.f32 1.0, %v3070
    %v3072 = vrcp.pop %v2744
    %v3073 = vmul.f32 1.0, %v3072
    %v3074 = vrcp.pop %v2745
    %v3075 = vmul.f32 1.0, %v3074
    %v3076 = vrcp.pop %v2746
    %v3077 = vmul.f32 1.0, %v3076
    %v3078 = vrcp.pop %v2747
    %v3079 = vmul.f32 1.0, %v3078
    %v3080 = vrcp.pop %v2748
    %v3081 = vmul.f32 1.0, %v3080
    %v3082 = vrcp.pop %v2749
    %v3083 = vmul.f32 1.0, %v3082
    %v3084 = vrcp.pop %v2750
    %v3085 = vmul.f32 1.0, %v3084
    %v3086 = vrcp.pop %v2751
    %v3087 = vmul.f32 1.0, %v3086
    %v3088 = vrcp.pop %v2752
    %v3089 = vmul.f32 1.0, %v3088
    %v3090 = vrcp.pop %v2753
    %v3091 = vmul.f32 1.0, %v3090
    %v3092 = vrcp.pop %v2754
    %v3093 = vmul.f32 1.0, %v3092
    %v3094 = vrcp.pop %v2755
    %v3095 = vmul.f32 1.0, %v3094
    %v3096 = vrcp.pop %v2756
    %v3097 = vmul.f32 1.0, %v3096
    %v3098 = vrcp.pop %v2757
    %v3099 = vmul.f32 1.0, %v3098
    %v3100 = vrcp.pop %v2758
    %v3101 = vmul.f32 1.0, %v3100
    %v3102 = vrcp.pop %v2759
    %v3103 = vmul.f32 1.0, %v3102
    %v3104 = vrcp.pop %v2760
    %v3105 = vmul.f32 1.0, %v3104
    %v3106 = vrcp.pop %v2761
    %v3107 = vmul.f32 1.0, %v3106
    %v3108 = vrcp.pop %v2762
    %v3109 = vmul.f32 1.0, %v3108
    %v3110 = vrcp.pop %v2763
    %v3111 = vmul.f32 1.0, %v3110
    %v3112 = vrcp.pop %v2764
    %v3113 = vmul.f32 1.0, %v3112
    %v3114 = vrcp.pop %v2765
    %v3115 = vmul.f32 1.0, %v3114
    %v3116 = vrcp.pop %v2766
    %v3117 = vmul.f32 1.0, %v3116
    %v3118 = vrcp.pop %v2767
    %v3119 = vmul.f32 1.0, %v3118
    %v3120 = vrcp.pop %v2768
    %v3121 = vmul.f32 1.0, %v3120
    %v3122 = vrcp.pop %v2769
    %v3123 = vmul.f32 1.0, %v3122
    %v3124 = vrcp.pop %v2770
    %v3125 = vmul.f32 1.0, %v3124
    %v3126 = vrcp.pop %v2771
    %v3127 = vmul.f32 1.0, %v3126
    %v3128 = vrcp.pop %v2772
    %v3129 = vmul.f32 1.0, %v3128
    %v3130 = vrcp.pop %v2773
    %v3131 = vmul.f32 1.0, %v3130
    %v3132 = vrcp.pop %v2774
    %v3133 = vmul.f32 1.0, %v3132
    %v3134 = vrcp.pop %v2775
    %v3135 = vmul.f32 1.0, %v3134
    %v3136 = vrcp.pop %v2776
    %v3137 = vmul.f32 1.0, %v3136
    %v3138 = vrcp.pop %v2777
    %v3139 = vmul.f32 1.0, %v3138
    %v3140 = vrcp.pop %v2778
    %v3141 = vmul.f32 1.0, %v3140
    %v3142 = vrcp.pop %v2779
    %v3143 = vmul.f32 1.0, %v3142
    %v3144 = vrcp.pop %v2780
    %v3145 = vmul.f32 1.0, %v3144
    %v3146 = vrcp.pop %v2781
    %v3147 = vmul.f32 1.0, %v3146
    %v3148 = vrcp.pop %v2782
    %v3149 = vmul.f32 1.0, %v3148
    %v3150 = vrcp.pop %v2783
    %v3151 = vmul.f32 1.0, %v3150
    %v3152 = vrcp.pop %v2784
    %v3153 = vmul.f32 1.0, %v3152
    %v3154 = vrcp.pop %v2785
    %v3155 = vmul.f32 1.0, %v3154
    %v3156 = vrcp.pop %v2786
    %v3157 = vmul.f32 1.0, %v3156
    %v3158 = vrcp.pop %v2787
    %v3159 = vmul.f32 1.0, %v3158
    %v3160 = vrcp.pop %v2788
    %v3161 = vmul.f32 1.0, %v3160
    %v3162 = vrcp.pop %v2789
    %v3163 = vmul.f32 1.0, %v3162
    %v3164 = vrcp.pop %v2790
    %v3165 = vmul.f32 1.0, %v3164
    %v3166 = vrcp.pop %v2791
    %v3167 = vmul.f32 1.0, %v3166
    %v3168 = vrcp.pop %v2792
    %v3169 = vmul.f32 1.0, %v3168
    %v3170 = vrcp.pop %v2793
    %v3171 = vmul.f32 1.0, %v3170
    %v3172 = vrcp.pop %v2794
    %v3173 = vmul.f32 1.0, %v3172
    %v3174 = vrcp.pop %v2795
    %v3175 = vmul.f32 1.0, %v3174
    %v3176 = vrcp.pop %v2796
    %v3177 = vmul.f32 1.0, %v3176
    %v3178 = vrcp.pop %v2797
    %v3179 = vmul.f32 1.0, %v3178
    %v3180 = vrcp.pop %v2798
    %v3181 = vmul.f32 1.0, %v3180
    %v3182 = vrcp.pop %v2799
    %v3183 = vmul.f32 1.0, %v3182
    %v3184 = vrcp.pop %v2800
    %v3185 = vmul.f32 1.0, %v3184
    %v3186 = vrcp.pop %v2801
    %v3187 = vmul.f32 1.0, %v3186
    %v3188 = vrcp.pop %v2802
    %v3189 = vmul.f32 1.0, %v3188
    %v3190 = vrcp.pop %v2803
    %v3191 = vmul.f32 1.0, %v3190
    %v3192 = vrcp.pop %v2804
    %v3193 = vmul.f32 1.0, %v3192
    %v3194 = vrcp.pop %v2805
    %v3195 = vmul.f32 1.0, %v3194
    %v3196 = vrcp.pop %v2806
    %v3197 = vmul.f32 1.0, %v3196
    %v3198 = vrcp.pop %v2807
    %v3199 = vmul.f32 1.0, %v3198
    %v3200 = vrcp.pop %v2808
    %v3201 = vmul.f32 1.0, %v3200
    %v3202 = vrcp.pop %v2809
    %v3203 = vmul.f32 1.0, %v3202
    %v3204 = vrcp.pop %v2810
    %v3205 = vmul.f32 1.0, %v3204
    %v3206 = vrcp.pop %v2811
    %v3207 = vmul.f32 1.0, %v3206
    %v3208 = vrcp.pop %v2812
    %v3209 = vmul.f32 1.0, %v3208
    %v3210 = vrcp.pop %v2813
    %v3211 = vmul.f32 1.0, %v3210
    %v3212 = vrcp.pop %v2814
    %v3213 = vmul.f32 1.0, %v3212
    %v3214 = vrcp.pop %v2815
    %v3215 = vmul.f32 1.0, %v3214
    %v3216 = vrcp.pop %v2816
    %v3217 = vmul.f32 1.0, %v3216
    %v3218 = vrcp.pop %v2817
    %v3219 = vmul.f32 1.0, %v3218
    %v3220 = vrcp.pop %v2818
    %v3221 = vmul.f32 1.0, %v3220
    %v3222 = vrcp.pop %v2819
    %v3223 = vmul.f32 1.0, %v3222
    %v3224 = vrcp.pop %v2820
    %v3225 = vmul.f32 1.0, %v3224
    %v3226 = vrcp.pop %v2821
    %v3227 = vmul.f32 1.0, %v3226
    %v3228 = vrcp.pop %v2822
    %v3229 = vmul.f32 1.0, %v3228
    %v3230 = vrcp.pop %v2823
    %v3231 = vmul.f32 1.0, %v3230
    %v3232 = vrcp.pop %v2824
    %v3233 = vmul.f32 1.0, %v3232
    %v3234 = vrcp.pop %v2825
    %v3235 = vmul.f32 1.0, %v3234
    %v3236 = vrcp.pop %v2826
    %v3237 = vmul.f32 1.0, %v3236
    %v3238 = vrcp.pop %v2827
    %v3239 = vmul.f32 1.0, %v3238
    %v3240 = vrcp.pop %v2828
    %v3241 = vmul.f32 1.0, %v3240
    %v3242 = vrcp.pop %v2829
    %v3243 = vmul.f32 1.0, %v3242
    %v3244 = vrcp.pop %v2830
    %v3245 = vmul.f32 1.0, %v3244
    %v3246 = vrcp.pop %v2831
    %v3247 = vmul.f32 1.0, %v3246
    %v3248 = vrcp.pop %v2832
    %v3249 = vmul.f32 1.0, %v3248
    %v3250 = vrcp.pop %v2833
    %v3251 = vmul.f32 1.0, %v3250
    %v3252 = vrcp.pop %v2834
    %v3253 = vmul.f32 1.0, %v3252
    %v3254 = vrcp.pop %v2835
    %v3255 = vmul.f32 1.0, %v3254
    %v3256 = vrcp.pop %v2836
    %v3257 = vmul.f32 1.0, %v3256
    %v3258 = vrcp.pop %v2837
    %v3259 = vmul.f32 1.0, %v3258
    %v3260 = vrcp.pop %v2838
    %v3261 = vmul.f32 1.0, %v3260
    %v3262 = vrcp.pop %v2839
    %v3263 = vmul.f32 1.0, %v3262
    %v3264 = vrcp.pop %v2840
    %v3265 = vmul.f32 1.0, %v3264
    %v3266 = vrcp.pop %v2841
    %v3267 = vmul.f32 1.0, %v3266
    %v3268 = vrcp.pop %v2842
    %v3269 = vmul.f32 1.0, %v3268
    %v3270 = vrcp.pop %v2843
    %v3271 = vmul.f32 1.0, %v3270
    %v3272 = vrcp.pop %v2844
    %v3273 = vmul.f32 1.0, %v3272
    %v3274 = vrcp.pop %v2845
    %v3275 = vmul.f32 1.0, %v3274
    %v3276 = vrcp.pop %v2846
    %v3277 = vmul.f32 1.0, %v3276
    %v3278 = vrcp.pop %v2847
    %v3279 = vmul.f32 1.0, %v3278
    %v3280 = vrcp.pop %v2848
    %v3281 = vmul.f32 1.0, %v3280
    %v3282 = vrcp.pop %v2849
    %v3283 = vmul.f32 1.0, %v3282
    %v3284 = vrcp.pop %v2850
    %v3285 = vmul.f32 1.0, %v3284
    %v3286 = vrcp.pop %v2851
    %v3287 = vmul.f32 1.0, %v3286
    %v3288 = vrcp.pop %v2852
    %v3289 = vmul.f32 1.0, %v3288
    %v3290 = vrcp.pop %v2853
    %v3291 = vmul.f32 1.0, %v3290
    %v3292 = vrcp.pop %v2854
    %v3293 = vmul.f32 1.0, %v3292
    %v3294 = vrcp.pop %v2855
    %v3295 = vmul.f32 1.0, %v3294
    %v3296 = vrcp.pop %v2856
    %v3297 = vmul.f32 1.0, %v3296
    %v3298 = vrcp.pop %v2857
    %v3299 = vmul.f32 1.0, %v3298
    %v3300 = vrcp.pop %v2858
    %v3301 = vmul.f32 1.0, %v3300
    %v3302 = vrcp.pop %v2859
    %v3303 = vmul.f32 1.0, %v3302
    %v3304 = vrcp.pop %v2860
    %v3305 = vmul.f32 1.0, %v3304
    %v3306 = vrcp.pop %v2861
    %v3307 = vmul.f32 1.0, %v3306
    %v3308 = vrcp.pop %v2862
    %v3309 = vmul.f32 1.0, %v3308
    %v3310 = vrcp.pop %v2863
    %v3311 = vmul.f32 1.0, %v3310
    %v3312 = vrcp.pop %v2864
    %v3313 = vmul.f32 1.0, %v3312
    %v3314 = vrcp.pop %v2865
    %v3315 = vmul.f32 1.0, %v3314
    %v3316 = vrcp.pop %v2866
    %v3317 = vmul.f32 1.0, %v3316
    %v3318 = vrcp.pop %v2867
    %v3319 = vmul.f32 1.0, %v3318
    %v3320 = vrcp.pop %v2868
    %v3321 = vmul.f32 1.0, %v3320
    %v3322 = vrcp.pop %v2869
    %v3323 = vmul.f32 1.0, %v3322
    %v3324 = vrcp.pop %v2870
    %v3325 = vmul.f32 1.0, %v3324
    %v3326 = vrcp.pop %v2871
    %v3327 = vmul.f32 1.0, %v3326
    %v3328 = vrcp.pop %v2872
    %v3329 = vmul.f32 1.0, %v3328
    %v3330 = vrcp.pop %v2873
    %v3331 = vmul.f32 1.0, %v3330
    %v3332 = vrcp.pop %v2874
    %v3333 = vmul.f32 1.0, %v3332
    %v3334 = vrcp.pop %v2875
    %v3335 = vmul.f32 1.0, %v3334
    %v3336 = vrcp.pop %v2876
    %v3337 = vmul.f32 1.0, %v3336
    %v3338 = vrcp.pop %v2877
    %v3339 = vmul.f32 1.0, %v3338
    %v3340 = vrcp.pop %v2878
    %v3341 = vmul.f32 1.0, %v3340
    %v3342 = vrcp.pop %v2879
    %v3343 = vmul.f32 1.0, %v3342
    %v3344 = vrcp.pop %v2880
    %v3345 = vmul.f32 1.0, %v3344
    %v3346 = vrcp.pop %v2881
    %v3347 = vmul.f32 1.0, %v3346
    %v3348 = vrcp.pop %v2882
    %v3349 = vmul.f32 1.0, %v3348
    %v3350 = vrcp.pop %v2883
    %v3351 = vmul.f32 1.0, %v3350
    %v3352 = vrcp.pop %v2884
    %v3353 = vmul.f32 1.0, %v3352
    %v3354 = vrcp.pop %v2885
    %v3355 = vmul.f32 1.0, %v3354
    %v3356 = vrcp.pop %v2886
    %v3357 = vmul.f32 1.0, %v3356
    %v3358 = vrcp.pop %v2887
    %v3359 = vmul.f32 1.0, %v3358
    %v3360 = vrcp.pop %v2888
    %v3361 = vmul.f32 1.0, %v3360
    %v3362 = vrcp.pop %v2889
    %v3363 = vmul.f32 1.0, %v3362
    %v3364 = vrcp.pop %v2890
    %v3365 = vmul.f32 1.0, %v3364
    %v3366 = vrcp.pop %v2891
    %v3367 = vmul.f32 1.0, %v3366
    %v3368 = vrcp.pop %v2892
    %v3369 = vmul.f32 1.0, %v3368
    %v3370 = vrcp.pop %v2893
    %v3371 = vmul.f32 1.0, %v3370
    %v3372 = vrcp.pop %v2894
    %v3373 = vmul.f32 1.0, %v3372
    %v3374 = vrcp.pop %v2895
    %v3375 = vmul.f32 1.0, %v3374
    %v3376 = vrcp.pop %v2896
    %v3377 = vmul.f32 1.0, %v3376
    %v3378 = vrcp.pop %v2897
    %v3379 = vmul.f32 1.0, %v3378
    %v3380 = vrcp.pop %v2898
    %v3381 = vmul.f32 1.0, %v3380
    %v3382 = vrcp.pop %v2899
    %v3383 = vmul.f32 1.0, %v3382
    %v3384 = vrcp.pop %v2900
    %v3385 = vmul.f32 1.0, %v3384
    %v3386 = vrcp.pop %v2901
    %v3387 = vmul.f32 1.0, %v3386
    %v3388 = vrcp.pop %v2902
    %v3389 = vmul.f32 1.0, %v3388
    %v3390 = vrcp.pop %v2903
    %v3391 = vmul.f32 1.0, %v3390
    %v3392 = vrcp.pop %v2904
    %v3393 = vmul.f32 1.0, %v3392
    %v3394 = vrcp.pop %v2905
    %v3395 = vmul.f32 1.0, %v3394
    %v3396 = vrcp.pop %v2906
    %v3397 = vmul.f32 1.0, %v3396
    %v3398 = vrcp.pop %v2907
    %v3399 = vmul.f32 1.0, %v3398
    %v3400 = vrcp.pop %v2908
    %v3401 = vmul.f32 1.0, %v3400
    %v3402 = vrcp.pop %v2909
    %v3403 = vmul.f32 1.0, %v3402
    %v3404 = vrcp.pop %v2910
    %v3405 = vmul.f32 1.0, %v3404
    %v3406 = vrcp.pop %v2911
    %v3407 = vmul.f32 1.0, %v3406
    %v3408 = vrcp.pop %v2912
    %v3409 = vmul.f32 1.0, %v3408
    %v3410 = vrcp.pop %v2913
    %v3411 = vmul.f32 1.0, %v3410
    %v3412 = vrcp.pop %v2914
    %v3413 = vmul.f32 1.0, %v3412
    %v3414 = vrcp.pop %v2915
    %v3415 = vmul.f32 1.0, %v3414
    %v3416 = vrcp.pop %v2916
    %v3417 = vmul.f32 1.0, %v3416
    %v3418 = vrcp.pop %v2917
    %v3419 = vmul.f32 1.0, %v3418
    %v3420 = vrcp.pop %v2918
    %v3421 = vmul.f32 1.0, %v3420
    %v3422 = vrcp.pop %v2919
    %v3423 = vmul.f32 1.0, %v3422
    %v3424 = vrcp.pop %v2920
    %v3425 = vmul.f32 1.0, %v3424
    %v3426 = vrcp.pop %v2921
    %v3427 = vmul.f32 1.0, %v3426
    %v3428 = vrcp.pop %v2922
    %v3429 = vmul.f32 1.0, %v3428
    %v3430 = vrcp.pop %v2923
    %v3431 = vmul.f32 1.0, %v3430
    %v3432 = vrcp.pop %v2924
    %v3433 = vmul.f32 1.0, %v3432
    %v3434 = vrcp.pop %v2925
    %v3435 = vmul.f32 1.0, %v3434
    %v3436 = vrcp.pop %v2926
    %v3437 = vmul.f32 1.0, %v3436
    %v3438 = vrcp.pop %v2927
    %v3439 = vmul.f32 1.0, %v3438
    %v3440 = vrcp.pop %v2928
    %v3441 = vmul.f32 1.0, %v3440
    %v3442 = vrcp.pop %v2929
    %v3443 = vmul.f32 1.0, %v3442
    %v3444 = vrcp.pop %v2930
    %v3445 = vmul.f32 1.0, %v3444
    %v3446 = vrcp.pop %v2931
    %v3447 = vmul.f32 1.0, %v3446
    %v3448 = vrcp.pop %v2932
    %v3449 = vmul.f32 1.0, %v3448
    %v3450 = vrcp.pop %v2933
    %v3451 = vmul.f32 1.0, %v3450
    %v3452 = vrcp.pop %v2934
    %v3453 = vmul.f32 1.0, %v3452
    %v3454 = vrcp.pop %v2935
    %v3455 = vmul.f32 1.0, %v3454
    %v3456 = vrcp.pop %v2936
    %v3457 = vmul.f32 1.0, %v3456
    %v3458 = vrcp.pop %v2937
    %v3459 = vmul.f32 1.0, %v3458
    %v3460 = vrcp.pop %v2938
    %v3461 = vmul.f32 1.0, %v3460
    %v3462 = vrcp.pop %v2939
    %v3463 = vmul.f32 1.0, %v3462
    %v3464 = vrcp.pop %v2940
    %v3465 = vmul.f32 1.0, %v3464
    %v3466 = vrcp.pop %v2941
    %v3467 = vmul.f32 1.0, %v3466
    %v3468 = vrcp.pop %v2942
    %v3469 = vmul.f32 1.0, %v3468
    %v3470 = vrcp.pop %v2943
    %v3471 = vmul.f32 1.0, %v3470
    %v3472 = vrcp.pop %v2944
    %v3473 = vmul.f32 1.0, %v3472
    %v3474 = vrcp.pop %v2945
    %v3475 = vmul.f32 1.0, %v3474
    %v3476 = vrcp.pop %v2946
    %v3477 = vmul.f32 1.0, %v3476
    %v3478 = vrcp.pop %v2947
    %v3479 = vmul.f32 1.0, %v3478
    %v3480 = vrcp.pop %v2948
    %v3481 = vmul.f32 1.0, %v3480
    %v3482 = vrcp.pop %v2949
    %v3483 = vmul.f32 1.0, %v3482
    %v3484 = vrcp.pop %v2950
    %v3485 = vmul.f32 1.0, %v3484
    %v3486 = vrcp.pop %v2951
    %v3487 = vmul.f32 1.0, %v3486
    %v3488 = vrcp.pop %v2952
    %v3489 = vmul.f32 1.0, %v3488
    %v3490 = vrcp.pop %v2953
    %v3491 = vmul.f32 1.0, %v3490
    %v3492 = vrcp.pop %v2954
    %v3493 = vmul.f32 1.0, %v3492
    %v3494 = vrcp.pop %v2955
    %v3495 = vmul.f32 1.0, %v3494
    %v3496 = vrcp.pop %v2956
    %v3497 = vmul.f32 1.0, %v3496
    %v3498 = vrcp.pop %v2957
    %v3499 = vmul.f32 1.0, %v3498
    %v3500 = vrcp.pop %v2958
    %v3501 = vmul.f32 1.0, %v3500
    %v3502 = vrcp.pop %v2959
    %v3503 = vmul.f32 1.0, %v3502
    %v3504 = vrcp.pop %v2960
    %v3505 = vmul.f32 1.0, %v3504
    %v3506 = vrcp.pop %v2961
    %v3507 = vmul.f32 1.0, %v3506
    %v3508 = vrcp.pop %v2962
    %v3509 = vmul.f32 1.0, %v3508
    %v3510 = vrcp.pop %v2963
    %v3511 = vmul.f32 1.0, %v3510
    %v3512 = vrcp.pop %v2964
    %v3513 = vmul.f32 1.0, %v3512
    %v3514 = vrcp.pop %v2965
    %v3515 = vmul.f32 1.0, %v3514
    %v3516 = vrcp.pop %v2966
    %v3517 = vmul.f32 1.0, %v3516
    %v3518 = vrcp.pop %v2967
    %v3519 = vmul.f32 1.0, %v3518
    %v3520 = vrcp.pop %v2968
    %v3521 = vmul.f32 1.0, %v3520
    %v3522 = vrcp.pop %v2969
    %v3523 = vmul.f32 1.0, %v3522
    %v3524 = vrcp.pop %v2970
    %v3525 = vmul.f32 1.0, %v3524
    %v3526 = vrcp.pop %v2971
    %v3527 = vmul.f32 1.0, %v3526
    %v3528 = vrcp.pop %v2972
    %v3529 = vmul.f32 1.0, %v3528
    %v3530 = vrcp.pop %v2973
    %v3531 = vmul.f32 1.0, %v3530
    %v3532 = vrcp.pop %v2974
    %v3533 = vmul.f32 1.0, %v3532
    %v3534 = vrcp.pop %v2975
    %v3535 = vmul.f32 1.0, %v3534
    %v3536 = vrcp.pop %v2976
    %v3537 = vmul.f32 1.0, %v3536
    %v3538 = vrcp.pop %v2977
    %v3539 = vmul.f32 1.0, %v3538
    %v3540 = vrcp.pop %v2978
    %v3541 = vmul.f32 1.0, %v3540
    %v3542 = vrcp.pop %v2979
    %v3543 = vmul.f32 1.0, %v3542
    %v3544 = vrcp.pop %v2980
    %v3545 = vmul.f32 1.0, %v3544
    %v3546 = vrcp.pop %v2981
    %v3547 = vmul.f32 1.0, %v3546
    %v3548 = vrcp.pop %v2982
    %v3549 = vmul.f32 1.0, %v3548
    %v3550 = vrcp.pop %v2983
    %v3551 = vmul.f32 1.0, %v3550
    %v3552 = vrcp.pop %v2984
    %v3553 = vmul.f32 1.0, %v3552
    %v3554 = vrcp.pop %v2985
    %v3555 = vmul.f32 1.0, %v3554
    %v3556 = vrcp.pop %v2986
    %v3557 = vmul.f32 1.0, %v3556
    %v3558 = vrcp.pop %v2987
    %v3559 = vmul.f32 1.0, %v3558
    %vm3560 = vcmask 523264
    %3561 = vst.msk [vmem:[%s3] sm:$0xff] %vm3560, %v2989
    %3562 = vst.msk [vmem:[%s3 + $0x8] sm:$0xff] %vm3560, %v2991
    %3563 = vst.msk [vmem:[%s3 + $0x10] sm:$0xff] %vm3560, %v2993
    %3564 = vst.msk [vmem:[%s3 + $0x18] sm:$0xff] %vm3560, %v2995
    %3565 = vst.msk [vmem:[%s3 + $0x20] sm:$0xff] %vm3560, %v2997
    %3566 = vst.msk [vmem:[%s3 + $0x28] sm:$0xff] %vm3560, %v2999
    %3567 = vst.msk [vmem:[%s3 + $0x30] sm:$0xff] %vm3560, %v3001
    %3568 = vst.msk [vmem:[%s3 + $0x38] sm:$0xff] %vm3560, %v3003
    %3569 = vst.msk [vmem:[%s3 + $0x40] sm:$0xff] %vm3560, %v3005
    %3570 = vst.msk [vmem:[%s3 + $0x48] sm:$0xff] %vm3560, %v3007
    %3571 = vst.msk [vmem:[%s3 + $0x50] sm:$0xff] %vm3560, %v3009
    %3572 = vst.msk [vmem:[%s3 + $0x58] sm:$0xff] %vm3560, %v3011
    %3573 = vst.msk [vmem:[%s3 + $0x60] sm:$0xff] %vm3560, %v3013
    %3574 = vst.msk [vmem:[%s3 + $0x68] sm:$0xff] %vm3560, %v3015
    %3575 = vst.msk [vmem:[%s3 + $0x70] sm:$0xff] %vm3560, %v3017
    %3576 = vst.msk [vmem:[%s3 + $0x78] sm:$0xff] %vm3560, %v3019
    %3577 = vst.msk [vmem:[%s3 + $0x80] sm:$0xff] %vm3560, %v3021
    %3578 = vst.msk [vmem:[%s3 + $0x88] sm:$0xff] %vm3560, %v3023
    %3579 = vst.msk [vmem:[%s3 + $0x90] sm:$0xff] %vm3560, %v3025
    %3580 = vst.msk [vmem:[%s3 + $0x98] sm:$0xff] %vm3560, %v3027
    %3581 = vst.msk [vmem:[%s3 + $0xa0] sm:$0xff] %vm3560, %v3029
    %3582 = vst.msk [vmem:[%s3 + $0xa8] sm:$0xff] %vm3560, %v3031
    %3583 = vst.msk [vmem:[%s3 + $0xb0] sm:$0xff] %vm3560, %v3033
    %3584 = vst.msk [vmem:[%s3 + $0xb8] sm:$0xff] %vm3560, %v3035
    %3585 = vst.msk [vmem:[%s3 + $0xc0] sm:$0xff] %vm3560, %v3037
    %3586 = vst.msk [vmem:[%s3 + $0xc8] sm:$0xff] %vm3560, %v3039
    %3587 = vst.msk [vmem:[%s3 + $0xd0] sm:$0xff] %vm3560, %v3041
    %3588 = vst.msk [vmem:[%s3 + $0xd8] sm:$0xff] %vm3560, %v3043
    %3589 = vst.msk [vmem:[%s3 + $0xe0] sm:$0xff] %vm3560, %v3045
    %3590 = vst.msk [vmem:[%s3 + $0xe8] sm:$0xff] %vm3560, %v3047
    %3591 = vst.msk [vmem:[%s3 + $0xf0] sm:$0xff] %vm3560, %v3049
    %3592 = vst.msk [vmem:[%s3 + $0xf8] sm:$0xff] %vm3560, %v3051
    %3593 = vst.msk [vmem:[%s3 + $0x100] sm:$0xff] %vm3560, %v3053
    %3594 = vst.msk [vmem:[%s3 + $0x108] sm:$0xff] %vm3560, %v3055
    %3595 = vst.msk [vmem:[%s3 + $0x110] sm:$0xff] %vm3560, %v3057
    %3596 = vst.msk [vmem:[%s3 + $0x118] sm:$0xff] %vm3560, %v3059
    %3597 = vst.msk [vmem:[%s3 + $0x120] sm:$0xff] %vm3560, %v3061
    %3598 = vst.msk [vmem:[%s3 + $0x128] sm:$0xff] %vm3560, %v3063
    %3599 = vst.msk [vmem:[%s3 + $0x130] sm:$0xff] %vm3560, %v3065
    %3600 = vst.msk [vmem:[%s3 + $0x138] sm:$0xff] %vm3560, %v3067
    %3601 = vst.msk [vmem:[%s3 + $0x140] sm:$0xff] %vm3560, %v3069
    %3602 = vst.msk [vmem:[%s3 + $0x148] sm:$0xff] %vm3560, %v3071
    %3603 = vst.msk [vmem:[%s3 + $0x150] sm:$0xff] %vm3560, %v3073
    %3604 = vst.msk [vmem:[%s3 + $0x158] sm:$0xff] %vm3560, %v3075
    %3605 = vst.msk [vmem:[%s3 + $0x160] sm:$0xff] %vm3560, %v3077
    %3606 = vst.msk [vmem:[%s3 + $0x168] sm:$0xff] %vm3560, %v3079
    %3607 = vst.msk [vmem:[%s3 + $0x170] sm:$0xff] %vm3560, %v3081
    %3608 = vst.msk [vmem:[%s3 + $0x178] sm:$0xff] %vm3560, %v3083
    %3609 = vst.msk [vmem:[%s3 + $0x180] sm:$0xff] %vm3560, %v3085
    %3610 = vst.msk [vmem:[%s3 + $0x188] sm:$0xff] %vm3560, %v3087
    %3611 = vst.msk [vmem:[%s3 + $0x190] sm:$0xff] %vm3560, %v3089
    %3612 = vst.msk [vmem:[%s3 + $0x198] sm:$0xff] %vm3560, %v3091
    %3613 = vst.msk [vmem:[%s3 + $0x1a0] sm:$0xff] %vm3560, %v3093
    %3614 = vst.msk [vmem:[%s3 + $0x1a8] sm:$0xff] %vm3560, %v3095
    %3615 = vst.msk [vmem:[%s3 + $0x1b0] sm:$0xff] %vm3560, %v3097
    %3616 = vst.msk [vmem:[%s3 + $0x1b8] sm:$0xff] %vm3560, %v3099
    %3617 = vst.msk [vmem:[%s3 + $0x1c0] sm:$0xff] %vm3560, %v3101
    %3618 = vst.msk [vmem:[%s3 + $0x1c8] sm:$0xff] %vm3560, %v3103
    %3619 = vst.msk [vmem:[%s3 + $0x1d0] sm:$0xff] %vm3560, %v3105
    %3620 = vst.msk [vmem:[%s3 + $0x1d8] sm:$0xff] %vm3560, %v3107
    %3621 = vst.msk [vmem:[%s3 + $0x1e0] sm:$0xff] %vm3560, %v3109
    %3622 = vst.msk [vmem:[%s3 + $0x1e8] sm:$0xff] %vm3560, %v3111
    %3623 = vst.msk [vmem:[%s3 + $0x1f0] sm:$0xff] %vm3560, %v3113
    %3624 = vst.msk [vmem:[%s3 + $0x1f8] sm:$0xff] %vm3560, %v3115
    %3625 = vst.msk [vmem:[%s3 + $0x200] sm:$0xff] %vm3560, %v3117
    %3626 = vst.msk [vmem:[%s3 + $0x208] sm:$0xff] %vm3560, %v3119
    %3627 = vst.msk [vmem:[%s3 + $0x210] sm:$0xff] %vm3560, %v3121
    %3628 = vst.msk [vmem:[%s3 + $0x218] sm:$0xff] %vm3560, %v3123
    %3629 = vst.msk [vmem:[%s3 + $0x220] sm:$0xff] %vm3560, %v3125
    %3630 = vst.msk [vmem:[%s3 + $0x228] sm:$0xff] %vm3560, %v3127
    %3631 = vst.msk [vmem:[%s3 + $0x230] sm:$0xff] %vm3560, %v3129
    %3632 = vst.msk [vmem:[%s3 + $0x238] sm:$0xff] %vm3560, %v3131
    %3633 = vst.msk [vmem:[%s3 + $0x240] sm:$0xff] %vm3560, %v3133
    %3634 = vst.msk [vmem:[%s3 + $0x248] sm:$0xff] %vm3560, %v3135
    %3635 = vst.msk [vmem:[%s3 + $0x250] sm:$0xff] %vm3560, %v3137
    %3636 = vst.msk [vmem:[%s3 + $0x258] sm:$0xff] %vm3560, %v3139
    %3637 = vst.msk [vmem:[%s3 + $0x260] sm:$0xff] %vm3560, %v3141
    %3638 = vst.msk [vmem:[%s3 + $0x268] sm:$0xff] %vm3560, %v3143
    %3639 = vst.msk [vmem:[%s3 + $0x270] sm:$0xff] %vm3560, %v3145
    %3640 = vst.msk [vmem:[%s3 + $0x278] sm:$0xff] %vm3560, %v3147
    %3641 = vst.msk [vmem:[%s3 + $0x280] sm:$0xff] %vm3560, %v3149
    %3642 = vst.msk [vmem:[%s3 + $0x288] sm:$0xff] %vm3560, %v3151
    %3643 = vst.msk [vmem:[%s3 + $0x290] sm:$0xff] %vm3560, %v3153
    %3644 = vst.msk [vmem:[%s3 + $0x298] sm:$0xff] %vm3560, %v3155
    %3645 = vst.msk [vmem:[%s3 + $0x2a0] sm:$0xff] %vm3560, %v3157
    %3646 = vst.msk [vmem:[%s3 + $0x2a8] sm:$0xff] %vm3560, %v3159
    %3647 = vst.msk [vmem:[%s3 + $0x2b0] sm:$0xff] %vm3560, %v3161
    %3648 = vst.msk [vmem:[%s3 + $0x2b8] sm:$0xff] %vm3560, %v3163
    %3649 = vst.msk [vmem:[%s3 + $0x2c0] sm:$0xff] %vm3560, %v3165
    %3650 = vst.msk [vmem:[%s3 + $0x2c8] sm:$0xff] %vm3560, %v3167
    %3651 = vst.msk [vmem:[%s3 + $0x2d0] sm:$0xff] %vm3560, %v3169
    %3652 = vst.msk [vmem:[%s3 + $0x2d8] sm:$0xff] %vm3560, %v3171
    %3653 = vst.msk [vmem:[%s3 + $0x2e0] sm:$0xff] %vm3560, %v3173
    %3654 = vst.msk [vmem:[%s3 + $0x2e8] sm:$0xff] %vm3560, %v3175
    %3655 = vst.msk [vmem:[%s3 + $0x2f0] sm:$0xff] %vm3560, %v3177
    %3656 = vst.msk [vmem:[%s3 + $0x2f8] sm:$0xff] %vm3560, %v3179
    %3657 = vst.msk [vmem:[%s3 + $0x300] sm:$0xff] %vm3560, %v3181
    %3658 = vst.msk [vmem:[%s3 + $0x308] sm:$0xff] %vm3560, %v3183
    %3659 = vst.msk [vmem:[%s3 + $0x310] sm:$0xff] %vm3560, %v3185
    %3660 = vst.msk [vmem:[%s3 + $0x318] sm:$0xff] %vm3560, %v3187
    %3661 = vst.msk [vmem:[%s3 + $0x320] sm:$0xff] %vm3560, %v3189
    %3662 = vst.msk [vmem:[%s3 + $0x328] sm:$0xff] %vm3560, %v3191
    %3663 = vst.msk [vmem:[%s3 + $0x330] sm:$0xff] %vm3560, %v3193
    %3664 = vst.msk [vmem:[%s3 + $0x338] sm:$0xff] %vm3560, %v3195
    %3665 = vst.msk [vmem:[%s3 + $0x340] sm:$0xff] %vm3560, %v3197
    %3666 = vst.msk [vmem:[%s3 + $0x348] sm:$0xff] %vm3560, %v3199
    %3667 = vst.msk [vmem:[%s3 + $0x350] sm:$0xff] %vm3560, %v3201
    %3668 = vst.msk [vmem:[%s3 + $0x358] sm:$0xff] %vm3560, %v3203
    %3669 = vst.msk [vmem:[%s3 + $0x360] sm:$0xff] %vm3560, %v3205
    %3670 = vst.msk [vmem:[%s3 + $0x368] sm:$0xff] %vm3560, %v3207
    %3671 = vst.msk [vmem:[%s3 + $0x370] sm:$0xff] %vm3560, %v3209
    %3672 = vst.msk [vmem:[%s3 + $0x378] sm:$0xff] %vm3560, %v3211
    %3673 = vst.msk [vmem:[%s3 + $0x380] sm:$0xff] %vm3560, %v3213
    %3674 = vst.msk [vmem:[%s3 + $0x388] sm:$0xff] %vm3560, %v3215
    %3675 = vst.msk [vmem:[%s3 + $0x390] sm:$0xff] %vm3560, %v3217
    %3676 = vst.msk [vmem:[%s3 + $0x398] sm:$0xff] %vm3560, %v3219
    %3677 = vst.msk [vmem:[%s3 + $0x3a0] sm:$0xff] %vm3560, %v3221
    %3678 = vst.msk [vmem:[%s3 + $0x3a8] sm:$0xff] %vm3560, %v3223
    %3679 = vst.msk [vmem:[%s3 + $0x3b0] sm:$0xff] %vm3560, %v3225
    %3680 = vst.msk [vmem:[%s3 + $0x3b8] sm:$0xff] %vm3560, %v3227
    %3681 = vst.msk [vmem:[%s3 + $0x3c0] sm:$0xff] %vm3560, %v3229
    %3682 = vst.msk [vmem:[%s3 + $0x3c8] sm:$0xff] %vm3560, %v3231
    %3683 = vst.msk [vmem:[%s3 + $0x3d0] sm:$0xff] %vm3560, %v3233
    %3684 = vst.msk [vmem:[%s3 + $0x3d8] sm:$0xff] %vm3560, %v3235
    %3685 = vst.msk [vmem:[%s3 + $0x3e0] sm:$0xff] %vm3560, %v3237
    %3686 = vst.msk [vmem:[%s3 + $0x3e8] sm:$0xff] %vm3560, %v3239
    %3687 = vst.msk [vmem:[%s3 + $0x3f0] sm:$0xff] %vm3560, %v3241
    %3688 = vst.msk [vmem:[%s3 + $0x3f8] sm:$0xff] %vm3560, %v3243
    %3689 = vst.msk [vmem:[%s3 + $0x400] sm:$0xff] %vm3560, %v3245
    %3690 = vst.msk [vmem:[%s3 + $0x408] sm:$0xff] %vm3560, %v3247
    %3691 = vst.msk [vmem:[%s3 + $0x410] sm:$0xff] %vm3560, %v3249
    %3692 = vst.msk [vmem:[%s3 + $0x418] sm:$0xff] %vm3560, %v3251
    %3693 = vst.msk [vmem:[%s3 + $0x420] sm:$0xff] %vm3560, %v3253
    %3694 = vst.msk [vmem:[%s3 + $0x428] sm:$0xff] %vm3560, %v3255
    %3695 = vst.msk [vmem:[%s3 + $0x430] sm:$0xff] %vm3560, %v3257
    %3696 = vst.msk [vmem:[%s3 + $0x438] sm:$0xff] %vm3560, %v3259
    %3697 = vst.msk [vmem:[%s3 + $0x440] sm:$0xff] %vm3560, %v3261
    %3698 = vst.msk [vmem:[%s3 + $0x448] sm:$0xff] %vm3560, %v3263
    %3699 = vst.msk [vmem:[%s3 + $0x450] sm:$0xff] %vm3560, %v3265
    %3700 = vst.msk [vmem:[%s3 + $0x458] sm:$0xff] %vm3560, %v3267
    %3701 = vst.msk [vmem:[%s3 + $0x460] sm:$0xff] %vm3560, %v3269
    %3702 = vst.msk [vmem:[%s3 + $0x468] sm:$0xff] %vm3560, %v3271
    %3703 = vst.msk [vmem:[%s3 + $0x470] sm:$0xff] %vm3560, %v3273
    %3704 = vst.msk [vmem:[%s3 + $0x478] sm:$0xff] %vm3560, %v3275
    %3705 = vst.msk [vmem:[%s3 + $0x480] sm:$0xff] %vm3560, %v3277
    %3706 = vst.msk [vmem:[%s3 + $0x488] sm:$0xff] %vm3560, %v3279
    %3707 = vst.msk [vmem:[%s3 + $0x490] sm:$0xff] %vm3560, %v3281
    %3708 = vst.msk [vmem:[%s3 + $0x498] sm:$0xff] %vm3560, %v3283
    %3709 = vst.msk [vmem:[%s3 + $0x4a0] sm:$0xff] %vm3560, %v3285
    %3710 = vst.msk [vmem:[%s3 + $0x4a8] sm:$0xff] %vm3560, %v3287
    %3711 = vst.msk [vmem:[%s3 + $0x4b0] sm:$0xff] %vm3560, %v3289
    %3712 = vst.msk [vmem:[%s3 + $0x4b8] sm:$0xff] %vm3560, %v3291
    %3713 = vst.msk [vmem:[%s3 + $0x4c0] sm:$0xff] %vm3560, %v3293
    %3714 = vst.msk [vmem:[%s3 + $0x4c8] sm:$0xff] %vm3560, %v3295
    %3715 = vst.msk [vmem:[%s3 + $0x4d0] sm:$0xff] %vm3560, %v3297
    %3716 = vst.msk [vmem:[%s3 + $0x4d8] sm:$0xff] %vm3560, %v3299
    %3717 = vst.msk [vmem:[%s3 + $0x4e0] sm:$0xff] %vm3560, %v3301
    %3718 = vst.msk [vmem:[%s3 + $0x4e8] sm:$0xff] %vm3560, %v3303
    %3719 = vst.msk [vmem:[%s3 + $0x4f0] sm:$0xff] %vm3560, %v3305
    %3720 = vst.msk [vmem:[%s3 + $0x4f8] sm:$0xff] %vm3560, %v3307
    %3721 = vst.msk [vmem:[%s3 + $0x500] sm:$0xff] %vm3560, %v3309
    %3722 = vst.msk [vmem:[%s3 + $0x508] sm:$0xff] %vm3560, %v3311
    %3723 = vst.msk [vmem:[%s3 + $0x510] sm:$0xff] %vm3560, %v3313
    %3724 = vst.msk [vmem:[%s3 + $0x518] sm:$0xff] %vm3560, %v3315
    %3725 = vst.msk [vmem:[%s3 + $0x520] sm:$0xff] %vm3560, %v3317
    %3726 = vst.msk [vmem:[%s3 + $0x528] sm:$0xff] %vm3560, %v3319
    %3727 = vst.msk [vmem:[%s3 + $0x530] sm:$0xff] %vm3560, %v3321
    %3728 = vst.msk [vmem:[%s3 + $0x538] sm:$0xff] %vm3560, %v3323
    %3729 = vst.msk [vmem:[%s3 + $0x540] sm:$0xff] %vm3560, %v3325
    %3730 = vst.msk [vmem:[%s3 + $0x548] sm:$0xff] %vm3560, %v3327
    %3731 = vst.msk [vmem:[%s3 + $0x550] sm:$0xff] %vm3560, %v3329
    %3732 = vst.msk [vmem:[%s3 + $0x558] sm:$0xff] %vm3560, %v3331
    %3733 = vst.msk [vmem:[%s3 + $0x560] sm:$0xff] %vm3560, %v3333
    %3734 = vst.msk [vmem:[%s3 + $0x568] sm:$0xff] %vm3560, %v3335
    %3735 = vst.msk [vmem:[%s3 + $0x570] sm:$0xff] %vm3560, %v3337
    %3736 = vst.msk [vmem:[%s3 + $0x578] sm:$0xff] %vm3560, %v3339
    %3737 = vst.msk [vmem:[%s3 + $0x580] sm:$0xff] %vm3560, %v3341
    %3738 = vst.msk [vmem:[%s3 + $0x588] sm:$0xff] %vm3560, %v3343
    %3739 = vst.msk [vmem:[%s3 + $0x590] sm:$0xff] %vm3560, %v3345
    %3740 = vst.msk [vmem:[%s3 + $0x598] sm:$0xff] %vm3560, %v3347
    %3741 = vst.msk [vmem:[%s3 + $0x5a0] sm:$0xff] %vm3560, %v3349
    %3742 = vst.msk [vmem:[%s3 + $0x5a8] sm:$0xff] %vm3560, %v3351
    %3743 = vst.msk [vmem:[%s3 + $0x5b0] sm:$0xff] %vm3560, %v3353
    %3744 = vst.msk [vmem:[%s3 + $0x5b8] sm:$0xff] %vm3560, %v3355
    %3745 = vst.msk [vmem:[%s3 + $0x5c0] sm:$0xff] %vm3560, %v3357
    %3746 = vst.msk [vmem:[%s3 + $0x5c8] sm:$0xff] %vm3560, %v3359
    %3747 = vst.msk [vmem:[%s3 + $0x5d0] sm:$0xff] %vm3560, %v3361
    %3748 = vst.msk [vmem:[%s3 + $0x5d8] sm:$0xff] %vm3560, %v3363
    %3749 = vst.msk [vmem:[%s3 + $0x5e0] sm:$0xff] %vm3560, %v3365
    %3750 = vst.msk [vmem:[%s3 + $0x5e8] sm:$0xff] %vm3560, %v3367
    %3751 = vst.msk [vmem:[%s3 + $0x5f0] sm:$0xff] %vm3560, %v3369
    %3752 = vst.msk [vmem:[%s3 + $0x5f8] sm:$0xff] %vm3560, %v3371
    %3753 = vst.msk [vmem:[%s3 + $0x600] sm:$0xff] %vm3560, %v3373
    %3754 = vst.msk [vmem:[%s3 + $0x608] sm:$0xff] %vm3560, %v3375
    %3755 = vst.msk [vmem:[%s3 + $0x610] sm:$0xff] %vm3560, %v3377
    %3756 = vst.msk [vmem:[%s3 + $0x618] sm:$0xff] %vm3560, %v3379
    %3757 = vst.msk [vmem:[%s3 + $0x620] sm:$0xff] %vm3560, %v3381
    %3758 = vst.msk [vmem:[%s3 + $0x628] sm:$0xff] %vm3560, %v3383
    %3759 = vst.msk [vmem:[%s3 + $0x630] sm:$0xff] %vm3560, %v3385
    %3760 = vst.msk [vmem:[%s3 + $0x638] sm:$0xff] %vm3560, %v3387
    %3761 = vst.msk [vmem:[%s3 + $0x640] sm:$0xff] %vm3560, %v3389
    %3762 = vst.msk [vmem:[%s3 + $0x648] sm:$0xff] %vm3560, %v3391
    %3763 = vst.msk [vmem:[%s3 + $0x650] sm:$0xff] %vm3560, %v3393
    %3764 = vst.msk [vmem:[%s3 + $0x658] sm:$0xff] %vm3560, %v3395
    %3765 = vst.msk [vmem:[%s3 + $0x660] sm:$0xff] %vm3560, %v3397
    %3766 = vst.msk [vmem:[%s3 + $0x668] sm:$0xff] %vm3560, %v3399
    %3767 = vst.msk [vmem:[%s3 + $0x670] sm:$0xff] %vm3560, %v3401
    %3768 = vst.msk [vmem:[%s3 + $0x678] sm:$0xff] %vm3560, %v3403
    %3769 = vst.msk [vmem:[%s3 + $0x680] sm:$0xff] %vm3560, %v3405
    %3770 = vst.msk [vmem:[%s3 + $0x688] sm:$0xff] %vm3560, %v3407
    %3771 = vst.msk [vmem:[%s3 + $0x690] sm:$0xff] %vm3560, %v3409
    %3772 = vst.msk [vmem:[%s3 + $0x698] sm:$0xff] %vm3560, %v3411
    %3773 = vst.msk [vmem:[%s3 + $0x6a0] sm:$0xff] %vm3560, %v3413
    %3774 = vst.msk [vmem:[%s3 + $0x6a8] sm:$0xff] %vm3560, %v3415
    %3775 = vst.msk [vmem:[%s3 + $0x6b0] sm:$0xff] %vm3560, %v3417
    %3776 = vst.msk [vmem:[%s3 + $0x6b8] sm:$0xff] %vm3560, %v3419
    %3777 = vst.msk [vmem:[%s3 + $0x6c0] sm:$0xff] %vm3560, %v3421
    %3778 = vst.msk [vmem:[%s3 + $0x6c8] sm:$0xff] %vm3560, %v3423
    %3779 = vst.msk [vmem:[%s3 + $0x6d0] sm:$0xff] %vm3560, %v3425
    %3780 = vst.msk [vmem:[%s3 + $0x6d8] sm:$0xff] %vm3560, %v3427
    %3781 = vst.msk [vmem:[%s3 + $0x6e0] sm:$0xff] %vm3560, %v3429
    %3782 = vst.msk [vmem:[%s3 + $0x6e8] sm:$0xff] %vm3560, %v3431
    %3783 = vst.msk [vmem:[%s3 + $0x6f0] sm:$0xff] %vm3560, %v3433
    %3784 = vst.msk [vmem:[%s3 + $0x6f8] sm:$0xff] %vm3560, %v3435
    %3785 = vst.msk [vmem:[%s3 + $0x700] sm:$0xff] %vm3560, %v3437
    %3786 = vst.msk [vmem:[%s3 + $0x708] sm:$0xff] %vm3560, %v3439
    %3787 = vst.msk [vmem:[%s3 + $0x710] sm:$0xff] %vm3560, %v3441
    %3788 = vst.msk [vmem:[%s3 + $0x718] sm:$0xff] %vm3560, %v3443
    %3789 = vst.msk [vmem:[%s3 + $0x720] sm:$0xff] %vm3560, %v3445
    %3790 = vst.msk [vmem:[%s3 + $0x728] sm:$0xff] %vm3560, %v3447
    %3791 = vst.msk [vmem:[%s3 + $0x730] sm:$0xff] %vm3560, %v3449
    %3792 = vst.msk [vmem:[%s3 + $0x738] sm:$0xff] %vm3560, %v3451
    %3793 = vst.msk [vmem:[%s3 + $0x740] sm:$0xff] %vm3560, %v3453
    %3794 = vst.msk [vmem:[%s3 + $0x748] sm:$0xff] %vm3560, %v3455
    %3795 = vst.msk [vmem:[%s3 + $0x750] sm:$0xff] %vm3560, %v3457
    %3796 = vst.msk [vmem:[%s3 + $0x758] sm:$0xff] %vm3560, %v3459
    %3797 = vst.msk [vmem:[%s3 + $0x760] sm:$0xff] %vm3560, %v3461
    %3798 = vst.msk [vmem:[%s3 + $0x768] sm:$0xff] %vm3560, %v3463
    %3799 = vst.msk [vmem:[%s3 + $0x770] sm:$0xff] %vm3560, %v3465
    %3800 = vst.msk [vmem:[%s3 + $0x778] sm:$0xff] %vm3560, %v3467
    %3801 = vst.msk [vmem:[%s3 + $0x780] sm:$0xff] %vm3560, %v3469
    %3802 = vst.msk [vmem:[%s3 + $0x788] sm:$0xff] %vm3560, %v3471
    %3803 = vst.msk [vmem:[%s3 + $0x790] sm:$0xff] %vm3560, %v3473
    %3804 = vst.msk [vmem:[%s3 + $0x798] sm:$0xff] %vm3560, %v3475
    %3805 = vst.msk [vmem:[%s3 + $0x7a0] sm:$0xff] %vm3560, %v3477
    %3806 = vst.msk [vmem:[%s3 + $0x7a8] sm:$0xff] %vm3560, %v3479
    %3807 = vst.msk [vmem:[%s3 + $0x7b0] sm:$0xff] %vm3560, %v3481
    %3808 = vst.msk [vmem:[%s3 + $0x7b8] sm:$0xff] %vm3560, %v3483
    %3809 = vst.msk [vmem:[%s3 + $0x7c0] sm:$0xff] %vm3560, %v3485
    %3810 = vst.msk [vmem:[%s3 + $0x7c8] sm:$0xff] %vm3560, %v3487
    %3811 = vst.msk [vmem:[%s3 + $0x7d0] sm:$0xff] %vm3560, %v3489
    %3812 = vst.msk [vmem:[%s3 + $0x7d8] sm:$0xff] %vm3560, %v3491
    %3813 = vst.msk [vmem:[%s3 + $0x7e0] sm:$0xff] %vm3560, %v3493
    %3814 = vst.msk [vmem:[%s3 + $0x7e8] sm:$0xff] %vm3560, %v3495
    %3815 = vst.msk [vmem:[%s3 + $0x7f0] sm:$0xff] %vm3560, %v3497
    %3816 = vst.msk [vmem:[%s3 + $0x7f8] sm:$0xff] %vm3560, %v3499
    %3817 = vst.msk [vmem:[%s3 + $0x800] sm:$0xff] %vm3560, %v3501
    %3818 = vst.msk [vmem:[%s3 + $0x808] sm:$0xff] %vm3560, %v3503
    %3819 = vst.msk [vmem:[%s3 + $0x810] sm:$0xff] %vm3560, %v3505
    %3820 = vst.msk [vmem:[%s3 + $0x818] sm:$0xff] %vm3560, %v3507
    %3821 = vst.msk [vmem:[%s3 + $0x820] sm:$0xff] %vm3560, %v3509
    %3822 = vst.msk [vmem:[%s3 + $0x828] sm:$0xff] %vm3560, %v3511
    %3823 = vst.msk [vmem:[%s3 + $0x830] sm:$0xff] %vm3560, %v3513
    %3824 = vst.msk [vmem:[%s3 + $0x838] sm:$0xff] %vm3560, %v3515
    %3825 = vst.msk [vmem:[%s3 + $0x840] sm:$0xff] %vm3560, %v3517
    %3826 = vst.msk [vmem:[%s3 + $0x848] sm:$0xff] %vm3560, %v3519
    %3827 = vst.msk [vmem:[%s3 + $0x850] sm:$0xff] %vm3560, %v3521
    %3828 = vst.msk [vmem:[%s3 + $0x858] sm:$0xff] %vm3560, %v3523
    %3829 = vst.msk [vmem:[%s3 + $0x860] sm:$0xff] %vm3560, %v3525
    %3830 = vst.msk [vmem:[%s3 + $0x868] sm:$0xff] %vm3560, %v3527
    %3831 = vst.msk [vmem:[%s3 + $0x870] sm:$0xff] %vm3560, %v3529
    %3832 = vst.msk [vmem:[%s3 + $0x878] sm:$0xff] %vm3560, %v3531
    %3833 = vst.msk [vmem:[%s3 + $0x880] sm:$0xff] %vm3560, %v3533
    %3834 = vst.msk [vmem:[%s3 + $0x888] sm:$0xff] %vm3560, %v3535
    %3835 = vst.msk [vmem:[%s3 + $0x890] sm:$0xff] %vm3560, %v3537
    %3836 = vst.msk [vmem:[%s3 + $0x898] sm:$0xff] %vm3560, %v3539
    %3837 = vst.msk [vmem:[%s3 + $0x8a0] sm:$0xff] %vm3560, %v3541
    %3838 = vst.msk [vmem:[%s3 + $0x8a8] sm:$0xff] %vm3560, %v3543
    %3839 = vst.msk [vmem:[%s3 + $0x8b0] sm:$0xff] %vm3560, %v3545
    %3840 = vst.msk [vmem:[%s3 + $0x8b8] sm:$0xff] %vm3560, %v3547
    %3841 = vst.msk [vmem:[%s3 + $0x8c0] sm:$0xff] %vm3560, %v3549
    %3842 = vst.msk [vmem:[%s3 + $0x8c8] sm:$0xff] %vm3560, %v3551
    %3843 = vst.msk [vmem:[%s3 + $0x8d0] sm:$0xff] %vm3560, %v3553
    %3844 = vst.msk [vmem:[%s3 + $0x8d8] sm:$0xff] %vm3560, %v3555
    %3845 = vst.msk [vmem:[%s3 + $0x8e0] sm:$0xff] %vm3560, %v3557
    %3846 = vst.msk [vmem:[%s3 + $0x8e8] sm:$0xff] %vm3560, %v3559
    // Predicated region
    $region22: #{tpu_custom_call.1} parent=1 // pred_check
      _
    $region23: #{tpu_custom_call.1} parent=1 // pred_check_branch
      %3848 = sbr.rel (0) target = $region25
    $region24: #{tpu_custom_call.1} parent=1 // pred_region
      _
    $region25: #{tpu_custom_call.1} parent=1 // pred_fallthru
      _
    // Predicated region
    $region26: #{tpu_custom_call.1} parent=1 // pred_check
      _
    $region27: #{tpu_custom_call.1} parent=1 // pred_check_branch
      %3850 = sbr.rel (0) target = $region29
    $region28: #{tpu_custom_call.1} parent=1 // pred_region
      _
    $region29: #{tpu_custom_call.1} parent=1 // pred_fallthru
      _
    %3851 = vsyncpa [#allocation3], 1
    %3852 = vsyncpa [#allocation5], 1

</llo_original>
